<compile_context>
chip_gen: v7x
topology: tpu7x:2x2x1
jax: 0.10.0
libtpu: 0.0.40
codegen_flags: <defaults>
</compile_context>

<pallas_src>
import math
import functools

import numpy as np
import jax
import jax.numpy as jnp
from jax import lax
from jax.experimental import pallas as pl
from jax.experimental.pallas import tpu as pltpu

EPS = 1e-5  # torch.nn.LayerNorm default


def _layernorm(x, w, b):
    mu = jnp.mean(x, axis=-1, keepdims=True)
    var = jnp.mean((x - mu) ** 2, axis=-1, keepdims=True)
    return (x - mu) * lax.rsqrt(var + EPS) * w + b


# ---------------------------------------------------------------------------
# Fused whole-forward kernel (Bt batch elements == Bt*T rows per grid step)
# ---------------------------------------------------------------------------

def _fused_forward_kernel(x_ref, qmask_ref, kmask_ref, gsum_ref, pmask_ref,
                          sv_ref, hsel_ref, csum_ref, nmask_ref,
                          matD_ref, mat3_ref, mat4_ref, vec_ref, out_ref,
                          *, num_layers, n_head, d_model, bt, f_pad, cdtype):
    f32 = jnp.float32
    H = n_head
    D = d_model
    dh = D // H
    T = H                      # reference broadcasting requires seq_len == n_head
    R = bt * T                 # rows per grid step
    HH = H * H
    scale = 1.0 / math.sqrt(dh)

    qmask = qmask_ref[...]     # (R, dh*R)      delta(batch(row) == batch(col))
    kmask = kmask_ref[...]     # (dh*R, HH)     delta(col group n == row token n')
    gsum_m = gsum_ref[...]     # (HH, HH) f32   delta(same lane group)  (group sums)
    pmask = pmask_ref[...]     # (R, bt*HH)
    sv = sv_ref[...]           # (bt*HH, R)     row-duplication selector for v
    hsel = hsel_ref[...]       # (bt*HH, D)     delta(h(row) == col%H)
    csum = csum_ref[...]       # (D, D)         delta(same d block)
    nmask = nmask_ref[...]     # (bt*HH, D)     delta(n(row) == col%H)

    lane = lax.broadcasted_iota(jnp.int32, (1, HH), 1) % H   # offset within group

    # --- PerformanceEmbedding: folded host-side into ONE matmul + bias ---
    w_emb = matD_ref[0:f_pad, :]
    x = (jnp.dot(x_ref[...].astype(cdtype), w_emb, preferred_element_type=f32)
         + vec_ref[0:1, :D])

    for l in range(num_layers):
        mbase = f_pad + l * 5 * D
        wout = matD_ref[mbase:mbase + D, :]              # (D, D)   row-permuted
        w2 = matD_ref[mbase + D:mbase + 5 * D, :]        # (4D, D)
        wqkv = mat3_ref[l * D:(l + 1) * D, :]            # (D, 3D)  col-permuted
        w1 = mat4_ref[l * D:(l + 1) * D, :]              # (D, 4D)
        vrow = 8 + 8 * l
        ln1_w = vec_ref[vrow + 0:vrow + 1, :D]
        ln1_b = vec_ref[vrow + 1:vrow + 2, :D]
        bqkv = vec_ref[vrow + 2:vrow + 3, :3 * D]
        bout = vec_ref[vrow + 3:vrow + 4, :D]
        ln2_w = vec_ref[vrow + 4:vrow + 5, :D]
        ln2_b = vec_ref[vrow + 5:vrow + 6, :D]
        b1 = vec_ref[vrow + 6:vrow + 7, :]
        b2 = vec_ref[vrow + 7:vrow + 8, :D]

        # ----- attention (quirky reference broadcasting, n_head == seq_len) -----
        h = _layernorm(x, ln1_w, ln1_b)
        qkv = jnp.dot(h.astype(cdtype), wqkv, preferred_element_type=f32) + bqkv
        qkv_c = qkv.astype(cdtype)
        q_p = qkv_c[:, :D]          # [b*T+s, d*H+n] = q[b, s, n, d]
        k_p = qkv_c[:, D:2 * D]     # [b*T+t, d*H+h] = k[b, t, h, d]
        v_p = qkv_c[:, 2 * D:]      # [b*T+t, d*H+h] = v[b, t, h, d]

        # att[b*T+s, n*H+h] = scale * sum_d q[b,s,n,d] * k[b,n,h,d]
        # as ONE block-diagonal MXU matmul (R, dh*R) @ (dh*R, H*H).
        q_parts = []
        for d in range(dh):
            q_parts.extend([q_p[:, d * H:(d + 1) * H]] * bt)
        q_big = jnp.concatenate(q_parts, axis=1) * qmask           # (R, dh*R)
        k_parts = []
        for d in range(dh):
            kd = k_p[:, d * H:(d + 1) * H]
            k_parts.append(jnp.concatenate([kd] * H, axis=1))
        k_big = jnp.concatenate(k_parts, axis=0) * kmask           # (dh*R, HH)
        att = jnp.dot(q_big, k_big, preferred_element_type=f32) * scale

        # softmax over each block of H lanes; exact per-group max via lane rolls
        m = att
        p = att
        sh = 1
        while sh < H:
            m = jnp.maximum(m, jnp.where(lane + sh < H,
                                         pltpu.roll(m, HH - sh, axis=1), m))
            p = jnp.maximum(p, jnp.where(lane >= sh,
                                         pltpu.roll(p, sh, axis=1), p))
            sh *= 2
        gmax = jnp.maximum(m, p)
        e = jnp.exp(att - gmax)
        den = jnp.dot(e, gsum_m, preferred_element_type=f32)       # group sums
        probs = (e / den).astype(cdtype)                            # exact divide

        # out[b,n,s,d] -> z[b*T+s, d*H+n]; the (B,H,S,dh)->(B,S,D) transpose +
        # reshape is folded into the row-permuted out-projection weight.
        p_big = jnp.concatenate([probs] * bt, axis=1) * pmask       # (R, bt*HH)
        vrep = jnp.dot(sv, v_p, preferred_element_type=f32).astype(cdtype)
        spread = jnp.dot(vrep * hsel, csum,
                         preferred_element_type=f32).astype(cdtype)
        ve = spread * nmask                                         # (bt*HH, D)
        z = jnp.dot(p_big, ve, preferred_element_type=f32)          # (R, D)
        x = jnp.dot(z.astype(cdtype), wout, preferred_element_type=f32) + bout + x

        # ----- gated MLP (x * sigmoid(1.702 x)) + residual -----
        h2 = _layernorm(x, ln2_w, ln2_b)
        m1 = jnp.dot(h2.astype(cdtype), w1, preferred_element_type=f32) + b1
        m1 = m1 * jax.nn.sigmoid(1.702 * m1)
        x = jnp.dot(m1.astype(cdtype), w2, preferred_element_type=f32) + b2 + x

    out_ref[...] = x


# ---------------------------------------------------------------------------
# Host-side constant selector / mask matrices for the block-diagonal attention
# ---------------------------------------------------------------------------

def _attention_masks(bt, T, H, dh, cdtype):
    R = bt * T
    HH = H * H
    D = dh * H
    r = np.arange(R)
    b_r = r // T                       # batch element of each row
    n_r = r % T                        # token index of each row

    cq = np.arange(dh * R)
    qmask = (b_r[:, None] == ((cq % R) // H)[None, :])

    c = np.arange(HH)
    kmask = np.tile(((c // H)[None, :] == n_r[:, None]), (dh, 1))

    gsum = ((c[:, None] // H) == (c[None, :] // H))

    cc = np.arange(bt * HH)
    pmask = (b_r[:, None] == (cc // HH)[None, :])

    rr = np.arange(bt * HH)
    b_rr = rr // HH
    m_rr = (rr % HH) // H
    h_rr = rr % H
    sv = ((b_rr[:, None] == b_r[None, :]) & (m_rr[:, None] == n_r[None, :]))

    cd = np.arange(D)
    hsel = (h_rr[:, None] == (cd % H)[None, :])
    nmask = (m_rr[:, None] == (cd % H)[None, :])
    csum = ((cd // H)[:, None] == (cd // H)[None, :])

    def to(a, dt):
        return jnp.asarray(a.astype(np.float32), dtype=dt)

    return (to(qmask, cdtype), to(kmask, cdtype), to(gsum, jnp.float32),
            to(pmask, cdtype), to(sv, cdtype), to(hsel, cdtype),
            to(csum, cdtype), to(nmask, cdtype))


# ---------------------------------------------------------------------------
# pallas_call wrapper
# ---------------------------------------------------------------------------

def next_form_predictor(prepared, player_input, team1, team2, match_info,
                        target=None, compute_dtype=jnp.bfloat16):
    """Fused forward; returns (perf_emb_after_layers, None) like the reference."""
    B, T, _ = player_input.shape
    D = prepared["d_model"]
    H = prepared["n_head"]
    L = prepared["num_layers"]
    assert H == T, "reference SelfAttention broadcasting requires n_head == seq_len"
    assert D % H == 0
    dh = D // H
    f_in = prepared["f_in"]
    f_pad = prepared["f_pad"]

    # one lane-dense activation tensor per call (single input DMA per grid step)
    x_cat = jnp.concatenate([player_input, team1, team2, match_info],
                            axis=-1).astype(jnp.float32)
    assert x_cat.shape[-1] == f_in
    x_cat = jnp.pad(x_cat, ((0, 0), (0, 0), (0, f_pad - f_in)))

    # batch tile: fill the MXU sublane dim (target Bt*T ~= 128 rows per step)
    bt = max(1, min(B, max(1, 128 // T)))
    grid = -(-B // bt)
    b_pad = grid * bt
    if b_pad != B:
        x_cat = jnp.pad(x_cat, ((0, b_pad - B), (0, 0), (0, 0)))
    R = bt * T
    assert R % 8 == 0, "batch-tile rows must be a multiple of 8"
    x_flat = x_cat.reshape(b_pad * T, f_pad)

    masks = _attention_masks(bt, T, H, dh, compute_dtype)
    consts = masks + (prepared["matD"], prepared["mat3"],
                      prepared["mat4"], prepared["vecs"])

    in_specs = [pl.BlockSpec((R, f_pad), lambda g: (g, 0))]
    in_specs += [pl.BlockSpec(c.shape, lambda g: (0, 0)) for c in consts]

    kernel = functools.partial(
        _fused_forward_kernel, num_layers=L, n_head=H, d_model=D,
        bt=bt, f_pad=f_pad, cdtype=compute_dtype)

    out = pl.pallas_call(
        kernel,
        out_shape=jax.ShapeDtypeStruct((b_pad * T, D), jnp.float32),
        grid=(grid,),
        in_specs=in_specs,
        out_specs=pl.BlockSpec((R, D), lambda g: (g, 0)),
        compiler_params=pltpu.CompilerParams(
            dimension_semantics=("parallel",)),   # megacore split on v7x
    )(x_flat, *consts)

    out = out.reshape(b_pad, T, D)[:B]
    return out, None


# ---------------------------------------------------------------------------
# Deterministic parameter construction + host-side restructuring
# ---------------------------------------------------------------------------

def init_params(key, d_model, num_layers, n_head, perf_in=23, match_info_dim=14):
    """Synthetic parameters in standard [in, out] (pre-transposed nn.Linear) layout."""
    D = d_model
    ks = iter(jax.random.split(key, 16 + 16 * num_layers))

    def dense(shape, scale=0.1):
        return (scale * jax.random.normal(next(ks), shape)).astype(jnp.float32)

    perf = dict(
        wpe=dense((perf_in, D)), bpe=dense((1, D), 0.02),          # player emb (23 -> D)
        wm1=dense((D, D)), wm2=dense((D, D)), wm3=dense((match_info_dim, D)),
        bm=dense((1, D), 0.02),                                    # match emb (2D+14 -> D)
        wproj=dense((3 * D, D)), bproj=dense((1, D), 0.02),        # PerformanceEmbedding.proj
    )
    layers = []
    for _ in range(num_layers):
        layers.append(dict(
            ln1_w=jnp.ones((1, D), jnp.float32), ln1_b=jnp.zeros((1, D), jnp.float32),
            w_in=dense((D, 3 * D)), b_in=dense((1, 3 * D), 0.02),
            w_out=dense((D, D)), b_out=dense((1, D), 0.02),
            ln2_w=jnp.ones((1, D), jnp.float32), ln2_b=jnp.zeros((1, D), jnp.float32),
            w1=dense((D, 4 * D)), b1=dense((1, 4 * D), 0.02),
            w2=dense((4 * D, D)), b2=dense((1, D), 0.02),
        ))
    return dict(perf=perf, layers=layers, n_head=n_head, d_model=D)


def prepare_params(params, weight_dtype=jnp.bfloat16):
    """Host-side restructuring:
       - whole PerformanceEmbedding folded into one (F, D) weight + (1, D) bias
       - qkv columns / out_proj rows permuted to (d, head) order
       - all matrices packed into 3 bf16 slabs (by width D / 3D / 4D) and all
         biases + LN params packed into one f32 (rows, 4D) slab."""
    D = params["d_model"]
    H = params["n_head"]
    L = len(params["layers"])
    dh = D // H
    ar = np.arange(D)
    perm = (ar % H) * dh + ar // H                  # new (d*H+n) <- old (n*dh+d)
    qkv_perm = np.concatenate([perm, D + perm, 2 * D + perm])

    p = params["perf"]
    wproj = p["wproj"]
    wp_pe = wproj[0:D] + wproj[2 * D:3 * D]         # cat([pe,mp,pe])@W == pe@(W0+W2)+mp@W1
    wp_mp = wproj[D:2 * D]
    w_emb = jnp.concatenate([p["wpe"] @ wp_pe, p["wm1"] @ wp_mp,
                             p["wm2"] @ wp_mp, p["wm3"] @ wp_mp], axis=0)
    f_in = w_emb.shape[0]
    f_pad = ((f_in + 127) // 128) * 128
    w_emb = jnp.pad(w_emb, ((0, f_pad - f_in), (0, 0)))
    b_emb = p["bpe"] @ wp_pe + p["bm"] @ wp_mp + p["bproj"]

    def padv(v):
        return jnp.pad(v, ((0, 0), (0, 4 * D - v.shape[1])))

    matD_rows = [w_emb]
    mat3_rows, mat4_rows = [], []
    vec_rows = [padv(b_emb), jnp.zeros((7, 4 * D), jnp.float32)]
    for lw in params["layers"]:
        wqkv = lw["w_in"][:, qkv_perm]
        bqkv = lw["b_in"][:, qkv_perm]
        wout = lw["w_out"][perm, :]
        matD_rows += [wout, lw["w2"]]
        mat3_rows += [wqkv]
        mat4_rows += [lw["w1"]]
        vec_rows += [padv(lw["ln1_w"]), padv(lw["ln1_b"]), padv(bqkv),
                     padv(lw["b_out"]), padv(lw["ln2_w"]), padv(lw["ln2_b"]),
                     padv(lw["b1"]), padv(lw["b2"])]

    return dict(
        matD=jnp.concatenate(matD_rows, axis=0).astype(weight_dtype),
        mat3=jnp.concatenate(mat3_rows, axis=0).astype(weight_dtype),
        mat4=jnp.concatenate(mat4_rows, axis=0).astype(weight_dtype),
        vecs=jnp.concatenate(vec_rows, axis=0).astype(jnp.float32),
        d_model=D, n_head=H, num_layers=L, f_in=int(f_in), f_pad=int(f_pad),
    )


# ---------------------------------------------------------------------------
# Pure-JAX reference (mirrors the PyTorch module) for a loose sanity check
# ---------------------------------------------------------------------------

def _reference_forward(params, player_input, team1, team2, match_info):
    D = params["d_model"]
    H = params["n_head"]
    dh = D // H
    B, T, _ = player_input.shape
    p = params["perf"]
    pe = player_input @ p["wpe"] + p["bpe"]
    mp = team1 @ p["wm1"] + team2 @ p["wm2"] + match_info @ p["wm3"] + p["bm"]
    x = jnp.concatenate([pe, mp, pe], axis=-1) @ p["wproj"] + p["bproj"]
    for lw in params["layers"]:
        h = _layernorm(x, lw["ln1_w"], lw["ln1_b"])
        qkv = (h @ lw["w_in"] + lw["b_in"]).reshape(B, T, 3, H, dh)
        q, k, v = qkv[:, :, 0], qkv[:, :, 1], qkv[:, :, 2]
        att = jnp.einsum('bsnd,bnhd->bnsh', q, k) / math.sqrt(dh)
        w = jax.nn.softmax(att, axis=-1)
        out = jnp.einsum('bnsh,bnhd->bnsd', w, v)
        out = out.transpose(0, 2, 1, 3).reshape(B, T, D)
        x = out @ lw["w_out"] + lw["b_out"] + x
        h2 = _layernorm(x, lw["ln2_w"], lw["ln2_b"])
        m1 = h2 @ lw["w1"] + lw["b1"]
        m1 = m1 * jax.nn.sigmoid(1.702 * m1)
        x = m1 @ lw["w2"] + lw["b2"] + x
    return x


# ---------------------------------------------------------------------------
# Example run
# ---------------------------------------------------------------------------

if __name__ == "__main__":
    B, T, D = 2, 8, 32
    NUM_LAYERS = 2
    N_HEAD = T          # required by the reference SelfAttention's broadcasting
    PERF_IN, MATCH_INFO = 23, 14

    key = jax.random.PRNGKey(0)
    k_params, k_p, k_t1, k_t2, k_info = jax.random.split(key, 5)

    raw = init_params(k_params, D, NUM_LAYERS, N_HEAD, PERF_IN, MATCH_INFO)
    prepared = prepare_params(raw)

    player_input = jax.random.normal(k_p, (B, T, PERF_IN), dtype=jnp.float32)
    team1 = jax.random.normal(k_t1, (B, T, D), dtype=jnp.float32)
    team2 = jax.random.normal(k_t2, (B, T, D), dtype=jnp.float32)
    match_info = jax.random.normal(k_info, (B, T, MATCH_INFO), dtype=jnp.float32)

    out, aux = next_form_predictor(prepared, player_input, team1, team2, match_info)
    out = jax.block_until_ready(out)
    assert out.shape == (B, T, D) and out.dtype == jnp.float32
    assert aux is None
    assert bool(jnp.all(jnp.isfinite(out)))

    # loose sanity check against the pure-JAX reference (bf16 MXU operands)
    with jax.default_matmul_precision("float32"):
        ref = _reference_forward(raw, player_input, team1, team2, match_info)
    err = float(jnp.max(jnp.abs(out - ref)) / (jnp.max(jnp.abs(ref)) + 1e-6))
    assert err < 0.1, f"kernel deviates from reference: normalized max err {err:.3e}"

    print("KERNEL_OK")
</pallas_src>

<mosaic_0001>
module attributes {stable_mosaic.version = 11 : i64} {
  func.func @_fused_forward_kernel(%arg0: i32, %arg1: memref<16x128xf32, #tpu.memory_space<vmem>>, %arg2: memref<16x64xbf16, #tpu.memory_space<vmem>>, %arg3: memref<64x64xbf16, #tpu.memory_space<vmem>>, %arg4: memref<64x64xf32, #tpu.memory_space<vmem>>, %arg5: memref<16x128xbf16, #tpu.memory_space<vmem>>, %arg6: memref<128x16xbf16, #tpu.memory_space<vmem>>, %arg7: memref<128x32xbf16, #tpu.memory_space<vmem>>, %arg8: memref<32x32xbf16, #tpu.memory_space<vmem>>, %arg9: memref<128x32xbf16, #tpu.memory_space<vmem>>, %arg10: memref<448x32xbf16, #tpu.memory_space<vmem>>, %arg11: memref<64x96xbf16, #tpu.memory_space<vmem>>, %arg12: memref<64x128xbf16, #tpu.memory_space<vmem>>, %arg13: memref<24x128xf32, #tpu.memory_space<vmem>>, %arg14: memref<16x32xf32, #tpu.memory_space<vmem>>) attributes {dimension_semantics = [#tpu.dimension_semantics<parallel>], iteration_bounds = array<i64: 1>, scalar_prefetch = 0 : i64, scratch_operands = 0 : i64, tpu.core_type = #tpu.core_type<tc>, window_params = [{transform_indices = @transform_0, window_bounds = array<i64: 16, 128>}, {pipeline_mode = #tpu.pipeline_mode<synchronous>, transform_indices = @transform_1, window_bounds = array<i64: 16, 64>}, {pipeline_mode = #tpu.pipeline_mode<synchronous>, transform_indices = @transform_2, window_bounds = array<i64: 64, 64>}, {pipeline_mode = #tpu.pipeline_mode<synchronous>, transform_indices = @transform_3, window_bounds = array<i64: 64, 64>}, {pipeline_mode = #tpu.pipeline_mode<synchronous>, transform_indices = @transform_4, window_bounds = array<i64: 16, 128>}, {pipeline_mode = #tpu.pipeline_mode<synchronous>, transform_indices = @transform_5, window_bounds = array<i64: 128, 16>}, {pipeline_mode = #tpu.pipeline_mode<synchronous>, transform_indices = @transform_6, window_bounds = array<i64: 128, 32>}, {pipeline_mode = #tpu.pipeline_mode<synchronous>, transform_indices = @transform_7, window_bounds = array<i64: 32, 32>}, {pipeline_mode = #tpu.pipeline_mode<synchronous>, transform_indices = @transform_8, window_bounds = array<i64: 128, 32>}, {pipeline_mode = #tpu.pipeline_mode<synchronous>, transform_indices = @transform_9, window_bounds = array<i64: 448, 32>}, {pipeline_mode = #tpu.pipeline_mode<synchronous>, transform_indices = @transform_10, window_bounds = array<i64: 64, 96>}, {pipeline_mode = #tpu.pipeline_mode<synchronous>, transform_indices = @transform_11, window_bounds = array<i64: 64, 128>}, {pipeline_mode = #tpu.pipeline_mode<synchronous>, transform_indices = @transform_12, window_bounds = array<i64: 24, 128>}, {transform_indices = @transform_13, window_bounds = array<i64: 16, 32>}]} {
    %c0 = arith.constant 0 : index
    %c0_0 = arith.constant 0 : index
    %0 = vector.load %arg2[%c0, %c0_0] : memref<16x64xbf16, #tpu.memory_space<vmem>>, vector<16x64xbf16>
    %c0_1 = arith.constant 0 : index
    %c0_2 = arith.constant 0 : index
    %1 = vector.load %arg3[%c0_1, %c0_2] : memref<64x64xbf16, #tpu.memory_space<vmem>>, vector<64x64xbf16>
    %c0_3 = arith.constant 0 : index
    %c0_4 = arith.constant 0 : index
    %2 = vector.load %arg4[%c0_3, %c0_4] : memref<64x64xf32, #tpu.memory_space<vmem>>, vector<64x64xf32>
    %c0_5 = arith.constant 0 : index
    %c0_6 = arith.constant 0 : index
    %3 = vector.load %arg5[%c0_5, %c0_6] : memref<16x128xbf16, #tpu.memory_space<vmem>>, vector<16x128xbf16>
    %c0_7 = arith.constant 0 : index
    %c0_8 = arith.constant 0 : index
    %4 = vector.load %arg6[%c0_7, %c0_8] : memref<128x16xbf16, #tpu.memory_space<vmem>>, vector<128x16xbf16>
    %c0_9 = arith.constant 0 : index
    %c0_10 = arith.constant 0 : index
    %5 = vector.load %arg7[%c0_9, %c0_10] : memref<128x32xbf16, #tpu.memory_space<vmem>>, vector<128x32xbf16>
    %c0_11 = arith.constant 0 : index
    %c0_12 = arith.constant 0 : index
    %6 = vector.load %arg8[%c0_11, %c0_12] : memref<32x32xbf16, #tpu.memory_space<vmem>>, vector<32x32xbf16>
    %c0_13 = arith.constant 0 : index
    %c0_14 = arith.constant 0 : index
    %7 = vector.load %arg9[%c0_13, %c0_14] : memref<128x32xbf16, #tpu.memory_space<vmem>>, vector<128x32xbf16>
    %8 = tpu.iota {dimensions = array<i32: 1>} : vector<1x64xi32>
    %c8_i32 = arith.constant 8 : i32
    %c0_i32 = arith.constant 0 : i32
    %9 = arith.cmpi eq, %c8_i32, %c0_i32 : i32
    %c1_i32 = arith.constant 1 : i32
    %10 = arith.select %9, %c1_i32, %c8_i32 : i32
    %11 = vector.broadcast %10 : i32 to vector<1x64xi32>
    %12 = arith.remsi %8, %11 : vector<1x64xi32>
    %c0_i32_15 = arith.constant 0 : i32
    %13 = vector.broadcast %c0_i32_15 : i32 to vector<1x64xi32>
    %14 = arith.cmpi ne, %12, %13 : vector<1x64xi32>
    %c0_i32_16 = arith.constant 0 : i32
    %15 = vector.broadcast %c0_i32_16 : i32 to vector<1x64xi32>
    %16 = arith.cmpi slt, %12, %15 : vector<1x64xi32>
    %c0_i32_17 = arith.constant 0 : i32
    %17 = arith.cmpi slt, %10, %c0_i32_17 : i32
    %18 = vector.broadcast %17 : i1 to vector<1x64xi1>
    %19 = vector.broadcast %18 : vector<1x64xi1> to vector<1x64xi1>
    %20 = arith.xori %16, %19 : vector<1x64xi1>
    %21 = arith.andi %20, %14 : vector<1x64xi1>
    %22 = vector.broadcast %10 : i32 to vector<1x64xi32>
    %23 = arith.addi %12, %22 : vector<1x64xi32>
    %24 = arith.select %21, %23, %12 : vector<1x64xi1>, vector<1x64xi32>
    %c0_18 = arith.constant 0 : index
    %c0_19 = arith.constant 0 : index
    %25 = vector.load %arg10[%c0_18, %c0_19] : memref<448x32xbf16, #tpu.memory_space<vmem>>, vector<128x32xbf16>
    %c0_20 = arith.constant 0 : index
    %c0_21 = arith.constant 0 : index
    %26 = vector.load %arg1[%c0_20, %c0_21] : memref<16x128xf32, #tpu.memory_space<vmem>>, vector<16x128xf32>
    %27 = arith.truncf %26 : vector<16x128xf32> to vector<16x128xbf16>
    %cst = arith.constant dense<0.000000e+00> : vector<16x32xf32>
    %28 = tpu.matmul %27, %25, %cst {dimension_numbers = #tpu.dot_dimension_numbers<[1], [0], [0], [1], [0, 0, 1, 1], [], []>} : vector<16x128xbf16>, vector<128x32xbf16>, vector<16x32xf32> -> vector<16x32xf32>
    %c0_22 = arith.constant 0 : index
    %c0_23 = arith.constant 0 : index
    %29 = vector.load %arg13[%c0_22, %c0_23] : memref<24x128xf32, #tpu.memory_space<vmem>>, vector<1x32xf32>
    %30 = vector.broadcast %29 : vector<1x32xf32> to vector<16x32xf32>
    %31 = arith.addf %28, %30 : vector<16x32xf32>
    %c128 = arith.constant 128 : index
    %c0_24 = arith.constant 0 : index
    %32 = vector.load %arg10[%c128, %c0_24] : memref<448x32xbf16, #tpu.memory_space<vmem>>, vector<32x32xbf16>
    %c160 = arith.constant 160 : index
    %c0_25 = arith.constant 0 : index
    %33 = vector.load %arg10[%c160, %c0_25] : memref<448x32xbf16, #tpu.memory_space<vmem>>, vector<128x32xbf16>
    %c0_26 = arith.constant 0 : index
    %c0_27 = arith.constant 0 : index
    %34 = vector.load %arg11[%c0_26, %c0_27] : memref<64x96xbf16, #tpu.memory_space<vmem>>, vector<32x96xbf16>
    %c0_28 = arith.constant 0 : index
    %c0_29 = arith.constant 0 : index
    %35 = vector.load %arg12[%c0_28, %c0_29] : memref<64x128xbf16, #tpu.memory_space<vmem>>, vector<32x128xbf16>
    %c8 = arith.constant 8 : index
    %c0_30 = arith.constant 0 : index
    %36 = vector.load %arg13[%c8, %c0_30] : memref<24x128xf32, #tpu.memory_space<vmem>>, vector<1x32xf32>
    %c9 = arith.constant 9 : index
    %c0_31 = arith.constant 0 : index
    %37 = vector.load %arg13[%c9, %c0_31] : memref<24x128xf32, #tpu.memory_space<vmem>>, vector<1x32xf32>
    %c10 = arith.constant 10 : index
    %c0_32 = arith.constant 0 : index
    %38 = vector.load %arg13[%c10, %c0_32] : memref<24x128xf32, #tpu.memory_space<vmem>>, vector<1x96xf32>
    %c11 = arith.constant 11 : index
    %c0_33 = arith.constant 0 : index
    %39 = vector.load %arg13[%c11, %c0_33] : memref<24x128xf32, #tpu.memory_space<vmem>>, vector<1x32xf32>
    %c12 = arith.constant 12 : index
    %c0_34 = arith.constant 0 : index
    %40 = vector.load %arg13[%c12, %c0_34] : memref<24x128xf32, #tpu.memory_space<vmem>>, vector<1x32xf32>
    %c13 = arith.constant 13 : index
    %c0_35 = arith.constant 0 : index
    %41 = vector.load %arg13[%c13, %c0_35] : memref<24x128xf32, #tpu.memory_space<vmem>>, vector<1x32xf32>
    %c14 = arith.constant 14 : index
    %c0_36 = arith.constant 0 : index
    %42 = vector.load %arg13[%c14, %c0_36] : memref<24x128xf32, #tpu.memory_space<vmem>>, vector<1x128xf32>
    %c15 = arith.constant 15 : index
    %c0_37 = arith.constant 0 : index
    %43 = vector.load %arg13[%c15, %c0_37] : memref<24x128xf32, #tpu.memory_space<vmem>>, vector<1x32xf32>
    %cst_38 = arith.constant dense<0.000000e+00> : vector<16xf32>
    %44 = vector.multi_reduction <add>, %31, %cst_38 [1] : vector<16x32xf32> to vector<16xf32>
    %45 = vector.shape_cast %44 : vector<16xf32> to vector<16x1xf32>
    %cst_39 = arith.constant 3.200000e+01 : f32
    %46 = vector.broadcast %cst_39 : f32 to vector<16x1xf32>
    %47 = arith.divf %45, %46 : vector<16x1xf32>
    %48 = vector.broadcast %47 : vector<16x1xf32> to vector<16x32xf32>
    %49 = arith.subf %31, %48 : vector<16x32xf32>
    %50 = arith.mulf %49, %49 : vector<16x32xf32>
    %cst_40 = arith.constant dense<0.000000e+00> : vector<16xf32>
    %51 = vector.multi_reduction <add>, %50, %cst_40 [1] : vector<16x32xf32> to vector<16xf32>
    %52 = vector.shape_cast %51 : vector<16xf32> to vector<16x1xf32>
    %cst_41 = arith.constant 3.200000e+01 : f32
    %53 = vector.broadcast %cst_41 : f32 to vector<16x1xf32>
    %54 = arith.divf %52, %53 : vector<16x1xf32>
    %55 = vector.broadcast %47 : vector<16x1xf32> to vector<16x32xf32>
    %56 = arith.subf %31, %55 : vector<16x32xf32>
    %cst_42 = arith.constant 9.99999974E-6 : f32
    %57 = vector.broadcast %cst_42 : f32 to vector<16x1xf32>
    %58 = arith.addf %54, %57 : vector<16x1xf32>
    %59 = math.rsqrt %58 : vector<16x1xf32>
    %60 = vector.broadcast %59 : vector<16x1xf32> to vector<16x32xf32>
    %61 = arith.mulf %56, %60 : vector<16x32xf32>
    %62 = vector.broadcast %36 : vector<1x32xf32> to vector<16x32xf32>
    %63 = arith.mulf %61, %62 : vector<16x32xf32>
    %64 = vector.broadcast %37 : vector<1x32xf32> to vector<16x32xf32>
    %65 = arith.addf %63, %64 : vector<16x32xf32>
    %66 = arith.truncf %65 : vector<16x32xf32> to vector<16x32xbf16>
    %cst_43 = arith.constant dense<0.000000e+00> : vector<16x96xf32>
    %67 = tpu.matmul %66, %34, %cst_43 {dimension_numbers = #tpu.dot_dimension_numbers<[1], [0], [0], [1], [0, 0, 1, 1], [], []>} : vector<16x32xbf16>, vector<32x96xbf16>, vector<16x96xf32> -> vector<16x96xf32>
    %68 = vector.broadcast %38 : vector<1x96xf32> to vector<16x96xf32>
    %69 = arith.addf %67, %68 : vector<16x96xf32>
    %70 = arith.truncf %69 : vector<16x96xf32> to vector<16x96xbf16>
    %71 = vector.extract_strided_slice %70 {offsets = [0, 0], sizes = [16, 32], strides = [1, 1]} : vector<16x96xbf16> to vector<16x32xbf16>
    %72 = vector.extract_strided_slice %70 {offsets = [0, 32], sizes = [16, 32], strides = [1, 1]} : vector<16x96xbf16> to vector<16x32xbf16>
    %73 = vector.extract_strided_slice %70 {offsets = [0, 64], sizes = [16, 32], strides = [1, 1]} : vector<16x96xbf16> to vector<16x32xbf16>
    %74 = vector.extract_strided_slice %71 {offsets = [0, 0], sizes = [16, 8], strides = [1, 1]} : vector<16x32xbf16> to vector<16x8xbf16>
    %75 = vector.extract_strided_slice %71 {offsets = [0, 8], sizes = [16, 8], strides = [1, 1]} : vector<16x32xbf16> to vector<16x8xbf16>
    %76 = vector.extract_strided_slice %71 {offsets = [0, 16], sizes = [16, 8], strides = [1, 1]} : vector<16x32xbf16> to vector<16x8xbf16>
    %77 = vector.extract_strided_slice %71 {offsets = [0, 24], sizes = [16, 8], strides = [1, 1]} : vector<16x32xbf16> to vector<16x8xbf16>
    %78 = tpu.concatenate %74, %74, %75, %75, %76, %76, %77, %77 in 1 : vector<16x8xbf16>, vector<16x8xbf16>, vector<16x8xbf16>, vector<16x8xbf16>, vector<16x8xbf16>, vector<16x8xbf16>, vector<16x8xbf16>, vector<16x8xbf16> -> vector<16x64xbf16>
    %79 = arith.mulf %78, %0 : vector<16x64xbf16>
    %80 = vector.extract_strided_slice %72 {offsets = [0, 0], sizes = [16, 8], strides = [1, 1]} : vector<16x32xbf16> to vector<16x8xbf16>
    %81 = tpu.concatenate %80, %80, %80, %80, %80, %80, %80, %80 in 1 : vector<16x8xbf16>, vector<16x8xbf16>, vector<16x8xbf16>, vector<16x8xbf16>, vector<16x8xbf16>, vector<16x8xbf16>, vector<16x8xbf16>, vector<16x8xbf16> -> vector<16x64xbf16>
    %82 = vector.extract_strided_slice %72 {offsets = [0, 8], sizes = [16, 8], strides = [1, 1]} : vector<16x32xbf16> to vector<16x8xbf16>
    %83 = tpu.concatenate %82, %82, %82, %82, %82, %82, %82, %82 in 1 : vector<16x8xbf16>, vector<16x8xbf16>, vector<16x8xbf16>, vector<16x8xbf16>, vector<16x8xbf16>, vector<16x8xbf16>, vector<16x8xbf16>, vector<16x8xbf16> -> vector<16x64xbf16>
    %84 = vector.extract_strided_slice %72 {offsets = [0, 16], sizes = [16, 8], strides = [1, 1]} : vector<16x32xbf16> to vector<16x8xbf16>
    %85 = tpu.concatenate %84, %84, %84, %84, %84, %84, %84, %84 in 1 : vector<16x8xbf16>, vector<16x8xbf16>, vector<16x8xbf16>, vector<16x8xbf16>, vector<16x8xbf16>, vector<16x8xbf16>, vector<16x8xbf16>, vector<16x8xbf16> -> vector<16x64xbf16>
    %86 = vector.extract_strided_slice %72 {offsets = [0, 24], sizes = [16, 8], strides = [1, 1]} : vector<16x32xbf16> to vector<16x8xbf16>
    %87 = tpu.concatenate %86, %86, %86, %86, %86, %86, %86, %86 in 1 : vector<16x8xbf16>, vector<16x8xbf16>, vector<16x8xbf16>, vector<16x8xbf16>, vector<16x8xbf16>, vector<16x8xbf16>, vector<16x8xbf16>, vector<16x8xbf16> -> vector<16x64xbf16>
    %88 = tpu.concatenate %81, %83, %85, %87 in 0 : vector<16x64xbf16>, vector<16x64xbf16>, vector<16x64xbf16>, vector<16x64xbf16> -> vector<64x64xbf16>
    %89 = arith.mulf %88, %1 : vector<64x64xbf16>
    %cst_44 = arith.constant dense<0.000000e+00> : vector<16x64xf32>
    %90 = tpu.matmul %79, %89, %cst_44 {dimension_numbers = #tpu.dot_dimension_numbers<[1], [0], [0], [1], [0, 0, 1, 1], [], []>} : vector<16x64xbf16>, vector<64x64xbf16>, vector<16x64xf32> -> vector<16x64xf32>
    %cst_45 = arith.constant 5.000000e-01 : f32
    %91 = vector.broadcast %cst_45 : f32 to vector<16x64xf32>
    %92 = arith.mulf %90, %91 : vector<16x64xf32>
    %c1_i32_46 = arith.constant 1 : i32
    %93 = vector.broadcast %c1_i32_46 : i32 to vector<1x64xi32>
    %94 = arith.addi %24, %93 : vector<1x64xi32>
    %c8_i32_47 = arith.constant 8 : i32
    %95 = vector.broadcast %c8_i32_47 : i32 to vector<1x64xi32>
    %96 = arith.cmpi slt, %94, %95 : vector<1x64xi32>
    %c63_i32 = arith.constant 63 : i32
    %97 = tpu.dynamic_rotate %92 by %c63_i32 dim 1 : vector<16x64xf32>, i32 -> vector<16x64xf32>
    %98 = vector.shape_cast %96 : vector<1x64xi1> to vector<1x64xi1>
    %99 = vector.broadcast %98 : vector<1x64xi1> to vector<16x64xi1>
    %100 = arith.select %99, %97, %92 : vector<16x64xi1>, vector<16x64xf32>
    %101 = arith.maximumf %92, %100 : vector<16x64xf32>
    %c1_i32_48 = arith.constant 1 : i32
    %102 = vector.broadcast %c1_i32_48 : i32 to vector<1x64xi32>
    %103 = arith.cmpi sge, %24, %102 : vector<1x64xi32>
    %c1_i32_49 = arith.constant 1 : i32
    %104 = tpu.dynamic_rotate %92 by %c1_i32_49 dim 1 : vector<16x64xf32>, i32 -> vector<16x64xf32>
    %105 = vector.shape_cast %103 : vector<1x64xi1> to vector<1x64xi1>
    %106 = vector.broadcast %105 : vector<1x64xi1> to vector<16x64xi1>
    %107 = arith.select %106, %104, %92 : vector<16x64xi1>, vector<16x64xf32>
    %108 = arith.maximumf %92, %107 : vector<16x64xf32>
    %c2_i32 = arith.constant 2 : i32
    %109 = vector.broadcast %c2_i32 : i32 to vector<1x64xi32>
    %110 = arith.addi %24, %109 : vector<1x64xi32>
    %c8_i32_50 = arith.constant 8 : i32
    %111 = vector.broadcast %c8_i32_50 : i32 to vector<1x64xi32>
    %112 = arith.cmpi slt, %110, %111 : vector<1x64xi32>
    %c62_i32 = arith.constant 62 : i32
    %113 = tpu.dynamic_rotate %101 by %c62_i32 dim 1 : vector<16x64xf32>, i32 -> vector<16x64xf32>
    %114 = vector.shape_cast %112 : vector<1x64xi1> to vector<1x64xi1>
    %115 = vector.broadcast %114 : vector<1x64xi1> to vector<16x64xi1>
    %116 = arith.select %115, %113, %101 : vector<16x64xi1>, vector<16x64xf32>
    %117 = arith.maximumf %101, %116 : vector<16x64xf32>
    %c2_i32_51 = arith.constant 2 : i32
    %118 = vector.broadcast %c2_i32_51 : i32 to vector<1x64xi32>
    %119 = arith.cmpi sge, %24, %118 : vector<1x64xi32>
    %c2_i32_52 = arith.constant 2 : i32
    %120 = tpu.dynamic_rotate %108 by %c2_i32_52 dim 1 : vector<16x64xf32>, i32 -> vector<16x64xf32>
    %121 = vector.shape_cast %119 : vector<1x64xi1> to vector<1x64xi1>
    %122 = vector.broadcast %121 : vector<1x64xi1> to vector<16x64xi1>
    %123 = arith.select %122, %120, %108 : vector<16x64xi1>, vector<16x64xf32>
    %124 = arith.maximumf %108, %123 : vector<16x64xf32>
    %c4_i32 = arith.constant 4 : i32
    %125 = vector.broadcast %c4_i32 : i32 to vector<1x64xi32>
    %126 = arith.addi %24, %125 : vector<1x64xi32>
    %c8_i32_53 = arith.constant 8 : i32
    %127 = vector.broadcast %c8_i32_53 : i32 to vector<1x64xi32>
    %128 = arith.cmpi slt, %126, %127 : vector<1x64xi32>
    %c60_i32 = arith.constant 60 : i32
    %129 = tpu.dynamic_rotate %117 by %c60_i32 dim 1 : vector<16x64xf32>, i32 -> vector<16x64xf32>
    %130 = vector.shape_cast %128 : vector<1x64xi1> to vector<1x64xi1>
    %131 = vector.broadcast %130 : vector<1x64xi1> to vector<16x64xi1>
    %132 = arith.select %131, %129, %117 : vector<16x64xi1>, vector<16x64xf32>
    %133 = arith.maximumf %117, %132 : vector<16x64xf32>
    %c4_i32_54 = arith.constant 4 : i32
    %134 = vector.broadcast %c4_i32_54 : i32 to vector<1x64xi32>
    %135 = arith.cmpi sge, %24, %134 : vector<1x64xi32>
    %c4_i32_55 = arith.constant 4 : i32
    %136 = tpu.dynamic_rotate %124 by %c4_i32_55 dim 1 : vector<16x64xf32>, i32 -> vector<16x64xf32>
    %137 = vector.shape_cast %135 : vector<1x64xi1> to vector<1x64xi1>
    %138 = vector.broadcast %137 : vector<1x64xi1> to vector<16x64xi1>
    %139 = arith.select %138, %136, %124 : vector<16x64xi1>, vector<16x64xf32>
    %140 = arith.maximumf %124, %139 : vector<16x64xf32>
    %141 = arith.maximumf %133, %140 : vector<16x64xf32>
    %142 = arith.subf %92, %141 : vector<16x64xf32>
    %143 = math.exp %142 : vector<16x64xf32>
    %cst_56 = arith.constant dense<0.000000e+00> : vector<16x64xf32>
    %144 = tpu.matmul %143, %2, %cst_56 {dimension_numbers = #tpu.dot_dimension_numbers<[1], [0], [0], [1], [0, 0, 1, 1], [], []>} : vector<16x64xf32>, vector<64x64xf32>, vector<16x64xf32> -> vector<16x64xf32>
    %145 = arith.divf %143, %144 : vector<16x64xf32>
    %146 = arith.truncf %145 : vector<16x64xf32> to vector<16x64xbf16>
    %147 = tpu.concatenate %146, %146 in 1 : vector<16x64xbf16>, vector<16x64xbf16> -> vector<16x128xbf16>
    %148 = arith.mulf %147, %3 : vector<16x128xbf16>
    %cst_57 = arith.constant dense<0.000000e+00> : vector<128x32xf32>
    %149 = tpu.matmul %4, %73, %cst_57 {dimension_numbers = #tpu.dot_dimension_numbers<[1], [0], [0], [1], [0, 0, 1, 1], [], []>} : vector<128x16xbf16>, vector<16x32xbf16>, vector<128x32xf32> -> vector<128x32xf32>
    %150 = arith.truncf %149 : vector<128x32xf32> to vector<128x32xbf16>
    %151 = arith.mulf %150, %5 : vector<128x32xbf16>
    %cst_58 = arith.constant dense<0.000000e+00> : vector<128x32xf32>
    %152 = tpu.matmul %151, %6, %cst_58 {dimension_numbers = #tpu.dot_dimension_numbers<[1], [0], [0], [1], [0, 0, 1, 1], [], []>} : vector<128x32xbf16>, vector<32x32xbf16>, vector<128x32xf32> -> vector<128x32xf32>
    %153 = arith.truncf %152 : vector<128x32xf32> to vector<128x32xbf16>
    %154 = arith.mulf %153, %7 : vector<128x32xbf16>
    %cst_59 = arith.constant dense<0.000000e+00> : vector<16x32xf32>
    %155 = tpu.matmul %148, %154, %cst_59 {dimension_numbers = #tpu.dot_dimension_numbers<[1], [0], [0], [1], [0, 0, 1, 1], [], []>} : vector<16x128xbf16>, vector<128x32xbf16>, vector<16x32xf32> -> vector<16x32xf32>
    %156 = arith.truncf %155 : vector<16x32xf32> to vector<16x32xbf16>
    %cst_60 = arith.constant dense<0.000000e+00> : vector<16x32xf32>
    %157 = tpu.matmul %156, %32, %cst_60 {dimension_numbers = #tpu.dot_dimension_numbers<[1], [0], [0], [1], [0, 0, 1, 1], [], []>} : vector<16x32xbf16>, vector<32x32xbf16>, vector<16x32xf32> -> vector<16x32xf32>
    %158 = vector.broadcast %39 : vector<1x32xf32> to vector<16x32xf32>
    %159 = arith.addf %157, %158 : vector<16x32xf32>
    %160 = arith.addf %159, %31 : vector<16x32xf32>
    %cst_61 = arith.constant dense<0.000000e+00> : vector<16xf32>
    %161 = vector.multi_reduction <add>, %160, %cst_61 [1] : vector<16x32xf32> to vector<16xf32>
    %162 = vector.shape_cast %161 : vector<16xf32> to vector<16x1xf32>
    %cst_62 = arith.constant 3.200000e+01 : f32
    %163 = vector.broadcast %cst_62 : f32 to vector<16x1xf32>
    %164 = arith.divf %162, %163 : vector<16x1xf32>
    %165 = vector.broadcast %164 : vector<16x1xf32> to vector<16x32xf32>
    %166 = arith.subf %160, %165 : vector<16x32xf32>
    %167 = arith.mulf %166, %166 : vector<16x32xf32>
    %cst_63 = arith.constant dense<0.000000e+00> : vector<16xf32>
    %168 = vector.multi_reduction <add>, %167, %cst_63 [1] : vector<16x32xf32> to vector<16xf32>
    %169 = vector.shape_cast %168 : vector<16xf32> to vector<16x1xf32>
    %cst_64 = arith.constant 3.200000e+01 : f32
    %170 = vector.broadcast %cst_64 : f32 to vector<16x1xf32>
    %171 = arith.divf %169, %170 : vector<16x1xf32>
    %172 = vector.broadcast %164 : vector<16x1xf32> to vector<16x32xf32>
    %173 = arith.subf %160, %172 : vector<16x32xf32>
    %cst_65 = arith.constant 9.99999974E-6 : f32
    %174 = vector.broadcast %cst_65 : f32 to vector<16x1xf32>
    %175 = arith.addf %171, %174 : vector<16x1xf32>
    %176 = math.rsqrt %175 : vector<16x1xf32>
    %177 = vector.broadcast %176 : vector<16x1xf32> to vector<16x32xf32>
    %178 = arith.mulf %173, %177 : vector<16x32xf32>
    %179 = vector.broadcast %40 : vector<1x32xf32> to vector<16x32xf32>
    %180 = arith.mulf %178, %179 : vector<16x32xf32>
    %181 = vector.broadcast %41 : vector<1x32xf32> to vector<16x32xf32>
    %182 = arith.addf %180, %181 : vector<16x32xf32>
    %183 = arith.truncf %182 : vector<16x32xf32> to vector<16x32xbf16>
    %cst_66 = arith.constant dense<0.000000e+00> : vector<16x128xf32>
    %184 = tpu.matmul %183, %35, %cst_66 {dimension_numbers = #tpu.dot_dimension_numbers<[1], [0], [0], [1], [0, 0, 1, 1], [], []>} : vector<16x32xbf16>, vector<32x128xbf16>, vector<16x128xf32> -> vector<16x128xf32>
    %185 = vector.broadcast %42 : vector<1x128xf32> to vector<16x128xf32>
    %186 = arith.addf %184, %185 : vector<16x128xf32>
    %cst_67 = arith.constant 1.702000e+00 : f32
    %187 = vector.broadcast %cst_67 : f32 to vector<16x128xf32>
    %188 = arith.mulf %187, %186 : vector<16x128xf32>
    %189 = arith.negf %188 : vector<16x128xf32>
    %190 = math.exp %189 : vector<16x128xf32>
    %cst_68 = arith.constant 1.000000e+00 : f32
    %191 = vector.broadcast %cst_68 : f32 to vector<16x128xf32>
    %192 = arith.addf %191, %190 : vector<16x128xf32>
    %193 = arith.divf %191, %192 : vector<16x128xf32>
    %194 = arith.mulf %186, %193 : vector<16x128xf32>
    %195 = arith.truncf %194 : vector<16x128xf32> to vector<16x128xbf16>
    %cst_69 = arith.constant dense<0.000000e+00> : vector<16x32xf32>
    %196 = tpu.matmul %195, %33, %cst_69 {dimension_numbers = #tpu.dot_dimension_numbers<[1], [0], [0], [1], [0, 0, 1, 1], [], []>} : vector<16x128xbf16>, vector<128x32xbf16>, vector<16x32xf32> -> vector<16x32xf32>
    %197 = vector.broadcast %43 : vector<1x32xf32> to vector<16x32xf32>
    %198 = arith.addf %196, %197 : vector<16x32xf32>
    %199 = arith.addf %198, %160 : vector<16x32xf32>
    %c288 = arith.constant 288 : index
    %c0_70 = arith.constant 0 : index
    %200 = vector.load %arg10[%c288, %c0_70] : memref<448x32xbf16, #tpu.memory_space<vmem>>, vector<32x32xbf16>
    %c320 = arith.constant 320 : index
    %c0_71 = arith.constant 0 : index
    %201 = vector.load %arg10[%c320, %c0_71] : memref<448x32xbf16, #tpu.memory_space<vmem>>, vector<128x32xbf16>
    %c32 = arith.constant 32 : index
    %c0_72 = arith.constant 0 : index
    %202 = vector.load %arg11[%c32, %c0_72] : memref<64x96xbf16, #tpu.memory_space<vmem>>, vector<32x96xbf16>
    %c32_73 = arith.constant 32 : index
    %c0_74 = arith.constant 0 : index
    %203 = vector.load %arg12[%c32_73, %c0_74] : memref<64x128xbf16, #tpu.memory_space<vmem>>, vector<32x128xbf16>
    %c16 = arith.constant 16 : index
    %c0_75 = arith.constant 0 : index
    %204 = vector.load %arg13[%c16, %c0_75] : memref<24x128xf32, #tpu.memory_space<vmem>>, vector<1x32xf32>
    %c17 = arith.constant 17 : index
    %c0_76 = arith.constant 0 : index
    %205 = vector.load %arg13[%c17, %c0_76] : memref<24x128xf32, #tpu.memory_space<vmem>>, vector<1x32xf32>
    %c18 = arith.constant 18 : index
    %c0_77 = arith.constant 0 : index
    %206 = vector.load %arg13[%c18, %c0_77] : memref<24x128xf32, #tpu.memory_space<vmem>>, vector<1x96xf32>
    %c19 = arith.constant 19 : index
    %c0_78 = arith.constant 0 : index
    %207 = vector.load %arg13[%c19, %c0_78] : memref<24x128xf32, #tpu.memory_space<vmem>>, vector<1x32xf32>
    %c20 = arith.constant 20 : index
    %c0_79 = arith.constant 0 : index
    %208 = vector.load %arg13[%c20, %c0_79] : memref<24x128xf32, #tpu.memory_space<vmem>>, vector<1x32xf32>
    %c21 = arith.constant 21 : index
    %c0_80 = arith.constant 0 : index
    %209 = vector.load %arg13[%c21, %c0_80] : memref<24x128xf32, #tpu.memory_space<vmem>>, vector<1x32xf32>
    %c22 = arith.constant 22 : index
    %c0_81 = arith.constant 0 : index
    %210 = vector.load %arg13[%c22, %c0_81] : memref<24x128xf32, #tpu.memory_space<vmem>>, vector<1x128xf32>
    %c23 = arith.constant 23 : index
    %c0_82 = arith.constant 0 : index
    %211 = vector.load %arg13[%c23, %c0_82] : memref<24x128xf32, #tpu.memory_space<vmem>>, vector<1x32xf32>
    %cst_83 = arith.constant dense<0.000000e+00> : vector<16xf32>
    %212 = vector.multi_reduction <add>, %199, %cst_83 [1] : vector<16x32xf32> to vector<16xf32>
    %213 = vector.shape_cast %212 : vector<16xf32> to vector<16x1xf32>
    %cst_84 = arith.constant 3.200000e+01 : f32
    %214 = vector.broadcast %cst_84 : f32 to vector<16x1xf32>
    %215 = arith.divf %213, %214 : vector<16x1xf32>
    %216 = vector.broadcast %215 : vector<16x1xf32> to vector<16x32xf32>
    %217 = arith.subf %199, %216 : vector<16x32xf32>
    %218 = arith.mulf %217, %217 : vector<16x32xf32>
    %cst_85 = arith.constant dense<0.000000e+00> : vector<16xf32>
    %219 = vector.multi_reduction <add>, %218, %cst_85 [1] : vector<16x32xf32> to vector<16xf32>
    %220 = vector.shape_cast %219 : vector<16xf32> to vector<16x1xf32>
    %cst_86 = arith.constant 3.200000e+01 : f32
    %221 = vector.broadcast %cst_86 : f32 to vector<16x1xf32>
    %222 = arith.divf %220, %221 : vector<16x1xf32>
    %223 = vector.broadcast %215 : vector<16x1xf32> to vector<16x32xf32>
    %224 = arith.subf %199, %223 : vector<16x32xf32>
    %cst_87 = arith.constant 9.99999974E-6 : f32
    %225 = vector.broadcast %cst_87 : f32 to vector<16x1xf32>
    %226 = arith.addf %222, %225 : vector<16x1xf32>
    %227 = math.rsqrt %226 : vector<16x1xf32>
    %228 = vector.broadcast %227 : vector<16x1xf32> to vector<16x32xf32>
    %229 = arith.mulf %224, %228 : vector<16x32xf32>
    %230 = vector.broadcast %204 : vector<1x32xf32> to vector<16x32xf32>
    %231 = arith.mulf %229, %230 : vector<16x32xf32>
    %232 = vector.broadcast %205 : vector<1x32xf32> to vector<16x32xf32>
    %233 = arith.addf %231, %232 : vector<16x32xf32>
    %234 = arith.truncf %233 : vector<16x32xf32> to vector<16x32xbf16>
    %cst_88 = arith.constant dense<0.000000e+00> : vector<16x96xf32>
    %235 = tpu.matmul %234, %202, %cst_88 {dimension_numbers = #tpu.dot_dimension_numbers<[1], [0], [0], [1], [0, 0, 1, 1], [], []>} : vector<16x32xbf16>, vector<32x96xbf16>, vector<16x96xf32> -> vector<16x96xf32>
    %236 = vector.broadcast %206 : vector<1x96xf32> to vector<16x96xf32>
    %237 = arith.addf %235, %236 : vector<16x96xf32>
    %238 = arith.truncf %237 : vector<16x96xf32> to vector<16x96xbf16>
    %239 = vector.extract_strided_slice %238 {offsets = [0, 0], sizes = [16, 32], strides = [1, 1]} : vector<16x96xbf16> to vector<16x32xbf16>
    %240 = vector.extract_strided_slice %238 {offsets = [0, 32], sizes = [16, 32], strides = [1, 1]} : vector<16x96xbf16> to vector<16x32xbf16>
    %241 = vector.extract_strided_slice %238 {offsets = [0, 64], sizes = [16, 32], strides = [1, 1]} : vector<16x96xbf16> to vector<16x32xbf16>
    %242 = vector.extract_strided_slice %239 {offsets = [0, 0], sizes = [16, 8], strides = [1, 1]} : vector<16x32xbf16> to vector<16x8xbf16>
    %243 = vector.extract_strided_slice %239 {offsets = [0, 8], sizes = [16, 8], strides = [1, 1]} : vector<16x32xbf16> to vector<16x8xbf16>
    %244 = vector.extract_strided_slice %239 {offsets = [0, 16], sizes = [16, 8], strides = [1, 1]} : vector<16x32xbf16> to vector<16x8xbf16>
    %245 = vector.extract_strided_slice %239 {offsets = [0, 24], sizes = [16, 8], strides = [1, 1]} : vector<16x32xbf16> to vector<16x8xbf16>
    %246 = tpu.concatenate %242, %242, %243, %243, %244, %244, %245, %245 in 1 : vector<16x8xbf16>, vector<16x8xbf16>, vector<16x8xbf16>, vector<16x8xbf16>, vector<16x8xbf16>, vector<16x8xbf16>, vector<16x8xbf16>, vector<16x8xbf16> -> vector<16x64xbf16>
    %247 = arith.mulf %246, %0 : vector<16x64xbf16>
    %248 = vector.extract_strided_slice %240 {offsets = [0, 0], sizes = [16, 8], strides = [1, 1]} : vector<16x32xbf16> to vector<16x8xbf16>
    %249 = tpu.concatenate %248, %248, %248, %248, %248, %248, %248, %248 in 1 : vector<16x8xbf16>, vector<16x8xbf16>, vector<16x8xbf16>, vector<16x8xbf16>, vector<16x8xbf16>, vector<16x8xbf16>, vector<16x8xbf16>, vector<16x8xbf16> -> vector<16x64xbf16>
    %250 = vector.extract_strided_slice %240 {offsets = [0, 8], sizes = [16, 8], strides = [1, 1]} : vector<16x32xbf16> to vector<16x8xbf16>
    %251 = tpu.concatenate %250, %250, %250, %250, %250, %250, %250, %250 in 1 : vector<16x8xbf16>, vector<16x8xbf16>, vector<16x8xbf16>, vector<16x8xbf16>, vector<16x8xbf16>, vector<16x8xbf16>, vector<16x8xbf16>, vector<16x8xbf16> -> vector<16x64xbf16>
    %252 = vector.extract_strided_slice %240 {offsets = [0, 16], sizes = [16, 8], strides = [1, 1]} : vector<16x32xbf16> to vector<16x8xbf16>
    %253 = tpu.concatenate %252, %252, %252, %252, %252, %252, %252, %252 in 1 : vector<16x8xbf16>, vector<16x8xbf16>, vector<16x8xbf16>, vector<16x8xbf16>, vector<16x8xbf16>, vector<16x8xbf16>, vector<16x8xbf16>, vector<16x8xbf16> -> vector<16x64xbf16>
    %254 = vector.extract_strided_slice %240 {offsets = [0, 24], sizes = [16, 8], strides = [1, 1]} : vector<16x32xbf16> to vector<16x8xbf16>
    %255 = tpu.concatenate %254, %254, %254, %254, %254, %254, %254, %254 in 1 : vector<16x8xbf16>, vector<16x8xbf16>, vector<16x8xbf16>, vector<16x8xbf16>, vector<16x8xbf16>, vector<16x8xbf16>, vector<16x8xbf16>, vector<16x8xbf16> -> vector<16x64xbf16>
    %256 = tpu.concatenate %249, %251, %253, %255 in 0 : vector<16x64xbf16>, vector<16x64xbf16>, vector<16x64xbf16>, vector<16x64xbf16> -> vector<64x64xbf16>
    %257 = arith.mulf %256, %1 : vector<64x64xbf16>
    %cst_89 = arith.constant dense<0.000000e+00> : vector<16x64xf32>
    %258 = tpu.matmul %247, %257, %cst_89 {dimension_numbers = #tpu.dot_dimension_numbers<[1], [0], [0], [1], [0, 0, 1, 1], [], []>} : vector<16x64xbf16>, vector<64x64xbf16>, vector<16x64xf32> -> vector<16x64xf32>
    %cst_90 = arith.constant 5.000000e-01 : f32
    %259 = vector.broadcast %cst_90 : f32 to vector<16x64xf32>
    %260 = arith.mulf %258, %259 : vector<16x64xf32>
    %c1_i32_91 = arith.constant 1 : i32
    %261 = vector.broadcast %c1_i32_91 : i32 to vector<1x64xi32>
    %262 = arith.addi %24, %261 : vector<1x64xi32>
    %c8_i32_92 = arith.constant 8 : i32
    %263 = vector.broadcast %c8_i32_92 : i32 to vector<1x64xi32>
    %264 = arith.cmpi slt, %262, %263 : vector<1x64xi32>
    %c63_i32_93 = arith.constant 63 : i32
    %265 = tpu.dynamic_rotate %260 by %c63_i32_93 dim 1 : vector<16x64xf32>, i32 -> vector<16x64xf32>
    %266 = vector.shape_cast %264 : vector<1x64xi1> to vector<1x64xi1>
    %267 = vector.broadcast %266 : vector<1x64xi1> to vector<16x64xi1>
    %268 = arith.select %267, %265, %260 : vector<16x64xi1>, vector<16x64xf32>
    %269 = arith.maximumf %260, %268 : vector<16x64xf32>
    %c1_i32_94 = arith.constant 1 : i32
    %270 = vector.broadcast %c1_i32_94 : i32 to vector<1x64xi32>
    %271 = arith.cmpi sge, %24, %270 : vector<1x64xi32>
    %c1_i32_95 = arith.constant 1 : i32
    %272 = tpu.dynamic_rotate %260 by %c1_i32_95 dim 1 : vector<16x64xf32>, i32 -> vector<16x64xf32>
    %273 = vector.shape_cast %271 : vector<1x64xi1> to vector<1x64xi1>
    %274 = vector.broadcast %273 : vector<1x64xi1> to vector<16x64xi1>
    %275 = arith.select %274, %272, %260 : vector<16x64xi1>, vector<16x64xf32>
    %276 = arith.maximumf %260, %275 : vector<16x64xf32>
    %c2_i32_96 = arith.constant 2 : i32
    %277 = vector.broadcast %c2_i32_96 : i32 to vector<1x64xi32>
    %278 = arith.addi %24, %277 : vector<1x64xi32>
    %c8_i32_97 = arith.constant 8 : i32
    %279 = vector.broadcast %c8_i32_97 : i32 to vector<1x64xi32>
    %280 = arith.cmpi slt, %278, %279 : vector<1x64xi32>
    %c62_i32_98 = arith.constant 62 : i32
    %281 = tpu.dynamic_rotate %269 by %c62_i32_98 dim 1 : vector<16x64xf32>, i32 -> vector<16x64xf32>
    %282 = vector.shape_cast %280 : vector<1x64xi1> to vector<1x64xi1>
    %283 = vector.broadcast %282 : vector<1x64xi1> to vector<16x64xi1>
    %284 = arith.select %283, %281, %269 : vector<16x64xi1>, vector<16x64xf32>
    %285 = arith.maximumf %269, %284 : vector<16x64xf32>
    %c2_i32_99 = arith.constant 2 : i32
    %286 = vector.broadcast %c2_i32_99 : i32 to vector<1x64xi32>
    %287 = arith.cmpi sge, %24, %286 : vector<1x64xi32>
    %c2_i32_100 = arith.constant 2 : i32
    %288 = tpu.dynamic_rotate %276 by %c2_i32_100 dim 1 : vector<16x64xf32>, i32 -> vector<16x64xf32>
    %289 = vector.shape_cast %287 : vector<1x64xi1> to vector<1x64xi1>
    %290 = vector.broadcast %289 : vector<1x64xi1> to vector<16x64xi1>
    %291 = arith.select %290, %288, %276 : vector<16x64xi1>, vector<16x64xf32>
    %292 = arith.maximumf %276, %291 : vector<16x64xf32>
    %c4_i32_101 = arith.constant 4 : i32
    %293 = vector.broadcast %c4_i32_101 : i32 to vector<1x64xi32>
    %294 = arith.addi %24, %293 : vector<1x64xi32>
    %c8_i32_102 = arith.constant 8 : i32
    %295 = vector.broadcast %c8_i32_102 : i32 to vector<1x64xi32>
    %296 = arith.cmpi slt, %294, %295 : vector<1x64xi32>
    %c60_i32_103 = arith.constant 60 : i32
    %297 = tpu.dynamic_rotate %285 by %c60_i32_103 dim 1 : vector<16x64xf32>, i32 -> vector<16x64xf32>
    %298 = vector.shape_cast %296 : vector<1x64xi1> to vector<1x64xi1>
    %299 = vector.broadcast %298 : vector<1x64xi1> to vector<16x64xi1>
    %300 = arith.select %299, %297, %285 : vector<16x64xi1>, vector<16x64xf32>
    %301 = arith.maximumf %285, %300 : vector<16x64xf32>
    %c4_i32_104 = arith.constant 4 : i32
    %302 = vector.broadcast %c4_i32_104 : i32 to vector<1x64xi32>
    %303 = arith.cmpi sge, %24, %302 : vector<1x64xi32>
    %c4_i32_105 = arith.constant 4 : i32
    %304 = tpu.dynamic_rotate %292 by %c4_i32_105 dim 1 : vector<16x64xf32>, i32 -> vector<16x64xf32>
    %305 = vector.shape_cast %303 : vector<1x64xi1> to vector<1x64xi1>
    %306 = vector.broadcast %305 : vector<1x64xi1> to vector<16x64xi1>
    %307 = arith.select %306, %304, %292 : vector<16x64xi1>, vector<16x64xf32>
    %308 = arith.maximumf %292, %307 : vector<16x64xf32>
    %309 = arith.maximumf %301, %308 : vector<16x64xf32>
    %310 = arith.subf %260, %309 : vector<16x64xf32>
    %311 = math.exp %310 : vector<16x64xf32>
    %cst_106 = arith.constant dense<0.000000e+00> : vector<16x64xf32>
    %312 = tpu.matmul %311, %2, %cst_106 {dimension_numbers = #tpu.dot_dimension_numbers<[1], [0], [0], [1], [0, 0, 1, 1], [], []>} : vector<16x64xf32>, vector<64x64xf32>, vector<16x64xf32> -> vector<16x64xf32>
    %313 = arith.divf %311, %312 : vector<16x64xf32>
    %314 = arith.truncf %313 : vector<16x64xf32> to vector<16x64xbf16>
    %315 = tpu.concatenate %314, %314 in 1 : vector<16x64xbf16>, vector<16x64xbf16> -> vector<16x128xbf16>
    %316 = arith.mulf %315, %3 : vector<16x128xbf16>
    %cst_107 = arith.constant dense<0.000000e+00> : vector<128x32xf32>
    %317 = tpu.matmul %4, %241, %cst_107 {dimension_numbers = #tpu.dot_dimension_numbers<[1], [0], [0], [1], [0, 0, 1, 1], [], []>} : vector<128x16xbf16>, vector<16x32xbf16>, vector<128x32xf32> -> vector<128x32xf32>
    %318 = arith.truncf %317 : vector<128x32xf32> to vector<128x32xbf16>
    %319 = arith.mulf %318, %5 : vector<128x32xbf16>
    %cst_108 = arith.constant dense<0.000000e+00> : vector<128x32xf32>
    %320 = tpu.matmul %319, %6, %cst_108 {dimension_numbers = #tpu.dot_dimension_numbers<[1], [0], [0], [1], [0, 0, 1, 1], [], []>} : vector<128x32xbf16>, vector<32x32xbf16>, vector<128x32xf32> -> vector<128x32xf32>
    %321 = arith.truncf %320 : vector<128x32xf32> to vector<128x32xbf16>
    %322 = arith.mulf %321, %7 : vector<128x32xbf16>
    %cst_109 = arith.constant dense<0.000000e+00> : vector<16x32xf32>
    %323 = tpu.matmul %316, %322, %cst_109 {dimension_numbers = #tpu.dot_dimension_numbers<[1], [0], [0], [1], [0, 0, 1, 1], [], []>} : vector<16x128xbf16>, vector<128x32xbf16>, vector<16x32xf32> -> vector<16x32xf32>
    %324 = arith.truncf %323 : vector<16x32xf32> to vector<16x32xbf16>
    %cst_110 = arith.constant dense<0.000000e+00> : vector<16x32xf32>
    %325 = tpu.matmul %324, %200, %cst_110 {dimension_numbers = #tpu.dot_dimension_numbers<[1], [0], [0], [1], [0, 0, 1, 1], [], []>} : vector<16x32xbf16>, vector<32x32xbf16>, vector<16x32xf32> -> vector<16x32xf32>
    %326 = vector.broadcast %207 : vector<1x32xf32> to vector<16x32xf32>
    %327 = arith.addf %325, %326 : vector<16x32xf32>
    %328 = arith.addf %327, %199 : vector<16x32xf32>
    %cst_111 = arith.constant dense<0.000000e+00> : vector<16xf32>
    %329 = vector.multi_reduction <add>, %328, %cst_111 [1] : vector<16x32xf32> to vector<16xf32>
    %330 = vector.shape_cast %329 : vector<16xf32> to vector<16x1xf32>
    %cst_112 = arith.constant 3.200000e+01 : f32
    %331 = vector.broadcast %cst_112 : f32 to vector<16x1xf32>
    %332 = arith.divf %330, %331 : vector<16x1xf32>
    %333 = vector.broadcast %332 : vector<16x1xf32> to vector<16x32xf32>
    %334 = arith.subf %328, %333 : vector<16x32xf32>
    %335 = arith.mulf %334, %334 : vector<16x32xf32>
    %cst_113 = arith.constant dense<0.000000e+00> : vector<16xf32>
    %336 = vector.multi_reduction <add>, %335, %cst_113 [1] : vector<16x32xf32> to vector<16xf32>
    %337 = vector.shape_cast %336 : vector<16xf32> to vector<16x1xf32>
    %cst_114 = arith.constant 3.200000e+01 : f32
    %338 = vector.broadcast %cst_114 : f32 to vector<16x1xf32>
    %339 = arith.divf %337, %338 : vector<16x1xf32>
    %340 = vector.broadcast %332 : vector<16x1xf32> to vector<16x32xf32>
    %341 = arith.subf %328, %340 : vector<16x32xf32>
    %cst_115 = arith.constant 9.99999974E-6 : f32
    %342 = vector.broadcast %cst_115 : f32 to vector<16x1xf32>
    %343 = arith.addf %339, %342 : vector<16x1xf32>
    %344 = math.rsqrt %343 : vector<16x1xf32>
    %345 = vector.broadcast %344 : vector<16x1xf32> to vector<16x32xf32>
    %346 = arith.mulf %341, %345 : vector<16x32xf32>
    %347 = vector.broadcast %208 : vector<1x32xf32> to vector<16x32xf32>
    %348 = arith.mulf %346, %347 : vector<16x32xf32>
    %349 = vector.broadcast %209 : vector<1x32xf32> to vector<16x32xf32>
    %350 = arith.addf %348, %349 : vector<16x32xf32>
    %351 = arith.truncf %350 : vector<16x32xf32> to vector<16x32xbf16>
    %cst_116 = arith.constant dense<0.000000e+00> : vector<16x128xf32>
    %352 = tpu.matmul %351, %203, %cst_116 {dimension_numbers = #tpu.dot_dimension_numbers<[1], [0], [0], [1], [0, 0, 1, 1], [], []>} : vector<16x32xbf16>, vector<32x128xbf16>, vector<16x128xf32> -> vector<16x128xf32>
    %353 = vector.broadcast %210 : vector<1x128xf32> to vector<16x128xf32>
    %354 = arith.addf %352, %353 : vector<16x128xf32>
    %cst_117 = arith.constant 1.702000e+00 : f32
    %355 = vector.broadcast %cst_117 : f32 to vector<16x128xf32>
    %356 = arith.mulf %355, %354 : vector<16x128xf32>
    %357 = arith.negf %356 : vector<16x128xf32>
    %358 = math.exp %357 : vector<16x128xf32>
    %cst_118 = arith.constant 1.000000e+00 : f32
    %359 = vector.broadcast %cst_118 : f32 to vector<16x128xf32>
    %360 = arith.addf %359, %358 : vector<16x128xf32>
    %361 = arith.divf %359, %360 : vector<16x128xf32>
    %362 = arith.mulf %354, %361 : vector<16x128xf32>
    %363 = arith.truncf %362 : vector<16x128xf32> to vector<16x128xbf16>
    %cst_119 = arith.constant dense<0.000000e+00> : vector<16x32xf32>
    %364 = tpu.matmul %363, %201, %cst_119 {dimension_numbers = #tpu.dot_dimension_numbers<[1], [0], [0], [1], [0, 0, 1, 1], [], []>} : vector<16x128xbf16>, vector<128x32xbf16>, vector<16x32xf32> -> vector<16x32xf32>
    %365 = vector.broadcast %211 : vector<1x32xf32> to vector<16x32xf32>
    %366 = arith.addf %364, %365 : vector<16x32xf32>
    %367 = arith.addf %366, %328 : vector<16x32xf32>
    %c0_120 = arith.constant 0 : index
    %c0_121 = arith.constant 0 : index
    %368 = vector.load %arg14[%c0_120, %c0_121] : memref<16x32xf32, #tpu.memory_space<vmem>>, vector<16x32xf32>
    tpu.vector_store %arg14[%c0_120, %c0_121], %367 {strides = array<i32>} : memref<16x32xf32, #tpu.memory_space<vmem>>, vector<16x32xf32>,
    return
  }
  func.func @transform_0(%arg0: i32) -> (i32, i32) {
    %c0_i32 = arith.constant 0 : i32
    %c0_i32_0 = arith.constant 0 : i32
    return %arg0, %c0_i32 : i32, i32
  }
  func.func @transform_1(%arg0: i32) -> (i32, i32) {
    %c0_i32 = arith.constant 0 : i32
    %c0_i32_0 = arith.constant 0 : i32
    %c0_i32_1 = arith.constant 0 : i32
    return %c0_i32, %c0_i32_0 : i32, i32
  }
  func.func @transform_2(%arg0: i32) -> (i32, i32) {
    %c0_i32 = arith.constant 0 : i32
    %c0_i32_0 = arith.constant 0 : i32
    %c0_i32_1 = arith.constant 0 : i32
    return %c0_i32, %c0_i32_0 : i32, i32
  }
  func.func @transform_3(%arg0: i32) -> (i32, i32) {
    %c0_i32 = arith.constant 0 : i32
    %c0_i32_0 = arith.constant 0 : i32
    %c0_i32_1 = arith.constant 0 : i32
    return %c0_i32, %c0_i32_0 : i32, i32
  }
  func.func @transform_4(%arg0: i32) -> (i32, i32) {
    %c0_i32 = arith.constant 0 : i32
    %c0_i32_0 = arith.constant 0 : i32
    %c0_i32_1 = arith.constant 0 : i32
    return %c0_i32, %c0_i32_0 : i32, i32
  }
  func.func @transform_5(%arg0: i32) -> (i32, i32) {
    %c0_i32 = arith.constant 0 : i32
    %c0_i32_0 = arith.constant 0 : i32
    %c0_i32_1 = arith.constant 0 : i32
    return %c0_i32, %c0_i32_0 : i32, i32
  }
  func.func @transform_6(%arg0: i32) -> (i32, i32) {
    %c0_i32 = arith.constant 0 : i32
    %c0_i32_0 = arith.constant 0 : i32
    %c0_i32_1 = arith.constant 0 : i32
    return %c0_i32, %c0_i32_0 : i32, i32
  }
  func.func @transform_7(%arg0: i32) -> (i32, i32) {
    %c0_i32 = arith.constant 0 : i32
    %c0_i32_0 = arith.constant 0 : i32
    %c0_i32_1 = arith.constant 0 : i32
    return %c0_i32, %c0_i32_0 : i32, i32
  }
  func.func @transform_8(%arg0: i32) -> (i32, i32) {
    %c0_i32 = arith.constant 0 : i32
    %c0_i32_0 = arith.constant 0 : i32
    %c0_i32_1 = arith.constant 0 : i32
    return %c0_i32, %c0_i32_0 : i32, i32
  }
  func.func @transform_9(%arg0: i32) -> (i32, i32) {
    %c0_i32 = arith.constant 0 : i32
    %c0_i32_0 = arith.constant 0 : i32
    %c0_i32_1 = arith.constant 0 : i32
    return %c0_i32, %c0_i32_0 : i32, i32
  }
  func.func @transform_10(%arg0: i32) -> (i32, i32) {
    %c0_i32 = arith.constant 0 : i32
    %c0_i32_0 = arith.constant 0 : i32
    %c0_i32_1 = arith.constant 0 : i32
    return %c0_i32, %c0_i32_0 : i32, i32
  }
  func.func @transform_11(%arg0: i32) -> (i32, i32) {
    %c0_i32 = arith.constant 0 : i32
    %c0_i32_0 = arith.constant 0 : i32
    %c0_i32_1 = arith.constant 0 : i32
    return %c0_i32, %c0_i32_0 : i32, i32
  }
  func.func @transform_12(%arg0: i32) -> (i32, i32) {
    %c0_i32 = arith.constant 0 : i32
    %c0_i32_0 = arith.constant 0 : i32
    %c0_i32_1 = arith.constant 0 : i32
    return %c0_i32, %c0_i32_0 : i32, i32
  }
  func.func @transform_13(%arg0: i32) -> (i32, i32) {
    %c0_i32 = arith.constant 0 : i32
    %c0_i32_0 = arith.constant 0 : i32
    return %arg0, %c0_i32 : i32, i32
  }
}

</mosaic_0001>

<llo_original>
// kernel: tpu_custom_call.1
$region0: #{tpu_custom_call.1}
  #allocation0 [shape = 'u32[]', space=smem, size = 0x4, offset = 0x4, fixed_abs, tag = 'smem constant byte address 0x4 - core index']
  #allocation1 [shape = 'u32[144,128]{1,0:T(1,128)}', space=vmem, size = 0x12000, scoped, tag = 'internal scratch']
  %s0 = inlined_call_operand.vmem [shape: f32[16,128], index: 0, kind: input, shape index: {}]
  %s1 = inlined_call_operand.vmem [shape: bf16[16,64], index: 1, kind: input, shape index: {}]
  %s2 = inlined_call_operand.vmem [shape: bf16[64,64], index: 2, kind: input, shape index: {}]
  %s3 = inlined_call_operand.vmem [shape: f32[64,64], index: 3, kind: input, shape index: {}]
  %s4 = inlined_call_operand.vmem [shape: bf16[16,128], index: 4, kind: input, shape index: {}]
  %s5 = inlined_call_operand.vmem [shape: bf16[128,16], index: 5, kind: input, shape index: {}]
  %s6 = inlined_call_operand.vmem [shape: bf16[128,32], index: 6, kind: input, shape index: {}]
  %s7 = inlined_call_operand.vmem [shape: bf16[32,32], index: 7, kind: input, shape index: {}]
  %s8 = inlined_call_operand.vmem [shape: bf16[128,32], index: 8, kind: input, shape index: {}]
  %s9 = inlined_call_operand.vmem [shape: bf16[448,32], index: 9, kind: input, shape index: {}]
  %s10 = inlined_call_operand.vmem [shape: bf16[64,96], index: 10, kind: input, shape index: {}]
  %s11 = inlined_call_operand.vmem [shape: bf16[64,128], index: 11, kind: input, shape index: {}]
  %s12 = inlined_call_operand.vmem [shape: f32[24,128], index: 12, kind: input, shape index: {}]
  %s13 = inlined_call_operand.hbm [shape: f32[16,32], index: 13, kind: output, shape index: {}]
  %s14 = sld [smem:[#allocation0]]
  $region62: #{tpu_custom_call.1} parent=0
    _
  %s16 = ssub.s32 1, %s14
  %s17 = scalar_select 0, %s16, %s14
  $region1: #{tpu_custom_call.1} parent=0
    #allocation2 [shape = 'u8[8192]{0}', space=vmem, size = 0x2000, scoped, tag = 'output window, operand 0, single buffered']
    #allocation3 [shape = 's32[1]{0}', space=sflag, size = 0x4, scoped, tag = 'scoped memory for tpu_custom_call.1']
    %18 = vsyncpa [#allocation3], 0
    // Predicated region
    $region2: #{tpu_custom_call.1} parent=1 // pred_check
      _
    $region3: #{tpu_custom_call.1} parent=1 // pred_check_branch
      %20 = sbr.rel (0) target = $region5
    $region4: #{tpu_custom_call.1} parent=1 // pred_region
      _
    $region5: #{tpu_custom_call.1} parent=1 // pred_fallthru
      _
    // Predicated region
    $region6: #{tpu_custom_call.1} parent=1 // pred_check
      _
    $region7: #{tpu_custom_call.1} parent=1 // pred_check_branch
      %22 = sbr.rel (0) target = $region9
    $region8: #{tpu_custom_call.1} parent=1 // pred_region
      _
    $region9: #{tpu_custom_call.1} parent=1 // pred_fallthru
      _
    // Predicated region
    $region10: #{tpu_custom_call.1} parent=1 // pred_check
      _
    $region11: #{tpu_custom_call.1} parent=1 // pred_check_branch
      %24 = sbr.rel (0) target = $region13
    $region12: #{tpu_custom_call.1} parent=1 // pred_region
      _
    $region13: #{tpu_custom_call.1} parent=1 // pred_fallthru
      _
    // Predicated region
    $region14: #{tpu_custom_call.1} parent=1 // pred_check
      _
    $region15: #{tpu_custom_call.1} parent=1 // pred_check_branch
      %26 = sbr.rel (0) target = $region17
    $region16: #{tpu_custom_call.1} parent=1 // pred_region
      _
    $region17: #{tpu_custom_call.1} parent=1 // pred_fallthru
      _
    // Predicated region
    $region18: #{tpu_custom_call.1} parent=1 // pred_check
      _
    $region19: #{tpu_custom_call.1} parent=1 // pred_check_branch
      %28 = sbr.rel (0) target = $region21
    $region20: #{tpu_custom_call.1} parent=1 // pred_region
      _
    $region21: #{tpu_custom_call.1} parent=1 // pred_fallthru
      _
    // Predicated region
    $region22: #{tpu_custom_call.1} parent=1 // pred_check
      _
    $region23: #{tpu_custom_call.1} parent=1 // pred_check_branch
      %30 = sbr.rel (0) target = $region25
    $region24: #{tpu_custom_call.1} parent=1 // pred_region
      _
    $region25: #{tpu_custom_call.1} parent=1 // pred_fallthru
      _
    // Predicated region
    $region26: #{tpu_custom_call.1} parent=1 // pred_check
      _
    $region27: #{tpu_custom_call.1} parent=1 // pred_check_branch
      %32 = sbr.rel (0) target = $region29
    $region28: #{tpu_custom_call.1} parent=1 // pred_region
      _
    $region29: #{tpu_custom_call.1} parent=1 // pred_fallthru
      _
    // Predicated region
    $region30: #{tpu_custom_call.1} parent=1 // pred_check
      _
    $region31: #{tpu_custom_call.1} parent=1 // pred_check_branch
      %34 = sbr.rel (0) target = $region33
    $region32: #{tpu_custom_call.1} parent=1 // pred_region
      _
    $region33: #{tpu_custom_call.1} parent=1 // pred_fallthru
      _
    // Predicated region
    $region34: #{tpu_custom_call.1} parent=1 // pred_check
      _
    $region35: #{tpu_custom_call.1} parent=1 // pred_check_branch
      %36 = sbr.rel (0) target = $region37
    $region36: #{tpu_custom_call.1} parent=1 // pred_region
      _
    $region37: #{tpu_custom_call.1} parent=1 // pred_fallthru
      _
    // Predicated region
    $region38: #{tpu_custom_call.1} parent=1 // pred_check
      _
    $region39: #{tpu_custom_call.1} parent=1 // pred_check_branch
      %38 = sbr.rel (0) target = $region41
    $region40: #{tpu_custom_call.1} parent=1 // pred_region
      _
    $region41: #{tpu_custom_call.1} parent=1 // pred_fallthru
      _
    // Predicated region
    $region42: #{tpu_custom_call.1} parent=1 // pred_check
      _
    $region43: #{tpu_custom_call.1} parent=1 // pred_check_branch
      %40 = sbr.rel (0) target = $region45
    $region44: #{tpu_custom_call.1} parent=1 // pred_region
      _
    $region45: #{tpu_custom_call.1} parent=1 // pred_fallthru
      _
    // Predicated region
    $region46: #{tpu_custom_call.1} parent=1 // pred_check
      _
    $region47: #{tpu_custom_call.1} parent=1 // pred_check_branch
      %42 = sbr.rel (0) target = $region49
    $region48: #{tpu_custom_call.1} parent=1 // pred_region
      _
    $region49: #{tpu_custom_call.1} parent=1 // pred_fallthru
      _
    // Predicated region
    $region50: #{tpu_custom_call.1} parent=1 // pred_check
      _
    $region51: #{tpu_custom_call.1} parent=1 // pred_check_branch
      %44 = sbr.rel (0) target = $region53
    $region52: #{tpu_custom_call.1} parent=1 // pred_region
      _
    $region53: #{tpu_custom_call.1} parent=1 // pred_fallthru
      _
    %v46 = vld [vmem:[%s1] sm:$0xf]
    %v47 = vld [vmem:[%s1 + $0x4] sm:$0xf]
    %v48 = vld [vmem:[%s2] sm:$0xf]
    %v49 = vld [vmem:[%s2 + $0x4] sm:$0xf]
    %v50 = vld [vmem:[%s2 + $0x8] sm:$0xf]
    %v51 = vld [vmem:[%s2 + $0xc] sm:$0xf]
    %v52 = vld [vmem:[%s2 + $0x10] sm:$0xf]
    %v53 = vld [vmem:[%s2 + $0x14] sm:$0xf]
    %v54 = vld [vmem:[%s2 + $0x18] sm:$0xf]
    %v55 = vld [vmem:[%s2 + $0x1c] sm:$0xf]
    %v56 = vld [vmem:[%s3] sm:$0xff]
    %v57 = vld [vmem:[%s3 + $0x8] sm:$0xff]
    %v58 = vld [vmem:[%s3 + $0x10] sm:$0xff]
    %v59 = vld [vmem:[%s3 + $0x18] sm:$0xff]
    %v60 = vld [vmem:[%s3 + $0x20] sm:$0xff]
    %v61 = vld [vmem:[%s3 + $0x28] sm:$0xff]
    %v62 = vld [vmem:[%s3 + $0x30] sm:$0xff]
    %v63 = vld [vmem:[%s3 + $0x38] sm:$0xff]
    %v64 = vld [vmem:[%s4] sm:$0xf]
    %v65 = vld [vmem:[%s4 + $0x4] sm:$0xf]
    %v66 = vld [vmem:[%s5] sm:$0xf]
    %v67 = vld [vmem:[%s5 + $0x4] sm:$0xf]
    %v68 = vld [vmem:[%s5 + $0x8] sm:$0xf]
    %v69 = vld [vmem:[%s5 + $0xc] sm:$0xf]
    %v70 = vld [vmem:[%s5 + $0x10] sm:$0xf]
    %v71 = vld [vmem:[%s5 + $0x14] sm:$0xf]
    %v72 = vld [vmem:[%s5 + $0x18] sm:$0xf]
    %v73 = vld [vmem:[%s5 + $0x1c] sm:$0xf]
    %v74 = vld [vmem:[%s5 + $0x20] sm:$0xf]
    %v75 = vld [vmem:[%s5 + $0x24] sm:$0xf]
    %v76 = vld [vmem:[%s5 + $0x28] sm:$0xf]
    %v77 = vld [vmem:[%s5 + $0x2c] sm:$0xf]
    %v78 = vld [vmem:[%s5 + $0x30] sm:$0xf]
    %v79 = vld [vmem:[%s5 + $0x34] sm:$0xf]
    %v80 = vld [vmem:[%s5 + $0x38] sm:$0xf]
    %v81 = vld [vmem:[%s5 + $0x3c] sm:$0xf]
    %v82 = vld [vmem:[%s6] sm:$0xf]
    %v83 = vld [vmem:[%s6 + $0x4] sm:$0xf]
    %v84 = vld [vmem:[%s6 + $0x8] sm:$0xf]
    %v85 = vld [vmem:[%s6 + $0xc] sm:$0xf]
    %v86 = vld [vmem:[%s6 + $0x10] sm:$0xf]
    %v87 = vld [vmem:[%s6 + $0x14] sm:$0xf]
    %v88 = vld [vmem:[%s6 + $0x18] sm:$0xf]
    %v89 = vld [vmem:[%s6 + $0x1c] sm:$0xf]
    %v90 = vld [vmem:[%s6 + $0x20] sm:$0xf]
    %v91 = vld [vmem:[%s6 + $0x24] sm:$0xf]
    %v92 = vld [vmem:[%s6 + $0x28] sm:$0xf]
    %v93 = vld [vmem:[%s6 + $0x2c] sm:$0xf]
    %v94 = vld [vmem:[%s6 + $0x30] sm:$0xf]
    %v95 = vld [vmem:[%s6 + $0x34] sm:$0xf]
    %v96 = vld [vmem:[%s6 + $0x38] sm:$0xf]
    %v97 = vld [vmem:[%s6 + $0x3c] sm:$0xf]
    %v98 = vld [vmem:[%s7] sm:$0xf]
    %v99 = vld [vmem:[%s7 + $0x4] sm:$0xf]
    %v100 = vld [vmem:[%s7 + $0x8] sm:$0xf]
    %v101 = vld [vmem:[%s7 + $0xc] sm:$0xf]
    %v102 = vld [vmem:[%s8] sm:$0xf]
    %v103 = vld [vmem:[%s8 + $0x4] sm:$0xf]
    %v104 = vld [vmem:[%s8 + $0x8] sm:$0xf]
    %v105 = vld [vmem:[%s8 + $0xc] sm:$0xf]
    %v106 = vld [vmem:[%s8 + $0x10] sm:$0xf]
    %v107 = vld [vmem:[%s8 + $0x14] sm:$0xf]
    %v108 = vld [vmem:[%s8 + $0x18] sm:$0xf]
    %v109 = vld [vmem:[%s8 + $0x1c] sm:$0xf]
    %v110 = vld [vmem:[%s8 + $0x20] sm:$0xf]
    %v111 = vld [vmem:[%s8 + $0x24] sm:$0xf]
    %v112 = vld [vmem:[%s8 + $0x28] sm:$0xf]
    %v113 = vld [vmem:[%s8 + $0x2c] sm:$0xf]
    %v114 = vld [vmem:[%s8 + $0x30] sm:$0xf]
    %v115 = vld [vmem:[%s8 + $0x34] sm:$0xf]
    %v116 = vld [vmem:[%s8 + $0x38] sm:$0xf]
    %v117 = vld [vmem:[%s8 + $0x3c] sm:$0xf]
    %v118 = vlaneseq
    %v119 = vand.u32 %v118, 127
    %vm120 = vcmp.lt.s32.totalorder %v119, 0
    %v121 = vsub.s32 0, %v119
    %v122 = vsel %vm120, %v121, %v119
    %v123 = vshrl.u32 %v122, 3
    %v124 = vand.u32 %v122, 7
    %v125 = vsub.s32 0, %v124
    %v126 = vsel %vm120, %v125, %v124
    %vm127 = vcmp.ne.s32.totalorder %v126, 0
    %vm128 = vcmp.lt.s32.totalorder %v126, 0
    %vm129 = vmand %vm128, %vm127
    %v130 = vadd.s32 %v126, 8
    %v131 = vsel %vm129, %v130, %v126
    %v132 = vld [vmem:[%s9] sm:$0xf]
    %v133 = vld [vmem:[%s9 + $0x4] sm:$0xf]
    %v134 = vld [vmem:[%s9 + $0x8] sm:$0xf]
    %v135 = vld [vmem:[%s9 + $0xc] sm:$0xf]
    %v136 = vld [vmem:[%s9 + $0x10] sm:$0xf]
    %v137 = vld [vmem:[%s9 + $0x14] sm:$0xf]
    %v138 = vld [vmem:[%s9 + $0x18] sm:$0xf]
    %v139 = vld [vmem:[%s9 + $0x1c] sm:$0xf]
    %v140 = vld [vmem:[%s9 + $0x20] sm:$0xf]
    %v141 = vld [vmem:[%s9 + $0x24] sm:$0xf]
    %v142 = vld [vmem:[%s9 + $0x28] sm:$0xf]
    %v143 = vld [vmem:[%s9 + $0x2c] sm:$0xf]
    %v144 = vld [vmem:[%s9 + $0x30] sm:$0xf]
    %v145 = vld [vmem:[%s9 + $0x34] sm:$0xf]
    %v146 = vld [vmem:[%s9 + $0x38] sm:$0xf]
    %v147 = vld [vmem:[%s9 + $0x3c] sm:$0xf]
    %v148 = vld [vmem:[%s0] sm:$0xff]
    %v149 = vld [vmem:[%s0 + $0x8] sm:$0xff]
    %v150 = vpack.c.bf16 %v149, %v148
    %v151 = vld [vmem:[%s12] sm:$0x1]
    %v152 = vlaneseq
    %v153 = vshrl.u32 %v152, 7
    %v154 = vsub.s32 0, %v153
    %v155 = vrot.slane %v151, %v154
    %v172 = vunpack.c.l.b16 %v132
    %v173 = vunpack.c.l.b16 %v133
    %v174 = vunpack.c.l.b16 %v134
    %v175 = vunpack.c.l.b16 %v135
    %v176 = vunpack.c.l.b16 %v136
    %v177 = vunpack.c.l.b16 %v137
    %v178 = vunpack.c.l.b16 %v138
    %v179 = vunpack.c.l.b16 %v139
    %v180 = vunpack.c.l.b16 %v140
    %v181 = vunpack.c.l.b16 %v141
    %v182 = vunpack.c.l.b16 %v142
    %v183 = vunpack.c.l.b16 %v143
    %v184 = vunpack.c.l.b16 %v144
    %v185 = vunpack.c.l.b16 %v145
    %v186 = vunpack.c.l.b16 %v146
    %v187 = vunpack.c.l.b16 %v147
    %v188 = vpack.c.b16 %v173, %v172
    %v189 = vpack.c.b16 %v175, %v174
    %v190 = vpack.c.b16 %v177, %v176
    %v191 = vpack.c.b16 %v179, %v178
    %v192 = vpack.c.b16 %v181, %v180
    %v193 = vpack.c.b16 %v183, %v182
    %v194 = vpack.c.b16 %v185, %v184
    %v195 = vpack.c.b16 %v187, %v186
    %204 = vmatprep.subr.bf16.mxu0 0
    %205 = vmatpush1.bf16.msra.mxu0 %v188
    %206 = vmatprep.subr.bf16.mxu0 0
    %207 = vmatpush1.bf16.msra.mxu0 %v189
    %208 = vmatprep.subr.bf16.mxu0 0
    %209 = vmatpush1.bf16.msra.mxu0 %v190
    %210 = vmatprep.subr.bf16.mxu0 0
    %211 = vmatpush1.bf16.msra.mxu0 %v191
    %212 = vmatprep.subr.bf16.mxu0 0
    %213 = vmatpush1.bf16.msra.mxu0 %v192
    %214 = vmatprep.subr.bf16.mxu0 0
    %215 = vmatpush1.bf16.msra.mxu0 %v193
    %216 = vmatprep.subr.bf16.mxu0 0
    %217 = vmatpush1.bf16.msra.mxu0 %v194
    %218 = vmatprep.subr.bf16.mxu0 0
    %219 = vmatpush1.bf16.msra.mxu0 %v195
    %220 = vmatprep.subr.bf16.mxu0 0
    %221 = vmatpush1.bf16.msra.mxu0 0
    %222 = vmatprep.subr.bf16.mxu0 0
    %223 = vmatpush1.bf16.msra.mxu0 0
    %224 = vmatprep.subr.bf16.mxu0 0
    %225 = vmatpush1.bf16.msra.mxu0 0
    %226 = vmatprep.subr.bf16.mxu0 0
    %227 = vmatpush1.bf16.msra.mxu0 0
    %228 = vmatprep.subr.bf16.mxu0 0
    %229 = vmatpush1.bf16.msra.mxu0 0
    %230 = vmatprep.subr.bf16.mxu0 0
    %231 = vmatpush1.bf16.msra.mxu0 0
    %232 = vmatprep.subr.bf16.mxu0 0
    %233 = vmatpush1.bf16.msra.mxu0 0
    %234 = vmatprep.subr.bf16.mxu0 0
    %235 = vmatpush1.bf16.msra.mxu0 0
    %236 = vmatprep.mubr.bf16.mxu0 0
    %237 = vmatmul.mubr.bf16.gmra.mrb[0].mxu0 %v150
    %v238 = vpop.f32.mrb[0].mxu0
    %v239 = vadd.f32 %v155, %v238
    %v240 = vpop.f32.mrb[0].mxu0
    %v241 = vpop.f32.mrb[0].mxu0
    %v242 = vadd.f32 %v155, %v241
    %v243 = vpop.f32.mrb[0].mxu0
    %244 = vdwg.mxu0
    %v245 = vld [vmem:[%s9 + $0x40] sm:$0xf]
    %v246 = vld [vmem:[%s9 + $0x44] sm:$0xf]
    %v247 = vld [vmem:[%s9 + $0x48] sm:$0xf]
    %v248 = vld [vmem:[%s9 + $0x4c] sm:$0xf]
    %v249 = vld [vmem:[%s9 + $0x50] sm:$0xf]
    %v250 = vld [vmem:[%s9 + $0x54] sm:$0xf]
    %v251 = vld [vmem:[%s9 + $0x58] sm:$0xf]
    %v252 = vld [vmem:[%s9 + $0x5c] sm:$0xf]
    %v253 = vld [vmem:[%s9 + $0x60] sm:$0xf]
    %v254 = vld [vmem:[%s9 + $0x64] sm:$0xf]
    %v255 = vld [vmem:[%s9 + $0x68] sm:$0xf]
    %v256 = vld [vmem:[%s9 + $0x6c] sm:$0xf]
    %v257 = vld [vmem:[%s9 + $0x70] sm:$0xf]
    %v258 = vld [vmem:[%s9 + $0x74] sm:$0xf]
    %v259 = vld [vmem:[%s9 + $0x78] sm:$0xf]
    %v260 = vld [vmem:[%s9 + $0x7c] sm:$0xf]
    %v261 = vld [vmem:[%s9 + $0x80] sm:$0xf]
    %v262 = vld [vmem:[%s9 + $0x84] sm:$0xf]
    %v263 = vld [vmem:[%s9 + $0x88] sm:$0xf]
    %v264 = vld [vmem:[%s9 + $0x8c] sm:$0xf]
    %v265 = vld [vmem:[%s10] sm:$0xf]
    %v266 = vld [vmem:[%s10 + $0x4] sm:$0xf]
    %v267 = vld [vmem:[%s10 + $0x8] sm:$0xf]
    %v268 = vld [vmem:[%s10 + $0xc] sm:$0xf]
    %v269 = vld [vmem:[%s11] sm:$0xf]
    %v270 = vld [vmem:[%s11 + $0x4] sm:$0xf]
    %v271 = vld [vmem:[%s11 + $0x8] sm:$0xf]
    %v272 = vld [vmem:[%s11 + $0xc] sm:$0xf]
    %v273 = vld [vmem:[%s12 + $0x8] sm:$0x1]
    %v274 = vld [vmem:[%s12 + $0x9] sm:$0x1]
    %v275 = vld [vmem:[%s12 + $0xa] sm:$0x1]
    %v276 = vld [vmem:[%s12 + $0xb] sm:$0x1]
    %v277 = vld [vmem:[%s12 + $0xc] sm:$0x1]
    %v278 = vld [vmem:[%s12 + $0xd] sm:$0x1]
    %v279 = vld [vmem:[%s12 + $0xe] sm:$0x1]
    %v280 = vld [vmem:[%s12 + $0xf] sm:$0x1]
    %vm281 = vcmask 261120
    %v282 = vsel %vm281, %v239, 0.0
    %283 = vadd.xlane.f32.xlu0 %v282
    %v284 = vpop.xlane.xlu0 %283
    %v285 = vsel %vm281, %v242, 0.0
    %286 = vadd.xlane.f32.xlu0 %v285
    %v287 = vpop.xlane.xlu0 %286
    %v288 = vrcp.pop 32.0
    %v289 = vmul.f32 %v284, %v288
    %v290 = vmul.f32 %v287, %v288
    %v291 = vsub.f32 %v239, %v289
    %v292 = vsub.f32 %v242, %v290
    %v293 = vmul.f32 %v291, %v291
    %v294 = vmul.f32 %v292, %v292
    %v295 = vsel %vm281, %v293, 0.0
    %296 = vadd.xlane.f32.xlu0 %v295
    %v297 = vpop.xlane.xlu0 %296
    %v298 = vsel %vm281, %v294, 0.0
    %299 = vadd.xlane.f32.xlu0 %v298
    %v300 = vpop.xlane.xlu0 %299
    %v301 = vmul.f32 %v297, %v288
    %v302 = vmul.f32 %v300, %v288
    %v303 = vadd.f32 %v301, 1e-05
    %v304 = vadd.f32 %v302, 1e-05
    %v305 = vrsqrt.pop %v303
    %v306 = vrsqrt.pop %v304
    %v307 = vmul.f32 %v291, %v305
    %v308 = vmul.f32 %v292, %v306
    %v309 = vlaneseq
    %v310 = vshrl.u32 %v309, 7
    %v311 = vsub.s32 0, %v310
    %v312 = vrot.slane %v273, %v311
    %v313 = vmul.f32 %v307, %v312
    %v314 = vmul.f32 %v308, %v312
    %v315 = vlaneseq
    %v316 = vshrl.u32 %v315, 7
    %v317 = vsub.s32 0, %v316
    %v318 = vrot.slane %v274, %v317
    %v319 = vadd.f32 %v313, %v318
    %v320 = vadd.f32 %v314, %v318
    %v321 = vpack.c.bf16 %v320, %v319
    %v322 = vlaneseq
    %v323 = vshrl.u32 %v322, 7
    %v324 = vsub.s32 0, %v323
    %v325 = vrot.slane %v275, %v324
    %v330 = vunpack.c.l.b16 %v265
    %v331 = vunpack.c.l.b16 %v266
    %v332 = vunpack.c.l.b16 %v267
    %v333 = vunpack.c.l.b16 %v268
    %v334 = vpack.c.b16 %v331, %v330
    %v335 = vpack.c.b16 %v333, %v332
    %v339 = vsel %vm281, %v321, 0
    %341 = vmatprep.subr.bf16.mxu0 0
    %342 = vmatpush1.bf16.msra.mxu0 %v334
    %343 = vmatprep.subr.bf16.mxu0 0
    %344 = vmatpush1.bf16.msra.mxu0 %v335
    %345 = vmatprep.subr.bf16.mxu0 0
    %346 = vmatpush1.bf16.msra.mxu0 0
    %347 = vmatprep.subr.bf16.mxu0 0
    %348 = vmatpush1.bf16.msra.mxu0 0
    %349 = vmatprep.subr.bf16.mxu0 0
    %350 = vmatpush1.bf16.msra.mxu0 0
    %351 = vmatprep.subr.bf16.mxu0 0
    %352 = vmatpush1.bf16.msra.mxu0 0
    %353 = vmatprep.subr.bf16.mxu0 0
    %354 = vmatpush1.bf16.msra.mxu0 0
    %355 = vmatprep.subr.bf16.mxu0 0
    %356 = vmatpush1.bf16.msra.mxu0 0
    %357 = vmatprep.subr.bf16.mxu0 0
    %358 = vmatpush1.bf16.msra.mxu0 0
    %359 = vmatprep.subr.bf16.mxu0 0
    %360 = vmatpush1.bf16.msra.mxu0 0
    %361 = vmatprep.subr.bf16.mxu0 0
    %362 = vmatpush1.bf16.msra.mxu0 0
    %363 = vmatprep.subr.bf16.mxu0 0
    %364 = vmatpush1.bf16.msra.mxu0 0
    %365 = vmatprep.subr.bf16.mxu0 0
    %366 = vmatpush1.bf16.msra.mxu0 0
    %367 = vmatprep.subr.bf16.mxu0 0
    %368 = vmatpush1.bf16.msra.mxu0 0
    %369 = vmatprep.subr.bf16.mxu0 0
    %370 = vmatpush1.bf16.msra.mxu0 0
    %371 = vmatprep.subr.bf16.mxu0 0
    %372 = vmatpush1.bf16.msra.mxu0 0
    %373 = vmatprep.mubr.bf16.mxu0 0
    %374 = vmatmul.mubr.bf16.gmra.mrb[0].mxu0 %v339
    %v375 = vpop.f32.mrb[0].mxu0
    %v376 = vadd.f32 %v325, %v375
    %v377 = vpop.f32.mrb[0].mxu0
    %v378 = vpop.f32.mrb[0].mxu0
    %v379 = vadd.f32 %v325, %v378
    %v380 = vpop.f32.mrb[0].mxu0
    %381 = vdwg.mxu0
    %v382 = vpack.c.bf16 %v379, %v376
    %384 = vrot.lane.b32.xlu0 %v382, 8
    %v385 = vpop.permute.xlu0 %384
    %386 = vrot.lane.b32.xlu0 %v382, 16
    %v387 = vpop.permute.xlu0 %386
    %388 = vrot.lane.b32.xlu0 %v382, 24
    %v389 = vpop.permute.xlu0 %388
    %390 = vrot.lane.b32.xlu0 %v382, 32
    %v391 = vpop.permute.xlu0 %390
    %vm392 = vcmask 64512
    %v395 = vsel %vm392, %v382, %v385
    %vm396 = vcmask 130048
    %v397 = vsel %vm396, %v395, %v385
    %vm398 = vcmask 195584
    %v400 = vsel %vm398, %v397, %v387
    %v401 = vsel %vm281, %v400, %v387
    %vm402 = vcmask 326656
    %v404 = vsel %vm402, %v401, %v389
    %vm405 = vcmask 392192
    %v406 = vsel %vm405, %v404, %v389
    %vm407 = vcmask 457728
    %v409 = vsel %vm407, %v406, %v391
    %v413 = vunpack.c.l.b16 %v46
    %v414 = vunpack.c.l.b16 %v47
    %v415 = vpack.c.b16 %v414, %v413
    %v417 = vmul.bf16 %v409, %v415
    %418 = vrot.lane.b32.xlu0 %v382, 96
    %v419 = vpop.permute.xlu0 %418
    %420 = vrot.lane.b32.xlu0 %v382, 104
    %v421 = vpop.permute.xlu0 %420
    %422 = vrot.lane.b32.xlu0 %v382, 112
    %v423 = vpop.permute.xlu0 %422
    %424 = vrot.lane.b32.xlu0 %v382, 120
    %v425 = vpop.permute.xlu0 %424
    %v428 = vsel %vm392, %v419, %v421
    %v430 = vsel %vm396, %v428, %v423
    %v432 = vsel %vm398, %v430, %v425
    %v433 = vsel %vm281, %v432, %v382
    %v434 = vsel %vm402, %v433, %v385
    %v435 = vsel %vm405, %v434, %v387
    %v436 = vsel %vm407, %v435, %v389
    %438 = vrot.lane.b32.xlu0 %v382, 88
    %v439 = vpop.permute.xlu0 %438
    %v441 = vsel %vm392, %v439, %v419
    %v442 = vsel %vm396, %v441, %v421
    %v443 = vsel %vm398, %v442, %v423
    %v444 = vsel %vm281, %v443, %v425
    %v445 = vsel %vm402, %v444, %v382
    %v446 = vsel %vm405, %v445, %v385
    %v447 = vsel %vm407, %v446, %v387
    %449 = vrot.lane.b32.xlu0 %v382, 80
    %v450 = vpop.permute.xlu0 %449
    %v452 = vsel %vm392, %v450, %v439
    %v453 = vsel %vm396, %v452, %v419
    %v454 = vsel %vm398, %v453, %v421
    %v455 = vsel %vm281, %v454, %v423
    %v456 = vsel %vm402, %v455, %v425
    %v457 = vsel %vm405, %v456, %v382
    %v458 = vsel %vm407, %v457, %v385
    %460 = vrot.lane.b32.xlu0 %v382, 72
    %v461 = vpop.permute.xlu0 %460
    %v463 = vsel %vm392, %v461, %v450
    %v464 = vsel %vm396, %v463, %v439
    %v465 = vsel %vm398, %v464, %v419
    %v466 = vsel %vm281, %v465, %v421
    %v467 = vsel %vm402, %v466, %v423
    %v468 = vsel %vm405, %v467, %v425
    %v469 = vsel %vm407, %v468, %v382
    %v479 = vunpack.c.l.b16 %v48
    %v480 = vunpack.c.l.b16 %v49
    %v481 = vunpack.c.l.b16 %v50
    %v482 = vunpack.c.l.b16 %v51
    %v483 = vunpack.c.l.b16 %v52
    %v484 = vunpack.c.l.b16 %v53
    %v485 = vunpack.c.l.b16 %v54
    %v486 = vunpack.c.l.b16 %v55
    %v487 = vpack.c.b16 %v480, %v479
    %v488 = vpack.c.b16 %v482, %v481
    %v489 = vpack.c.b16 %v484, %v483
    %v490 = vpack.c.b16 %v486, %v485
    %v495 = vmul.bf16 %v436, %v487
    %v496 = vmul.bf16 %v447, %v488
    %v497 = vmul.bf16 %v458, %v489
    %v498 = vmul.bf16 %v469, %v490
    %vm499 = vcmask 523264
    %v501 = vsel %vm499, %v417, 0
    %503 = vmatprep.subr.bf16.mxu0 0
    %504 = vmatpush1.bf16.msra.mxu0 %v495
    %505 = vmatprep.subr.bf16.mxu0 0
    %506 = vmatpush1.bf16.msra.mxu0 %v496
    %507 = vmatprep.subr.bf16.mxu0 0
    %508 = vmatpush1.bf16.msra.mxu0 %v497
    %509 = vmatprep.subr.bf16.mxu0 0
    %510 = vmatpush1.bf16.msra.mxu0 %v498
    %511 = vmatprep.subr.bf16.mxu0 0
    %512 = vmatpush1.bf16.msra.mxu0 0
    %513 = vmatprep.subr.bf16.mxu0 0
    %514 = vmatpush1.bf16.msra.mxu0 0
    %515 = vmatprep.subr.bf16.mxu0 0
    %516 = vmatpush1.bf16.msra.mxu0 0
    %517 = vmatprep.subr.bf16.mxu0 0
    %518 = vmatpush1.bf16.msra.mxu0 0
    %519 = vmatprep.subr.bf16.mxu0 0
    %520 = vmatpush1.bf16.msra.mxu0 0
    %521 = vmatprep.subr.bf16.mxu0 0
    %522 = vmatpush1.bf16.msra.mxu0 0
    %523 = vmatprep.subr.bf16.mxu0 0
    %524 = vmatpush1.bf16.msra.mxu0 0
    %525 = vmatprep.subr.bf16.mxu0 0
    %526 = vmatpush1.bf16.msra.mxu0 0
    %527 = vmatprep.subr.bf16.mxu0 0
    %528 = vmatpush1.bf16.msra.mxu0 0
    %529 = vmatprep.subr.bf16.mxu0 0
    %530 = vmatpush1.bf16.msra.mxu0 0
    %531 = vmatprep.subr.bf16.mxu0 0
    %532 = vmatpush1.bf16.msra.mxu0 0
    %533 = vmatprep.subr.bf16.mxu0 0
    %534 = vmatpush1.bf16.msra.mxu0 0
    %535 = vmatprep.mubr.bf16.mxu0 0
    %536 = vmatmul.mubr.bf16.gmra.mrb[0].mxu0 %v501
    %v537 = vpop.f32.mrb[0].mxu0
    %v538 = vadd.f32 0.0, %v537
    %v539 = vpop.f32.mrb[0].mxu0
    %v540 = vpop.f32.mrb[0].mxu0
    %v541 = vadd.f32 0.0, %v540
    %v542 = vpop.f32.mrb[0].mxu0
    %543 = vdwg.mxu0
    %v544 = vmul.f32 %v538, 0.5
    %v545 = vmul.f32 %v541, 0.5
    %v546 = vadd.s32 %v131, 1
    %vm547 = vcmp.lt.s32.totalorder %v546, 8
    %vm548 = vcmask 1048064
    %549 = vrot.lane.b32.xlu0 %v544, 64
    %v550 = vpop.permute.xlu0 %549
    %v551 = vsel %vm548, %v550, %v544
    %552 = vrot.lane.b32.xlu0 %v545, 64
    %v553 = vpop.permute.xlu0 %552
    %v554 = vsel %vm548, %v553, %v545
    %555 = vrot.lane.b32.xlu0 %v551, 64
    %v556 = vpop.permute.xlu0 %555
    %557 = vrot.lane.b32.xlu0 %v554, 64
    %v558 = vpop.permute.xlu0 %557
    %v559 = vsel %vm548, %v556, %v544
    %v560 = vsel %vm548, %v558, %v545
    %v561 = vsel %vm547, 1, 0
    %vm562 = vcmp.eq.s32.totalorder %v561, 1
    %565 = vrot.lane.b32.xlu0 %v559, 127
    %v566 = vpop.permute.xlu0 %565
    %567 = vrot.lane.b32.xlu0 %v560, 127
    %v568 = vpop.permute.xlu0 %567
    %v571 = vsel %vm562, %v566, %v544
    %v572 = vsel %vm562, %v568, %v545
    %v573 = vmax.f32 %v544, %v571
    %v574 = vmax.f32 %v545, %v572
    %vm575 = vcmp.ge.s32.totalorder %v131, 1
    %v576 = vsel %vm575, 1, 0
    %vm577 = vcmp.eq.s32.totalorder %v576, 1
    %578 = vrot.lane.b32.xlu0 %v559, 65
    %v579 = vpop.permute.xlu0 %578
    %580 = vrot.lane.b32.xlu0 %v560, 65
    %v581 = vpop.permute.xlu0 %580
    %v584 = vsel %vm577, %v579, %v544
    %v585 = vsel %vm577, %v581, %v545
    %v586 = vmax.f32 %v544, %v584
    %v587 = vmax.f32 %v545, %v585
    %v588 = vadd.s32 %v131, 2
    %vm589 = vcmp.lt.s32.totalorder %v588, 8
    %590 = vrot.lane.b32.xlu0 %v573, 64
    %v591 = vpop.permute.xlu0 %590
    %v592 = vsel %vm548, %v591, %v573
    %593 = vrot.lane.b32.xlu0 %v574, 64
    %v594 = vpop.permute.xlu0 %593
    %v595 = vsel %vm548, %v594, %v574
    %596 = vrot.lane.b32.xlu0 %v592, 64
    %v597 = vpop.permute.xlu0 %596
    %598 = vrot.lane.b32.xlu0 %v595, 64
    %v599 = vpop.permute.xlu0 %598
    %v600 = vsel %vm548, %v597, %v573
    %v601 = vsel %vm548, %v599, %v574
    %v602 = vsel %vm589, 1, 0
    %vm603 = vcmp.eq.s32.totalorder %v602, 1
    %606 = vrot.lane.b32.xlu0 %v600, 126
    %v607 = vpop.permute.xlu0 %606
    %608 = vrot.lane.b32.xlu0 %v601, 126
    %v609 = vpop.permute.xlu0 %608
    %v612 = vsel %vm603, %v607, %v573
    %v613 = vsel %vm603, %v609, %v574
    %v614 = vmax.f32 %v573, %v612
    %v615 = vmax.f32 %v574, %v613
    %vm616 = vcmp.ge.s32.totalorder %v131, 2
    %617 = vrot.lane.b32.xlu0 %v586, 64
    %v618 = vpop.permute.xlu0 %617
    %v619 = vsel %vm548, %v618, %v586
    %620 = vrot.lane.b32.xlu0 %v587, 64
    %v621 = vpop.permute.xlu0 %620
    %v622 = vsel %vm548, %v621, %v587
    %623 = vrot.lane.b32.xlu0 %v619, 64
    %v624 = vpop.permute.xlu0 %623
    %625 = vrot.lane.b32.xlu0 %v622, 64
    %v626 = vpop.permute.xlu0 %625
    %v627 = vsel %vm548, %v624, %v586
    %v628 = vsel %vm548, %v626, %v587
    %v629 = vsel %vm616, 1, 0
    %vm630 = vcmp.eq.s32.totalorder %v629, 1
    %633 = vrot.lane.b32.xlu0 %v627, 66
    %v634 = vpop.permute.xlu0 %633
    %635 = vrot.lane.b32.xlu0 %v628, 66
    %v636 = vpop.permute.xlu0 %635
    %v639 = vsel %vm630, %v634, %v586
    %v640 = vsel %vm630, %v636, %v587
    %v641 = vmax.f32 %v586, %v639
    %v642 = vmax.f32 %v587, %v640
    %v643 = vadd.s32 %v131, 4
    %vm644 = vcmp.lt.s32.totalorder %v643, 8
    %645 = vrot.lane.b32.xlu0 %v614, 64
    %v646 = vpop.permute.xlu0 %645
    %v647 = vsel %vm548, %v646, %v614
    %648 = vrot.lane.b32.xlu0 %v615, 64
    %v649 = vpop.permute.xlu0 %648
    %v650 = vsel %vm548, %v649, %v615
    %651 = vrot.lane.b32.xlu0 %v647, 64
    %v652 = vpop.permute.xlu0 %651
    %653 = vrot.lane.b32.xlu0 %v650, 64
    %v654 = vpop.permute.xlu0 %653
    %v655 = vsel %vm548, %v652, %v614
    %v656 = vsel %vm548, %v654, %v615
    %v657 = vsel %vm644, 1, 0
    %vm658 = vcmp.eq.s32.totalorder %v657, 1
    %661 = vrot.lane.b32.xlu0 %v655, 124
    %v662 = vpop.permute.xlu0 %661
    %663 = vrot.lane.b32.xlu0 %v656, 124
    %v664 = vpop.permute.xlu0 %663
    %v667 = vsel %vm658, %v662, %v614
    %v668 = vsel %vm658, %v664, %v615
    %v669 = vmax.f32 %v614, %v667
    %v670 = vmax.f32 %v615, %v668
    %vm671 = vcmp.ge.s32.totalorder %v131, 4
    %672 = vrot.lane.b32.xlu0 %v641, 64
    %v673 = vpop.permute.xlu0 %672
    %v674 = vsel %vm548, %v673, %v641
    %675 = vrot.lane.b32.xlu0 %v642, 64
    %v676 = vpop.permute.xlu0 %675
    %v677 = vsel %vm548, %v676, %v642
    %678 = vrot.lane.b32.xlu0 %v674, 64
    %v679 = vpop.permute.xlu0 %678
    %680 = vrot.lane.b32.xlu0 %v677, 64
    %v681 = vpop.permute.xlu0 %680
    %v682 = vsel %vm548, %v679, %v641
    %v683 = vsel %vm548, %v681, %v642
    %v684 = vsel %vm671, 1, 0
    %vm685 = vcmp.eq.s32.totalorder %v684, 1
    %688 = vrot.lane.b32.xlu0 %v682, 68
    %v689 = vpop.permute.xlu0 %688
    %690 = vrot.lane.b32.xlu0 %v683, 68
    %v691 = vpop.permute.xlu0 %690
    %v694 = vsel %vm685, %v689, %v641
    %v695 = vsel %vm685, %v691, %v642
    %v696 = vmax.f32 %v641, %v694
    %v697 = vmax.f32 %v642, %v695
    %v698 = vmax.f32 %v669, %v696
    %v699 = vmax.f32 %v670, %v697
    %v700 = vsub.f32 %v544, %v698
    %v701 = vsub.f32 %v545, %v699
    %v702 = vmul.f32 %v700, 1.442695
    %v703 = vpow.pop %v702
    %v704 = vmul.f32 %v701, 1.442695
    %v705 = vpow.pop %v704
    %v707 = vsel %vm499, %v703, 0
    %v710 = vsel %vm499, %v705, 0
    %712 = vmatprep.subr.mxu0 0.0
    %713 = vmatpush1.msra.mxu0 %v56
    %714 = vmatprep.subr.mxu0 0.0
    %715 = vmatpush1.msra.mxu0 %v57
    %716 = vmatprep.subr.mxu0 0.0
    %717 = vmatpush1.msra.mxu0 %v58
    %718 = vmatprep.subr.mxu0 0.0
    %719 = vmatpush1.msra.mxu0 %v59
    %720 = vmatprep.subr.mxu0 0.0
    %721 = vmatpush1.msra.mxu0 %v60
    %722 = vmatprep.subr.mxu0 0.0
    %723 = vmatpush1.msra.mxu0 %v61
    %724 = vmatprep.subr.mxu0 0.0
    %725 = vmatpush1.msra.mxu0 %v62
    %726 = vmatprep.subr.mxu0 0.0
    %727 = vmatpush1.msra.mxu0 %v63
    %728 = vmatprep.subr.mxu0 0.0
    %729 = vmatpush1.msra.mxu0 0.0
    %730 = vmatprep.subr.mxu0 0.0
    %731 = vmatpush1.msra.mxu0 0.0
    %732 = vmatprep.subr.mxu0 0.0
    %733 = vmatpush1.msra.mxu0 0.0
    %734 = vmatprep.subr.mxu0 0.0
    %735 = vmatpush1.msra.mxu0 0.0
    %736 = vmatprep.subr.mxu0 0.0
    %737 = vmatpush1.msra.mxu0 0.0
    %738 = vmatprep.subr.mxu0 0.0
    %739 = vmatpush1.msra.mxu0 0.0
    %740 = vmatprep.subr.mxu0 0.0
    %741 = vmatpush1.msra.mxu0 0.0
    %742 = vmatprep.subr.mxu0 0.0
    %743 = vmatpush1.msra.mxu0 0.0
    %744 = vmatprep.subr.mxu0 0.0
    %745 = vmatpush1.msra.mxu0 0.0
    %746 = vmatprep.subr.mxu0 0.0
    %747 = vmatpush1.msra.mxu0 0.0
    %748 = vmatprep.subr.mxu0 0.0
    %749 = vmatpush1.msra.mxu0 0.0
    %750 = vmatprep.subr.mxu0 0.0
    %751 = vmatpush1.msra.mxu0 0.0
    %752 = vmatprep.subr.mxu0 0.0
    %753 = vmatpush1.msra.mxu0 0.0
    %754 = vmatprep.subr.mxu0 0.0
    %755 = vmatpush1.msra.mxu0 0.0
    %756 = vmatprep.subr.mxu0 0.0
    %757 = vmatpush1.msra.mxu0 0.0
    %758 = vmatprep.subr.mxu0 0.0
    %759 = vmatpush1.msra.mxu0 0.0
    %760 = vmatprep.subr.mxu0 0.0
    %761 = vmatpush1.msra.mxu0 0.0
    %762 = vmatprep.subr.mxu0 0.0
    %763 = vmatpush1.msra.mxu0 0.0
    %764 = vmatprep.subr.mxu0 0.0
    %765 = vmatpush1.msra.mxu0 0.0
    %766 = vmatprep.subr.mxu0 0.0
    %767 = vmatpush1.msra.mxu0 0.0
    %768 = vmatprep.subr.mxu0 0.0
    %769 = vmatpush1.msra.mxu0 0.0
    %770 = vmatprep.subr.mxu0 0.0
    %771 = vmatpush1.msra.mxu0 0.0
    %772 = vmatprep.subr.mxu0 0.0
    %773 = vmatpush1.msra.mxu0 0.0
    %774 = vmatprep.subr.mxu0 0.0
    %775 = vmatpush1.msra.mxu0 0.0
    %776 = vmatprep.mubr.f32.mxu0 0.0
    %777 = vmatmul.mubr.f32.gmra.mrb[0].mxu0 %v707
    %v778 = vpop.f32.mrb[0].mxu0
    %v779 = vadd.f32 0.0, %v778
    %v780 = vpop.f32.mrb[0].mxu0
    %781 = vmatprep.mubr.f32.mxu0 0.0
    %782 = vmatmul.mubr.f32.gmra.mrb[0].mxu0 %v710
    %v783 = vpop.f32.mrb[0].mxu0
    %v784 = vadd.f32 0.0, %v783
    %v785 = vpop.f32.mrb[0].mxu0
    %786 = vdwg.mxu0
    %v787 = vrcp.pop %v779
    %v788 = vmul.f32 %v703, %v787
    %v789 = vrcp.pop %v784
    %v790 = vmul.f32 %v705, %v789
    %v791 = vpack.c.bf16 %v790, %v788
    %793 = vrot.lane.b32.xlu0 %v791, 64
    %v794 = vpop.permute.xlu0 %793
    %v797 = vsel %vm499, %v791, %v794
    %v801 = vunpack.c.l.b16 %v64
    %v802 = vunpack.c.l.b16 %v65
    %v803 = vpack.c.b16 %v802, %v801
    %v805 = vmul.bf16 %v797, %v803
    %v822 = vunpack.c.l.b16 %v66
    %v823 = vunpack.c.l.b16 %v67
    %v824 = vunpack.c.l.b16 %v68
    %v825 = vunpack.c.l.b16 %v69
    %v826 = vunpack.c.l.b16 %v70
    %v827 = vunpack.c.l.b16 %v71
    %v828 = vunpack.c.l.b16 %v72
    %v829 = vunpack.c.l.b16 %v73
    %v830 = vunpack.c.l.b16 %v74
    %v831 = vunpack.c.l.b16 %v75
    %v832 = vunpack.c.l.b16 %v76
    %v833 = vunpack.c.l.b16 %v77
    %v834 = vunpack.c.l.b16 %v78
    %v835 = vunpack.c.l.b16 %v79
    %v836 = vunpack.c.l.b16 %v80
    %v837 = vunpack.c.l.b16 %v81
    %v838 = vpack.c.b16 %v823, %v822
    %v839 = vpack.c.b16 %v825, %v824
    %v840 = vpack.c.b16 %v827, %v826
    %v841 = vpack.c.b16 %v829, %v828
    %v842 = vpack.c.b16 %v831, %v830
    %v843 = vpack.c.b16 %v833, %v832
    %v844 = vpack.c.b16 %v835, %v834
    %v845 = vpack.c.b16 %v837, %v836
    %846 = vrot.lane.b32.xlu0 %v382, 64
    %v847 = vpop.permute.xlu0 %846
    %v850 = vsel %vm396, %v838, 0
    %v853 = vsel %vm396, %v839, 0
    %v856 = vsel %vm396, %v840, 0
    %v859 = vsel %vm396, %v841, 0
    %v862 = vsel %vm396, %v842, 0
    %v865 = vsel %vm396, %v843, 0
    %v868 = vsel %vm396, %v844, 0
    %v871 = vsel %vm396, %v845, 0
    %873 = vmatprep.subr.bf16.mxu0 0
    %874 = vmatpush1.bf16.msra.mxu0 %v847
    %875 = vmatprep.subr.bf16.mxu0 0
    %876 = vmatpush1.bf16.msra.mxu0 0
    %877 = vmatprep.subr.bf16.mxu0 0
    %878 = vmatpush1.bf16.msra.mxu0 0
    %879 = vmatprep.subr.bf16.mxu0 0
    %880 = vmatpush1.bf16.msra.mxu0 0
    %881 = vmatprep.subr.bf16.mxu0 0
    %882 = vmatpush1.bf16.msra.mxu0 0
    %883 = vmatprep.subr.bf16.mxu0 0
    %884 = vmatpush1.bf16.msra.mxu0 0
    %885 = vmatprep.subr.bf16.mxu0 0
    %886 = vmatpush1.bf16.msra.mxu0 0
    %887 = vmatprep.subr.bf16.mxu0 0
    %888 = vmatpush1.bf16.msra.mxu0 0
    %889 = vmatprep.subr.bf16.mxu0 0
    %890 = vmatpush1.bf16.msra.mxu0 0
    %891 = vmatprep.subr.bf16.mxu0 0
    %892 = vmatpush1.bf16.msra.mxu0 0
    %893 = vmatprep.subr.bf16.mxu0 0
    %894 = vmatpush1.bf16.msra.mxu0 0
    %895 = vmatprep.subr.bf16.mxu0 0
    %896 = vmatpush1.bf16.msra.mxu0 0
    %897 = vmatprep.subr.bf16.mxu0 0
    %898 = vmatpush1.bf16.msra.mxu0 0
    %899 = vmatprep.subr.bf16.mxu0 0
    %900 = vmatpush1.bf16.msra.mxu0 0
    %901 = vmatprep.subr.bf16.mxu0 0
    %902 = vmatpush1.bf16.msra.mxu0 0
    %903 = vmatprep.subr.bf16.mxu0 0
    %904 = vmatpush1.bf16.msra.mxu0 0
    %905 = vmatprep.mubr.bf16.mxu0 0
    %906 = vmatmul.mubr.bf16.gmra.mrb[0].mxu0 %v850
    %v907 = vpop.f32.mrb[0].mxu0
    %v908 = vadd.f32 0.0, %v907
    %v909 = vpop.f32.mrb[0].mxu0
    %v910 = vpop.f32.mrb[0].mxu0
    %v911 = vadd.f32 0.0, %v910
    %v912 = vpop.f32.mrb[0].mxu0
    %913 = vmatprep.mubr.bf16.mxu0 0
    %914 = vmatmul.mubr.bf16.gmra.mrb[0].mxu0 %v853
    %v915 = vpop.f32.mrb[0].mxu0
    %v916 = vadd.f32 0.0, %v915
    %v917 = vpop.f32.mrb[0].mxu0
    %v918 = vpop.f32.mrb[0].mxu0
    %v919 = vadd.f32 0.0, %v918
    %v920 = vpop.f32.mrb[0].mxu0
    %921 = vmatprep.mubr.bf16.mxu0 0
    %922 = vmatmul.mubr.bf16.gmra.mrb[0].mxu0 %v856
    %v923 = vpop.f32.mrb[0].mxu0
    %v924 = vadd.f32 0.0, %v923
    %v925 = vpop.f32.mrb[0].mxu0
    %v926 = vpop.f32.mrb[0].mxu0
    %v927 = vadd.f32 0.0, %v926
    %v928 = vpop.f32.mrb[0].mxu0
    %929 = vmatprep.mubr.bf16.mxu0 0
    %930 = vmatmul.mubr.bf16.gmra.mrb[0].mxu0 %v859
    %v931 = vpop.f32.mrb[0].mxu0
    %v932 = vadd.f32 0.0, %v931
    %v933 = vpop.f32.mrb[0].mxu0
    %v934 = vpop.f32.mrb[0].mxu0
    %v935 = vadd.f32 0.0, %v934
    %v936 = vpop.f32.mrb[0].mxu0
    %937 = vmatprep.mubr.bf16.mxu0 0
    %938 = vmatmul.mubr.bf16.gmra.mrb[0].mxu0 %v862
    %v939 = vpop.f32.mrb[0].mxu0
    %v940 = vadd.f32 0.0, %v939
    %v941 = vpop.f32.mrb[0].mxu0
    %v942 = vpop.f32.mrb[0].mxu0
    %v943 = vadd.f32 0.0, %v942
    %v944 = vpop.f32.mrb[0].mxu0
    %945 = vmatprep.mubr.bf16.mxu0 0
    %946 = vmatmul.mubr.bf16.gmra.mrb[0].mxu0 %v865
    %v947 = vpop.f32.mrb[0].mxu0
    %v948 = vadd.f32 0.0, %v947
    %v949 = vpop.f32.mrb[0].mxu0
    %v950 = vpop.f32.mrb[0].mxu0
    %v951 = vadd.f32 0.0, %v950
    %v952 = vpop.f32.mrb[0].mxu0
    %953 = vmatprep.mubr.bf16.mxu0 0
    %954 = vmatmul.mubr.bf16.gmra.mrb[0].mxu0 %v868
    %v955 = vpop.f32.mrb[0].mxu0
    %v956 = vadd.f32 0.0, %v955
    %v957 = vpop.f32.mrb[0].mxu0
    %v958 = vpop.f32.mrb[0].mxu0
    %v959 = vadd.f32 0.0, %v958
    %v960 = vpop.f32.mrb[0].mxu0
    %961 = vmatprep.mubr.bf16.mxu0 0
    %962 = vmatmul.mubr.bf16.gmra.mrb[0].mxu0 %v871
    %v963 = vpop.f32.mrb[0].mxu0
    %v964 = vadd.f32 0.0, %v963
    %v965 = vpop.f32.mrb[0].mxu0
    %v966 = vpop.f32.mrb[0].mxu0
    %v967 = vadd.f32 0.0, %v966
    %v968 = vpop.f32.mrb[0].mxu0
    %969 = vdwg.mxu0
    %v970 = vpack.c.bf16 %v911, %v908
    %v971 = vpack.c.bf16 %v919, %v916
    %v972 = vpack.c.bf16 %v927, %v924
    %v973 = vpack.c.bf16 %v935, %v932
    %v974 = vpack.c.bf16 %v943, %v940
    %v975 = vpack.c.bf16 %v951, %v948
    %v976 = vpack.c.bf16 %v959, %v956
    %v977 = vpack.c.bf16 %v967, %v964
    %v994 = vunpack.c.l.b16 %v82
    %v995 = vunpack.c.l.b16 %v83
    %v996 = vunpack.c.l.b16 %v84
    %v997 = vunpack.c.l.b16 %v85
    %v998 = vunpack.c.l.b16 %v86
    %v999 = vunpack.c.l.b16 %v87
    %v1000 = vunpack.c.l.b16 %v88
    %v1001 = vunpack.c.l.b16 %v89
    %v1002 = vunpack.c.l.b16 %v90
    %v1003 = vunpack.c.l.b16 %v91
    %v1004 = vunpack.c.l.b16 %v92
    %v1005 = vunpack.c.l.b16 %v93
    %v1006 = vunpack.c.l.b16 %v94
    %v1007 = vunpack.c.l.b16 %v95
    %v1008 = vunpack.c.l.b16 %v96
    %v1009 = vunpack.c.l.b16 %v97
    %v1010 = vpack.c.b16 %v995, %v994
    %v1011 = vpack.c.b16 %v997, %v996
    %v1012 = vpack.c.b16 %v999, %v998
    %v1013 = vpack.c.b16 %v1001, %v1000
    %v1014 = vpack.c.b16 %v1003, %v1002
    %v1015 = vpack.c.b16 %v1005, %v1004
    %v1016 = vpack.c.b16 %v1007, %v1006
    %v1017 = vpack.c.b16 %v1009, %v1008
    %v1026 = vmul.bf16 %v970, %v1010
    %v1027 = vmul.bf16 %v971, %v1011
    %v1028 = vmul.bf16 %v972, %v1012
    %v1029 = vmul.bf16 %v973, %v1013
    %v1030 = vmul.bf16 %v974, %v1014
    %v1031 = vmul.bf16 %v975, %v1015
    %v1032 = vmul.bf16 %v976, %v1016
    %v1033 = vmul.bf16 %v977, %v1017
    %v1038 = vunpack.c.l.b16 %v98
    %v1039 = vunpack.c.l.b16 %v99
    %v1040 = vunpack.c.l.b16 %v100
    %v1041 = vunpack.c.l.b16 %v101
    %v1042 = vpack.c.b16 %v1039, %v1038
    %v1043 = vpack.c.b16 %v1041, %v1040
    %v1047 = vsel %vm281, %v1026, 0
    %v1050 = vsel %vm281, %v1027, 0
    %v1053 = vsel %vm281, %v1028, 0
    %v1056 = vsel %vm281, %v1029, 0
    %v1059 = vsel %vm281, %v1030, 0
    %v1062 = vsel %vm281, %v1031, 0
    %v1065 = vsel %vm281, %v1032, 0
    %v1068 = vsel %vm281, %v1033, 0
    %1070 = vmatprep.subr.bf16.mxu0 0
    %1071 = vmatpush1.bf16.msra.mxu0 %v1042
    %1072 = vmatprep.subr.bf16.mxu0 0
    %1073 = vmatpush1.bf16.msra.mxu0 %v1043
    %1074 = vmatprep.subr.bf16.mxu0 0
    %1075 = vmatpush1.bf16.msra.mxu0 0
    %1076 = vmatprep.subr.bf16.mxu0 0
    %1077 = vmatpush1.bf16.msra.mxu0 0
    %1078 = vmatprep.subr.bf16.mxu0 0
    %1079 = vmatpush1.bf16.msra.mxu0 0
    %1080 = vmatprep.subr.bf16.mxu0 0
    %1081 = vmatpush1.bf16.msra.mxu0 0
    %1082 = vmatprep.subr.bf16.mxu0 0
    %1083 = vmatpush1.bf16.msra.mxu0 0
    %1084 = vmatprep.subr.bf16.mxu0 0
    %1085 = vmatpush1.bf16.msra.mxu0 0
    %1086 = vmatprep.subr.bf16.mxu0 0
    %1087 = vmatpush1.bf16.msra.mxu0 0
    %1088 = vmatprep.subr.bf16.mxu0 0
    %1089 = vmatpush1.bf16.msra.mxu0 0
    %1090 = vmatprep.subr.bf16.mxu0 0
    %1091 = vmatpush1.bf16.msra.mxu0 0
    %1092 = vmatprep.subr.bf16.mxu0 0
    %1093 = vmatpush1.bf16.msra.mxu0 0
    %1094 = vmatprep.subr.bf16.mxu0 0
    %1095 = vmatpush1.bf16.msra.mxu0 0
    %1096 = vmatprep.subr.bf16.mxu0 0
    %1097 = vmatpush1.bf16.msra.mxu0 0
    %1098 = vmatprep.subr.bf16.mxu0 0
    %1099 = vmatpush1.bf16.msra.mxu0 0
    %1100 = vmatprep.subr.bf16.mxu0 0
    %1101 = vmatpush1.bf16.msra.mxu0 0
    %1102 = vmatprep.mubr.bf16.mxu0 0
    %1103 = vmatmul.mubr.bf16.gmra.mrb[0].mxu0 %v1047
    %v1104 = vpop.f32.mrb[0].mxu0
    %v1105 = vadd.f32 0.0, %v1104
    %v1106 = vpop.f32.mrb[0].mxu0
    %v1107 = vpop.f32.mrb[0].mxu0
    %v1108 = vadd.f32 0.0, %v1107
    %v1109 = vpop.f32.mrb[0].mxu0
    %1110 = vmatprep.mubr.bf16.mxu0 0
    %1111 = vmatmul.mubr.bf16.gmra.mrb[0].mxu0 %v1050
    %v1112 = vpop.f32.mrb[0].mxu0
    %v1113 = vadd.f32 0.0, %v1112
    %v1114 = vpop.f32.mrb[0].mxu0
    %v1115 = vpop.f32.mrb[0].mxu0
    %v1116 = vadd.f32 0.0, %v1115
    %v1117 = vpop.f32.mrb[0].mxu0
    %1118 = vmatprep.mubr.bf16.mxu0 0
    %1119 = vmatmul.mubr.bf16.gmra.mrb[0].mxu0 %v1053
    %v1120 = vpop.f32.mrb[0].mxu0
    %v1121 = vadd.f32 0.0, %v1120
    %v1122 = vpop.f32.mrb[0].mxu0
    %v1123 = vpop.f32.mrb[0].mxu0
    %v1124 = vadd.f32 0.0, %v1123
    %v1125 = vpop.f32.mrb[0].mxu0
    %1126 = vmatprep.mubr.bf16.mxu0 0
    %1127 = vmatmul.mubr.bf16.gmra.mrb[0].mxu0 %v1056
    %v1128 = vpop.f32.mrb[0].mxu0
    %v1129 = vadd.f32 0.0, %v1128
    %v1130 = vpop.f32.mrb[0].mxu0
    %v1131 = vpop.f32.mrb[0].mxu0
    %v1132 = vadd.f32 0.0, %v1131
    %v1133 = vpop.f32.mrb[0].mxu0
    %1134 = vmatprep.mubr.bf16.mxu0 0
    %1135 = vmatmul.mubr.bf16.gmra.mrb[0].mxu0 %v1059
    %v1136 = vpop.f32.mrb[0].mxu0
    %v1137 = vadd.f32 0.0, %v1136
    %v1138 = vpop.f32.mrb[0].mxu0
    %v1139 = vpop.f32.mrb[0].mxu0
    %v1140 = vadd.f32 0.0, %v1139
    %v1141 = vpop.f32.mrb[0].mxu0
    %1142 = vmatprep.mubr.bf16.mxu0 0
    %1143 = vmatmul.mubr.bf16.gmra.mrb[0].mxu0 %v1062
    %v1144 = vpop.f32.mrb[0].mxu0
    %v1145 = vadd.f32 0.0, %v1144
    %v1146 = vpop.f32.mrb[0].mxu0
    %v1147 = vpop.f32.mrb[0].mxu0
    %v1148 = vadd.f32 0.0, %v1147
    %v1149 = vpop.f32.mrb[0].mxu0
    %1150 = vmatprep.mubr.bf16.mxu0 0
    %1151 = vmatmul.mubr.bf16.gmra.mrb[0].mxu0 %v1065
    %v1152 = vpop.f32.mrb[0].mxu0
    %v1153 = vadd.f32 0.0, %v1152
    %v1154 = vpop.f32.mrb[0].mxu0
    %v1155 = vpop.f32.mrb[0].mxu0
    %v1156 = vadd.f32 0.0, %v1155
    %v1157 = vpop.f32.mrb[0].mxu0
    %1158 = vmatprep.mubr.bf16.mxu0 0
    %1159 = vmatmul.mubr.bf16.gmra.mrb[0].mxu0 %v1068
    %v1160 = vpop.f32.mrb[0].mxu0
    %v1161 = vadd.f32 0.0, %v1160
    %v1162 = vpop.f32.mrb[0].mxu0
    %v1163 = vpop.f32.mrb[0].mxu0
    %v1164 = vadd.f32 0.0, %v1163
    %v1165 = vpop.f32.mrb[0].mxu0
    %1166 = vdwg.mxu0
    %v1167 = vpack.c.bf16 %v1108, %v1105
    %v1168 = vpack.c.bf16 %v1116, %v1113
    %v1169 = vpack.c.bf16 %v1124, %v1121
    %v1170 = vpack.c.bf16 %v1132, %v1129
    %v1171 = vpack.c.bf16 %v1140, %v1137
    %v1172 = vpack.c.bf16 %v1148, %v1145
    %v1173 = vpack.c.bf16 %v1156, %v1153
    %v1174 = vpack.c.bf16 %v1164, %v1161
    %v1191 = vunpack.c.l.b16 %v102
    %v1192 = vunpack.c.l.b16 %v103
    %v1193 = vunpack.c.l.b16 %v104
    %v1194 = vunpack.c.l.b16 %v105
    %v1195 = vunpack.c.l.b16 %v106
    %v1196 = vunpack.c.l.b16 %v107
    %v1197 = vunpack.c.l.b16 %v108
    %v1198 = vunpack.c.l.b16 %v109
    %v1199 = vunpack.c.l.b16 %v110
    %v1200 = vunpack.c.l.b16 %v111
    %v1201 = vunpack.c.l.b16 %v112
    %v1202 = vunpack.c.l.b16 %v113
    %v1203 = vunpack.c.l.b16 %v114
    %v1204 = vunpack.c.l.b16 %v115
    %v1205 = vunpack.c.l.b16 %v116
    %v1206 = vunpack.c.l.b16 %v117
    %v1207 = vpack.c.b16 %v1192, %v1191
    %v1208 = vpack.c.b16 %v1194, %v1193
    %v1209 = vpack.c.b16 %v1196, %v1195
    %v1210 = vpack.c.b16 %v1198, %v1197
    %v1211 = vpack.c.b16 %v1200, %v1199
    %v1212 = vpack.c.b16 %v1202, %v1201
    %v1213 = vpack.c.b16 %v1204, %v1203
    %v1214 = vpack.c.b16 %v1206, %v1205
    %v1223 = vmul.bf16 %v1167, %v1207
    %v1224 = vmul.bf16 %v1168, %v1208
    %v1225 = vmul.bf16 %v1169, %v1209
    %v1226 = vmul.bf16 %v1170, %v1210
    %v1227 = vmul.bf16 %v1171, %v1211
    %v1228 = vmul.bf16 %v1172, %v1212
    %v1229 = vmul.bf16 %v1173, %v1213
    %v1230 = vmul.bf16 %v1174, %v1214
    %1231 = vmatprep.subr.bf16.mxu0 0
    %1232 = vmatpush1.bf16.msra.mxu0 %v1223
    %1233 = vmatprep.subr.bf16.mxu0 0
    %1234 = vmatpush1.bf16.msra.mxu0 %v1224
    %1235 = vmatprep.subr.bf16.mxu0 0
    %1236 = vmatpush1.bf16.msra.mxu0 %v1225
    %1237 = vmatprep.subr.bf16.mxu0 0
    %1238 = vmatpush1.bf16.msra.mxu0 %v1226
    %1239 = vmatprep.subr.bf16.mxu0 0
    %1240 = vmatpush1.bf16.msra.mxu0 %v1227
    %1241 = vmatprep.subr.bf16.mxu0 0
    %1242 = vmatpush1.bf16.msra.mxu0 %v1228
    %1243 = vmatprep.subr.bf16.mxu0 0
    %1244 = vmatpush1.bf16.msra.mxu0 %v1229
    %1245 = vmatprep.subr.bf16.mxu0 0
    %1246 = vmatpush1.bf16.msra.mxu0 %v1230
    %1247 = vmatprep.subr.bf16.mxu0 0
    %1248 = vmatpush1.bf16.msra.mxu0 0
    %1249 = vmatprep.subr.bf16.mxu0 0
    %1250 = vmatpush1.bf16.msra.mxu0 0
    %1251 = vmatprep.subr.bf16.mxu0 0
    %1252 = vmatpush1.bf16.msra.mxu0 0
    %1253 = vmatprep.subr.bf16.mxu0 0
    %1254 = vmatpush1.bf16.msra.mxu0 0
    %1255 = vmatprep.subr.bf16.mxu0 0
    %1256 = vmatpush1.bf16.msra.mxu0 0
    %1257 = vmatprep.subr.bf16.mxu0 0
    %1258 = vmatpush1.bf16.msra.mxu0 0
    %1259 = vmatprep.subr.bf16.mxu0 0
    %1260 = vmatpush1.bf16.msra.mxu0 0
    %1261 = vmatprep.subr.bf16.mxu0 0
    %1262 = vmatpush1.bf16.msra.mxu0 0
    %1263 = vmatprep.mubr.bf16.mxu0 0
    %1264 = vmatmul.mubr.bf16.gmra.mrb[0].mxu0 %v805
    %v1265 = vpop.f32.mrb[0].mxu0
    %v1266 = vadd.f32 0.0, %v1265
    %v1267 = vpop.f32.mrb[0].mxu0
    %v1268 = vpop.f32.mrb[0].mxu0
    %v1269 = vadd.f32 0.0, %v1268
    %v1270 = vpop.f32.mrb[0].mxu0
    %1271 = vdwg.mxu0
    %v1272 = vpack.c.bf16 %v1269, %v1266
    %v1273 = vlaneseq
    %v1274 = vshrl.u32 %v1273, 7
    %v1275 = vsub.s32 0, %v1274
    %v1276 = vrot.slane %v276, %v1275
    %v1281 = vunpack.c.l.b16 %v245
    %v1282 = vunpack.c.l.b16 %v246
    %v1283 = vunpack.c.l.b16 %v247
    %v1284 = vunpack.c.l.b16 %v248
    %v1285 = vpack.c.b16 %v1282, %v1281
    %v1286 = vpack.c.b16 %v1284, %v1283
    %v1290 = vsel %vm281, %v1272, 0
    %1292 = vmatprep.subr.bf16.mxu0 0
    %1293 = vmatpush1.bf16.msra.mxu0 %v1285
    %1294 = vmatprep.subr.bf16.mxu0 0
    %1295 = vmatpush1.bf16.msra.mxu0 %v1286
    %1296 = vmatprep.subr.bf16.mxu0 0
    %1297 = vmatpush1.bf16.msra.mxu0 0
    %1298 = vmatprep.subr.bf16.mxu0 0
    %1299 = vmatpush1.bf16.msra.mxu0 0
    %1300 = vmatprep.subr.bf16.mxu0 0
    %1301 = vmatpush1.bf16.msra.mxu0 0
    %1302 = vmatprep.subr.bf16.mxu0 0
    %1303 = vmatpush1.bf16.msra.mxu0 0
    %1304 = vmatprep.subr.bf16.mxu0 0
    %1305 = vmatpush1.bf16.msra.mxu0 0
    %1306 = vmatprep.subr.bf16.mxu0 0
    %1307 = vmatpush1.bf16.msra.mxu0 0
    %1308 = vmatprep.subr.bf16.mxu0 0
    %1309 = vmatpush1.bf16.msra.mxu0 0
    %1310 = vmatprep.subr.bf16.mxu0 0
    %1311 = vmatpush1.bf16.msra.mxu0 0
    %1312 = vmatprep.subr.bf16.mxu0 0
    %1313 = vmatpush1.bf16.msra.mxu0 0
    %1314 = vmatprep.subr.bf16.mxu0 0
    %1315 = vmatpush1.bf16.msra.mxu0 0
    %1316 = vmatprep.subr.bf16.mxu0 0
    %1317 = vmatpush1.bf16.msra.mxu0 0
    %1318 = vmatprep.subr.bf16.mxu0 0
    %1319 = vmatpush1.bf16.msra.mxu0 0
    %1320 = vmatprep.subr.bf16.mxu0 0
    %1321 = vmatpush1.bf16.msra.mxu0 0
    %1322 = vmatprep.subr.bf16.mxu0 0
    %1323 = vmatpush1.bf16.msra.mxu0 0
    %1324 = vmatprep.mubr.bf16.mxu0 0
    %1325 = vmatmul.mubr.bf16.gmra.mrb[0].mxu0 %v1290
    %v1326 = vpop.f32.mrb[0].mxu0
    %v1327 = vadd.f32 %v1276, %v1326
    %v1328 = vpop.f32.mrb[0].mxu0
    %v1329 = vpop.f32.mrb[0].mxu0
    %v1330 = vadd.f32 %v1276, %v1329
    %v1331 = vpop.f32.mrb[0].mxu0
    %1332 = vdwg.mxu0
    %v1333 = vadd.f32 %v1327, %v239
    %v1334 = vadd.f32 %v1330, %v242
    %v1335 = vsel %vm281, %v1333, 0.0
    %1336 = vadd.xlane.f32.xlu0 %v1335
    %v1337 = vpop.xlane.xlu0 %1336
    %v1338 = vsel %vm281, %v1334, 0.0
    %1339 = vadd.xlane.f32.xlu0 %v1338
    %v1340 = vpop.xlane.xlu0 %1339
    %v1341 = vmul.f32 %v1337, %v288
    %v1342 = vmul.f32 %v1340, %v288
    %v1343 = vsub.f32 %v1333, %v1341
    %v1344 = vsub.f32 %v1334, %v1342
    %v1345 = vmul.f32 %v1343, %v1343
    %v1346 = vmul.f32 %v1344, %v1344
    %v1347 = vsel %vm281, %v1345, 0.0
    %1348 = vadd.xlane.f32.xlu0 %v1347
    %v1349 = vpop.xlane.xlu0 %1348
    %v1350 = vsel %vm281, %v1346, 0.0
    %1351 = vadd.xlane.f32.xlu0 %v1350
    %v1352 = vpop.xlane.xlu0 %1351
    %v1353 = vmul.f32 %v1349, %v288
    %v1354 = vmul.f32 %v1352, %v288
    %v1355 = vadd.f32 %v1353, 1e-05
    %v1356 = vadd.f32 %v1354, 1e-05
    %v1357 = vrsqrt.pop %v1355
    %v1358 = vrsqrt.pop %v1356
    %v1359 = vmul.f32 %v1343, %v1357
    %v1360 = vmul.f32 %v1344, %v1358
    %v1361 = vlaneseq
    %v1362 = vshrl.u32 %v1361, 7
    %v1363 = vsub.s32 0, %v1362
    %v1364 = vrot.slane %v277, %v1363
    %v1365 = vmul.f32 %v1359, %v1364
    %v1366 = vmul.f32 %v1360, %v1364
    %v1367 = vlaneseq
    %v1368 = vshrl.u32 %v1367, 7
    %v1369 = vsub.s32 0, %v1368
    %v1370 = vrot.slane %v278, %v1369
    %v1371 = vadd.f32 %v1365, %v1370
    %v1372 = vadd.f32 %v1366, %v1370
    %v1373 = vpack.c.bf16 %v1372, %v1371
    %v1374 = vlaneseq
    %v1375 = vshrl.u32 %v1374, 7
    %v1376 = vsub.s32 0, %v1375
    %v1377 = vrot.slane %v279, %v1376
    %v1382 = vunpack.c.l.b16 %v269
    %v1383 = vunpack.c.l.b16 %v270
    %v1384 = vunpack.c.l.b16 %v271
    %v1385 = vunpack.c.l.b16 %v272
    %v1386 = vpack.c.b16 %v1383, %v1382
    %v1387 = vpack.c.b16 %v1385, %v1384
    %v1391 = vsel %vm281, %v1373, 0
    %1393 = vmatprep.subr.bf16.mxu0 0
    %1394 = vmatpush1.bf16.msra.mxu0 %v1386
    %1395 = vmatprep.subr.bf16.mxu0 0
    %1396 = vmatpush1.bf16.msra.mxu0 %v1387
    %1397 = vmatprep.subr.bf16.mxu0 0
    %1398 = vmatpush1.bf16.msra.mxu0 0
    %1399 = vmatprep.subr.bf16.mxu0 0
    %1400 = vmatpush1.bf16.msra.mxu0 0
    %1401 = vmatprep.subr.bf16.mxu0 0
    %1402 = vmatpush1.bf16.msra.mxu0 0
    %1403 = vmatprep.subr.bf16.mxu0 0
    %1404 = vmatpush1.bf16.msra.mxu0 0
    %1405 = vmatprep.subr.bf16.mxu0 0
    %1406 = vmatpush1.bf16.msra.mxu0 0
    %1407 = vmatprep.subr.bf16.mxu0 0
    %1408 = vmatpush1.bf16.msra.mxu0 0
    %1409 = vmatprep.subr.bf16.mxu0 0
    %1410 = vmatpush1.bf16.msra.mxu0 0
    %1411 = vmatprep.subr.bf16.mxu0 0
    %1412 = vmatpush1.bf16.msra.mxu0 0
    %1413 = vmatprep.subr.bf16.mxu0 0
    %1414 = vmatpush1.bf16.msra.mxu0 0
    %1415 = vmatprep.subr.bf16.mxu0 0
    %1416 = vmatpush1.bf16.msra.mxu0 0
    %1417 = vmatprep.subr.bf16.mxu0 0
    %1418 = vmatpush1.bf16.msra.mxu0 0
    %1419 = vmatprep.subr.bf16.mxu0 0
    %1420 = vmatpush1.bf16.msra.mxu0 0
    %1421 = vmatprep.subr.bf16.mxu0 0
    %1422 = vmatpush1.bf16.msra.mxu0 0
    %1423 = vmatprep.subr.bf16.mxu0 0
    %1424 = vmatpush1.bf16.msra.mxu0 0
    %1425 = vmatprep.mubr.bf16.mxu0 0
    %1426 = vmatmul.mubr.bf16.gmra.mrb[0].mxu0 %v1391
    %v1427 = vpop.f32.mrb[0].mxu0
    %v1428 = vadd.f32 %v1377, %v1427
    %v1429 = vpop.f32.mrb[0].mxu0
    %v1430 = vpop.f32.mrb[0].mxu0
    %v1431 = vadd.f32 %v1377, %v1430
    %v1432 = vpop.f32.mrb[0].mxu0
    %1433 = vdwg.mxu0
    %v1434 = vmul.f32 %v1428, 1.702
    %v1435 = vmul.f32 %v1431, 1.702
    %v1436 = vxor.u32 %v1434, 2147483648
    %v1437 = vxor.u32 %v1435, 2147483648
    %v1438 = vmul.f32 %v1436, 1.442695
    %v1439 = vpow.pop %v1438
    %v1440 = vmul.f32 %v1437, 1.442695
    %v1441 = vpow.pop %v1440
    %v1442 = vadd.f32 %v1439, 1.0
    %v1443 = vadd.f32 %v1441, 1.0
    %v1444 = vrcp.pop %v1442
    %v1445 = vmul.f32 1.0, %v1444
    %v1446 = vrcp.pop %v1443
    %v1447 = vmul.f32 1.0, %v1446
    %v1448 = vmul.f32 %v1428, %v1445
    %v1449 = vmul.f32 %v1431, %v1447
    %v1450 = vpack.c.bf16 %v1449, %v1448
    %v1451 = vlaneseq
    %v1452 = vshrl.u32 %v1451, 7
    %v1453 = vsub.s32 0, %v1452
    %v1454 = vrot.slane %v280, %v1453
    %v1471 = vunpack.c.l.b16 %v249
    %v1472 = vunpack.c.l.b16 %v250
    %v1473 = vunpack.c.l.b16 %v251
    %v1474 = vunpack.c.l.b16 %v252
    %v1475 = vunpack.c.l.b16 %v253
    %v1476 = vunpack.c.l.b16 %v254
    %v1477 = vunpack.c.l.b16 %v255
    %v1478 = vunpack.c.l.b16 %v256
    %v1479 = vunpack.c.l.b16 %v257
    %v1480 = vunpack.c.l.b16 %v258
    %v1481 = vunpack.c.l.b16 %v259
    %v1482 = vunpack.c.l.b16 %v260
    %v1483 = vunpack.c.l.b16 %v261
    %v1484 = vunpack.c.l.b16 %v262
    %v1485 = vunpack.c.l.b16 %v263
    %v1486 = vunpack.c.l.b16 %v264
    %v1487 = vpack.c.b16 %v1472, %v1471
    %v1488 = vpack.c.b16 %v1474, %v1473
    %v1489 = vpack.c.b16 %v1476, %v1475
    %v1490 = vpack.c.b16 %v1478, %v1477
    %v1491 = vpack.c.b16 %v1480, %v1479
    %v1492 = vpack.c.b16 %v1482, %v1481
    %v1493 = vpack.c.b16 %v1484, %v1483
    %v1494 = vpack.c.b16 %v1486, %v1485
    %1503 = vmatprep.subr.bf16.mxu0 0
    %1504 = vmatpush1.bf16.msra.mxu0 %v1487
    %1505 = vmatprep.subr.bf16.mxu0 0
    %1506 = vmatpush1.bf16.msra.mxu0 %v1488
    %1507 = vmatprep.subr.bf16.mxu0 0
    %1508 = vmatpush1.bf16.msra.mxu0 %v1489
    %1509 = vmatprep.subr.bf16.mxu0 0
    %1510 = vmatpush1.bf16.msra.mxu0 %v1490
    %1511 = vmatprep.subr.bf16.mxu0 0
    %1512 = vmatpush1.bf16.msra.mxu0 %v1491
    %1513 = vmatprep.subr.bf16.mxu0 0
    %1514 = vmatpush1.bf16.msra.mxu0 %v1492
    %1515 = vmatprep.subr.bf16.mxu0 0
    %1516 = vmatpush1.bf16.msra.mxu0 %v1493
    %1517 = vmatprep.subr.bf16.mxu0 0
    %1518 = vmatpush1.bf16.msra.mxu0 %v1494
    %1519 = vmatprep.subr.bf16.mxu0 0
    %1520 = vmatpush1.bf16.msra.mxu0 0
    %1521 = vmatprep.subr.bf16.mxu0 0
    %1522 = vmatpush1.bf16.msra.mxu0 0
    %1523 = vmatprep.subr.bf16.mxu0 0
    %1524 = vmatpush1.bf16.msra.mxu0 0
    %1525 = vmatprep.subr.bf16.mxu0 0
    %1526 = vmatpush1.bf16.msra.mxu0 0
    %1527 = vmatprep.subr.bf16.mxu0 0
    %1528 = vmatpush1.bf16.msra.mxu0 0
    %1529 = vmatprep.subr.bf16.mxu0 0
    %1530 = vmatpush1.bf16.msra.mxu0 0
    %1531 = vmatprep.subr.bf16.mxu0 0
    %1532 = vmatpush1.bf16.msra.mxu0 0
    %1533 = vmatprep.subr.bf16.mxu0 0
    %1534 = vmatpush1.bf16.msra.mxu0 0
    %1535 = vmatprep.mubr.bf16.mxu0 0
    %1536 = vmatmul.mubr.bf16.gmra.mrb[0].mxu0 %v1450
    %v1537 = vpop.f32.mrb[0].mxu0
    %v1538 = vadd.f32 %v1454, %v1537
    %v1539 = vpop.f32.mrb[0].mxu0
    %v1540 = vpop.f32.mrb[0].mxu0
    %v1541 = vadd.f32 %v1454, %v1540
    %v1542 = vpop.f32.mrb[0].mxu0
    %1543 = vdwg.mxu0
    %v1544 = vadd.f32 %v1538, %v1333
    %v1545 = vadd.f32 %v1541, %v1334
    %v1546 = vld [vmem:[%s9 + $0x90] sm:$0xf]
    %v1547 = vld [vmem:[%s9 + $0x94] sm:$0xf]
    %v1548 = vld [vmem:[%s9 + $0x98] sm:$0xf]
    %v1549 = vld [vmem:[%s9 + $0x9c] sm:$0xf]
    %v1550 = vld [vmem:[%s9 + $0xa0] sm:$0xf]
    %v1551 = vld [vmem:[%s9 + $0xa4] sm:$0xf]
    %v1552 = vld [vmem:[%s9 + $0xa8] sm:$0xf]
    %v1553 = vld [vmem:[%s9 + $0xac] sm:$0xf]
    %v1554 = vld [vmem:[%s9 + $0xb0] sm:$0xf]
    %v1555 = vld [vmem:[%s9 + $0xb4] sm:$0xf]
    %v1556 = vld [vmem:[%s9 + $0xb8] sm:$0xf]
    %v1557 = vld [vmem:[%s9 + $0xbc] sm:$0xf]
    %v1558 = vld [vmem:[%s9 + $0xc0] sm:$0xf]
    %v1559 = vld [vmem:[%s9 + $0xc4] sm:$0xf]
    %v1560 = vld [vmem:[%s9 + $0xc8] sm:$0xf]
    %v1561 = vld [vmem:[%s9 + $0xcc] sm:$0xf]
    %v1562 = vld [vmem:[%s9 + $0xd0] sm:$0xf]
    %v1563 = vld [vmem:[%s9 + $0xd4] sm:$0xf]
    %v1564 = vld [vmem:[%s9 + $0xd8] sm:$0xf]
    %v1565 = vld [vmem:[%s9 + $0xdc] sm:$0xf]
    %v1566 = vld [vmem:[%s10 + $0x10] sm:$0xf]
    %v1567 = vld [vmem:[%s10 + $0x14] sm:$0xf]
    %v1568 = vld [vmem:[%s10 + $0x18] sm:$0xf]
    %v1569 = vld [vmem:[%s10 + $0x1c] sm:$0xf]
    %v1570 = vld [vmem:[%s11 + $0x10] sm:$0xf]
    %v1571 = vld [vmem:[%s11 + $0x14] sm:$0xf]
    %v1572 = vld [vmem:[%s11 + $0x18] sm:$0xf]
    %v1573 = vld [vmem:[%s11 + $0x1c] sm:$0xf]
    %v1574 = vld [vmem:[%s12 + $0x10] sm:$0x1]
    %v1575 = vld [vmem:[%s12 + $0x11] sm:$0x1]
    %v1576 = vld [vmem:[%s12 + $0x12] sm:$0x1]
    %v1577 = vld [vmem:[%s12 + $0x13] sm:$0x1]
    %v1578 = vld [vmem:[%s12 + $0x14] sm:$0x1]
    %v1579 = vld [vmem:[%s12 + $0x15] sm:$0x1]
    %v1580 = vld [vmem:[%s12 + $0x16] sm:$0x1]
    %v1581 = vld [vmem:[%s12 + $0x17] sm:$0x1]
    %v1582 = vsel %vm281, %v1544, 0.0
    %1583 = vadd.xlane.f32.xlu0 %v1582
    %v1584 = vpop.xlane.xlu0 %1583
    %v1585 = vsel %vm281, %v1545, 0.0
    %1586 = vadd.xlane.f32.xlu0 %v1585
    %v1587 = vpop.xlane.xlu0 %1586
    %v1588 = vmul.f32 %v1584, %v288
    %v1589 = vmul.f32 %v1587, %v288
    %v1590 = vsub.f32 %v1544, %v1588
    %v1591 = vsub.f32 %v1545, %v1589
    %v1592 = vmul.f32 %v1590, %v1590
    %v1593 = vmul.f32 %v1591, %v1591
    %v1594 = vsel %vm281, %v1592, 0.0
    %1595 = vadd.xlane.f32.xlu0 %v1594
    %v1596 = vpop.xlane.xlu0 %1595
    %v1597 = vsel %vm281, %v1593, 0.0
    %1598 = vadd.xlane.f32.xlu0 %v1597
    %v1599 = vpop.xlane.xlu0 %1598
    %v1600 = vmul.f32 %v1596, %v288
    %v1601 = vmul.f32 %v1599, %v288
    %v1602 = vadd.f32 %v1600, 1e-05
    %v1603 = vadd.f32 %v1601, 1e-05
    %v1604 = vrsqrt.pop %v1602
    %v1605 = vrsqrt.pop %v1603
    %v1606 = vmul.f32 %v1590, %v1604
    %v1607 = vmul.f32 %v1591, %v1605
    %v1608 = vlaneseq
    %v1609 = vshrl.u32 %v1608, 7
    %v1610 = vsub.s32 0, %v1609
    %v1611 = vrot.slane %v1574, %v1610
    %v1612 = vmul.f32 %v1606, %v1611
    %v1613 = vmul.f32 %v1607, %v1611
    %v1614 = vlaneseq
    %v1615 = vshrl.u32 %v1614, 7
    %v1616 = vsub.s32 0, %v1615
    %v1617 = vrot.slane %v1575, %v1616
    %v1618 = vadd.f32 %v1612, %v1617
    %v1619 = vadd.f32 %v1613, %v1617
    %v1620 = vpack.c.bf16 %v1619, %v1618
    %v1621 = vlaneseq
    %v1622 = vshrl.u32 %v1621, 7
    %v1623 = vsub.s32 0, %v1622
    %v1624 = vrot.slane %v1576, %v1623
    %v1629 = vunpack.c.l.b16 %v1566
    %v1630 = vunpack.c.l.b16 %v1567
    %v1631 = vunpack.c.l.b16 %v1568
    %v1632 = vunpack.c.l.b16 %v1569
    %v1633 = vpack.c.b16 %v1630, %v1629
    %v1634 = vpack.c.b16 %v1632, %v1631
    %v1638 = vsel %vm281, %v1620, 0
    %1640 = vmatprep.subr.bf16.mxu0 0
    %1641 = vmatpush1.bf16.msra.mxu0 %v1633
    %1642 = vmatprep.subr.bf16.mxu0 0
    %1643 = vmatpush1.bf16.msra.mxu0 %v1634
    %1644 = vmatprep.subr.bf16.mxu0 0
    %1645 = vmatpush1.bf16.msra.mxu0 0
    %1646 = vmatprep.subr.bf16.mxu0 0
    %1647 = vmatpush1.bf16.msra.mxu0 0
    %1648 = vmatprep.subr.bf16.mxu0 0
    %1649 = vmatpush1.bf16.msra.mxu0 0
    %1650 = vmatprep.subr.bf16.mxu0 0
    %1651 = vmatpush1.bf16.msra.mxu0 0
    %1652 = vmatprep.subr.bf16.mxu0 0
    %1653 = vmatpush1.bf16.msra.mxu0 0
    %1654 = vmatprep.subr.bf16.mxu0 0
    %1655 = vmatpush1.bf16.msra.mxu0 0
    %1656 = vmatprep.subr.bf16.mxu0 0
    %1657 = vmatpush1.bf16.msra.mxu0 0
    %1658 = vmatprep.subr.bf16.mxu0 0
    %1659 = vmatpush1.bf16.msra.mxu0 0
    %1660 = vmatprep.subr.bf16.mxu0 0
    %1661 = vmatpush1.bf16.msra.mxu0 0
    %1662 = vmatprep.subr.bf16.mxu0 0
    %1663 = vmatpush1.bf16.msra.mxu0 0
    %1664 = vmatprep.subr.bf16.mxu0 0
    %1665 = vmatpush1.bf16.msra.mxu0 0
    %1666 = vmatprep.subr.bf16.mxu0 0
    %1667 = vmatpush1.bf16.msra.mxu0 0
    %1668 = vmatprep.subr.bf16.mxu0 0
    %1669 = vmatpush1.bf16.msra.mxu0 0
    %1670 = vmatprep.subr.bf16.mxu0 0
    %1671 = vmatpush1.bf16.msra.mxu0 0
    %1672 = vmatprep.mubr.bf16.mxu0 0
    %1673 = vmatmul.mubr.bf16.gmra.mrb[0].mxu0 %v1638
    %v1674 = vpop.f32.mrb[0].mxu0
    %v1675 = vadd.f32 %v1624, %v1674
    %v1676 = vpop.f32.mrb[0].mxu0
    %v1677 = vpop.f32.mrb[0].mxu0
    %v1678 = vadd.f32 %v1624, %v1677
    %v1679 = vpop.f32.mrb[0].mxu0
    %1680 = vdwg.mxu0
    %v1681 = vpack.c.bf16 %v1678, %v1675
    %1683 = vrot.lane.b32.xlu0 %v1681, 8
    %v1684 = vpop.permute.xlu0 %1683
    %1685 = vrot.lane.b32.xlu0 %v1681, 16
    %v1686 = vpop.permute.xlu0 %1685
    %1687 = vrot.lane.b32.xlu0 %v1681, 24
    %v1688 = vpop.permute.xlu0 %1687
    %1689 = vrot.lane.b32.xlu0 %v1681, 32
    %v1690 = vpop.permute.xlu0 %1689
    %v1693 = vsel %vm392, %v1681, %v1684
    %v1694 = vsel %vm396, %v1693, %v1684
    %v1696 = vsel %vm398, %v1694, %v1686
    %v1697 = vsel %vm281, %v1696, %v1686
    %v1699 = vsel %vm402, %v1697, %v1688
    %v1700 = vsel %vm405, %v1699, %v1688
    %v1702 = vsel %vm407, %v1700, %v1690
    %v1704 = vmul.bf16 %v1702, %v415
    %1705 = vrot.lane.b32.xlu0 %v1681, 96
    %v1706 = vpop.permute.xlu0 %1705
    %1707 = vrot.lane.b32.xlu0 %v1681, 104
    %v1708 = vpop.permute.xlu0 %1707
    %1709 = vrot.lane.b32.xlu0 %v1681, 112
    %v1710 = vpop.permute.xlu0 %1709
    %1711 = vrot.lane.b32.xlu0 %v1681, 120
    %v1712 = vpop.permute.xlu0 %1711
    %v1715 = vsel %vm392, %v1706, %v1708
    %v1717 = vsel %vm396, %v1715, %v1710
    %v1719 = vsel %vm398, %v1717, %v1712
    %v1720 = vsel %vm281, %v1719, %v1681
    %v1721 = vsel %vm402, %v1720, %v1684
    %v1722 = vsel %vm405, %v1721, %v1686
    %v1723 = vsel %vm407, %v1722, %v1688
    %1725 = vrot.lane.b32.xlu0 %v1681, 88
    %v1726 = vpop.permute.xlu0 %1725
    %v1728 = vsel %vm392, %v1726, %v1706
    %v1729 = vsel %vm396, %v1728, %v1708
    %v1730 = vsel %vm398, %v1729, %v1710
    %v1731 = vsel %vm281, %v1730, %v1712
    %v1732 = vsel %vm402, %v1731, %v1681
    %v1733 = vsel %vm405, %v1732, %v1684
    %v1734 = vsel %vm407, %v1733, %v1686
    %1736 = vrot.lane.b32.xlu0 %v1681, 80
    %v1737 = vpop.permute.xlu0 %1736
    %v1739 = vsel %vm392, %v1737, %v1726
    %v1740 = vsel %vm396, %v1739, %v1706
    %v1741 = vsel %vm398, %v1740, %v1708
    %v1742 = vsel %vm281, %v1741, %v1710
    %v1743 = vsel %vm402, %v1742, %v1712
    %v1744 = vsel %vm405, %v1743, %v1681
    %v1745 = vsel %vm407, %v1744, %v1684
    %1747 = vrot.lane.b32.xlu0 %v1681, 72
    %v1748 = vpop.permute.xlu0 %1747
    %v1750 = vsel %vm392, %v1748, %v1737
    %v1751 = vsel %vm396, %v1750, %v1726
    %v1752 = vsel %vm398, %v1751, %v1706
    %v1753 = vsel %vm281, %v1752, %v1708
    %v1754 = vsel %vm402, %v1753, %v1710
    %v1755 = vsel %vm405, %v1754, %v1712
    %v1756 = vsel %vm407, %v1755, %v1681
    %v1758 = vmul.bf16 %v1723, %v487
    %v1759 = vmul.bf16 %v1734, %v488
    %v1760 = vmul.bf16 %v1745, %v489
    %v1761 = vmul.bf16 %v1756, %v490
    %v1763 = vsel %vm499, %v1704, 0
    %1765 = vmatprep.subr.bf16.mxu0 0
    %1766 = vmatpush1.bf16.msra.mxu0 %v1758
    %1767 = vmatprep.subr.bf16.mxu0 0
    %1768 = vmatpush1.bf16.msra.mxu0 %v1759
    %1769 = vmatprep.subr.bf16.mxu0 0
    %1770 = vmatpush1.bf16.msra.mxu0 %v1760
    %1771 = vmatprep.subr.bf16.mxu0 0
    %1772 = vmatpush1.bf16.msra.mxu0 %v1761
    %1773 = vmatprep.subr.bf16.mxu0 0
    %1774 = vmatpush1.bf16.msra.mxu0 0
    %1775 = vmatprep.subr.bf16.mxu0 0
    %1776 = vmatpush1.bf16.msra.mxu0 0
    %1777 = vmatprep.subr.bf16.mxu0 0
    %1778 = vmatpush1.bf16.msra.mxu0 0
    %1779 = vmatprep.subr.bf16.mxu0 0
    %1780 = vmatpush1.bf16.msra.mxu0 0
    %1781 = vmatprep.subr.bf16.mxu0 0
    %1782 = vmatpush1.bf16.msra.mxu0 0
    %1783 = vmatprep.subr.bf16.mxu0 0
    %1784 = vmatpush1.bf16.msra.mxu0 0
    %1785 = vmatprep.subr.bf16.mxu0 0
    %1786 = vmatpush1.bf16.msra.mxu0 0
    %1787 = vmatprep.subr.bf16.mxu0 0
    %1788 = vmatpush1.bf16.msra.mxu0 0
    %1789 = vmatprep.subr.bf16.mxu0 0
    %1790 = vmatpush1.bf16.msra.mxu0 0
    %1791 = vmatprep.subr.bf16.mxu0 0
    %1792 = vmatpush1.bf16.msra.mxu0 0
    %1793 = vmatprep.subr.bf16.mxu0 0
    %1794 = vmatpush1.bf16.msra.mxu0 0
    %1795 = vmatprep.subr.bf16.mxu0 0
    %1796 = vmatpush1.bf16.msra.mxu0 0
    %1797 = vmatprep.mubr.bf16.mxu0 0
    %1798 = vmatmul.mubr.bf16.gmra.mrb[0].mxu0 %v1763
    %v1799 = vpop.f32.mrb[0].mxu0
    %v1800 = vadd.f32 0.0, %v1799
    %v1801 = vpop.f32.mrb[0].mxu0
    %v1802 = vpop.f32.mrb[0].mxu0
    %v1803 = vadd.f32 0.0, %v1802
    %v1804 = vpop.f32.mrb[0].mxu0
    %1805 = vdwg.mxu0
    %v1806 = vmul.f32 %v1800, 0.5
    %v1807 = vmul.f32 %v1803, 0.5
    %1808 = vrot.lane.b32.xlu0 %v1806, 64
    %v1809 = vpop.permute.xlu0 %1808
    %v1810 = vsel %vm548, %v1809, %v1806
    %1811 = vrot.lane.b32.xlu0 %v1807, 64
    %v1812 = vpop.permute.xlu0 %1811
    %v1813 = vsel %vm548, %v1812, %v1807
    %1814 = vrot.lane.b32.xlu0 %v1810, 64
    %v1815 = vpop.permute.xlu0 %1814
    %1816 = vrot.lane.b32.xlu0 %v1813, 64
    %v1817 = vpop.permute.xlu0 %1816
    %v1818 = vsel %vm548, %v1815, %v1806
    %v1819 = vsel %vm548, %v1817, %v1807
    %1822 = vrot.lane.b32.xlu0 %v1818, 127
    %v1823 = vpop.permute.xlu0 %1822
    %1824 = vrot.lane.b32.xlu0 %v1819, 127
    %v1825 = vpop.permute.xlu0 %1824
    %v1828 = vsel %vm562, %v1823, %v1806
    %v1829 = vsel %vm562, %v1825, %v1807
    %v1830 = vmax.f32 %v1806, %v1828
    %v1831 = vmax.f32 %v1807, %v1829
    %1832 = vrot.lane.b32.xlu0 %v1818, 65
    %v1833 = vpop.permute.xlu0 %1832
    %1834 = vrot.lane.b32.xlu0 %v1819, 65
    %v1835 = vpop.permute.xlu0 %1834
    %v1838 = vsel %vm577, %v1833, %v1806
    %v1839 = vsel %vm577, %v1835, %v1807
    %v1840 = vmax.f32 %v1806, %v1838
    %v1841 = vmax.f32 %v1807, %v1839
    %1842 = vrot.lane.b32.xlu0 %v1830, 64
    %v1843 = vpop.permute.xlu0 %1842
    %v1844 = vsel %vm548, %v1843, %v1830
    %1845 = vrot.lane.b32.xlu0 %v1831, 64
    %v1846 = vpop.permute.xlu0 %1845
    %v1847 = vsel %vm548, %v1846, %v1831
    %1848 = vrot.lane.b32.xlu0 %v1844, 64
    %v1849 = vpop.permute.xlu0 %1848
    %1850 = vrot.lane.b32.xlu0 %v1847, 64
    %v1851 = vpop.permute.xlu0 %1850
    %v1852 = vsel %vm548, %v1849, %v1830
    %v1853 = vsel %vm548, %v1851, %v1831
    %1856 = vrot.lane.b32.xlu0 %v1852, 126
    %v1857 = vpop.permute.xlu0 %1856
    %1858 = vrot.lane.b32.xlu0 %v1853, 126
    %v1859 = vpop.permute.xlu0 %1858
    %v1862 = vsel %vm603, %v1857, %v1830
    %v1863 = vsel %vm603, %v1859, %v1831
    %v1864 = vmax.f32 %v1830, %v1862
    %v1865 = vmax.f32 %v1831, %v1863
    %1866 = vrot.lane.b32.xlu0 %v1840, 64
    %v1867 = vpop.permute.xlu0 %1866
    %v1868 = vsel %vm548, %v1867, %v1840
    %1869 = vrot.lane.b32.xlu0 %v1841, 64
    %v1870 = vpop.permute.xlu0 %1869
    %v1871 = vsel %vm548, %v1870, %v1841
    %1872 = vrot.lane.b32.xlu0 %v1868, 64
    %v1873 = vpop.permute.xlu0 %1872
    %1874 = vrot.lane.b32.xlu0 %v1871, 64
    %v1875 = vpop.permute.xlu0 %1874
    %v1876 = vsel %vm548, %v1873, %v1840
    %v1877 = vsel %vm548, %v1875, %v1841
    %1880 = vrot.lane.b32.xlu0 %v1876, 66
    %v1881 = vpop.permute.xlu0 %1880
    %1882 = vrot.lane.b32.xlu0 %v1877, 66
    %v1883 = vpop.permute.xlu0 %1882
    %v1886 = vsel %vm630, %v1881, %v1840
    %v1887 = vsel %vm630, %v1883, %v1841
    %v1888 = vmax.f32 %v1840, %v1886
    %v1889 = vmax.f32 %v1841, %v1887
    %1890 = vrot.lane.b32.xlu0 %v1864, 64
    %v1891 = vpop.permute.xlu0 %1890
    %v1892 = vsel %vm548, %v1891, %v1864
    %1893 = vrot.lane.b32.xlu0 %v1865, 64
    %v1894 = vpop.permute.xlu0 %1893
    %v1895 = vsel %vm548, %v1894, %v1865
    %1896 = vrot.lane.b32.xlu0 %v1892, 64
    %v1897 = vpop.permute.xlu0 %1896
    %1898 = vrot.lane.b32.xlu0 %v1895, 64
    %v1899 = vpop.permute.xlu0 %1898
    %v1900 = vsel %vm548, %v1897, %v1864
    %v1901 = vsel %vm548, %v1899, %v1865
    %1904 = vrot.lane.b32.xlu0 %v1900, 124
    %v1905 = vpop.permute.xlu0 %1904
    %1906 = vrot.lane.b32.xlu0 %v1901, 124
    %v1907 = vpop.permute.xlu0 %1906
    %v1910 = vsel %vm658, %v1905, %v1864
    %v1911 = vsel %vm658, %v1907, %v1865
    %v1912 = vmax.f32 %v1864, %v1910
    %v1913 = vmax.f32 %v1865, %v1911
    %1914 = vrot.lane.b32.xlu0 %v1888, 64
    %v1915 = vpop.permute.xlu0 %1914
    %v1916 = vsel %vm548, %v1915, %v1888
    %1917 = vrot.lane.b32.xlu0 %v1889, 64
    %v1918 = vpop.permute.xlu0 %1917
    %v1919 = vsel %vm548, %v1918, %v1889
    %1920 = vrot.lane.b32.xlu0 %v1916, 64
    %v1921 = vpop.permute.xlu0 %1920
    %1922 = vrot.lane.b32.xlu0 %v1919, 64
    %v1923 = vpop.permute.xlu0 %1922
    %v1924 = vsel %vm548, %v1921, %v1888
    %v1925 = vsel %vm548, %v1923, %v1889
    %1928 = vrot.lane.b32.xlu0 %v1924, 68
    %v1929 = vpop.permute.xlu0 %1928
    %1930 = vrot.lane.b32.xlu0 %v1925, 68
    %v1931 = vpop.permute.xlu0 %1930
    %v1934 = vsel %vm685, %v1929, %v1888
    %v1935 = vsel %vm685, %v1931, %v1889
    %v1936 = vmax.f32 %v1888, %v1934
    %v1937 = vmax.f32 %v1889, %v1935
    %v1938 = vmax.f32 %v1912, %v1936
    %v1939 = vmax.f32 %v1913, %v1937
    %v1940 = vsub.f32 %v1806, %v1938
    %v1941 = vsub.f32 %v1807, %v1939
    %v1942 = vmul.f32 %v1940, 1.442695
    %v1943 = vpow.pop %v1942
    %v1944 = vmul.f32 %v1941, 1.442695
    %v1945 = vpow.pop %v1944
    %v1947 = vsel %vm499, %v1943, 0
    %v1950 = vsel %vm499, %v1945, 0
    %1952 = vmatprep.subr.mxu0 0.0
    %1953 = vmatpush1.msra.mxu0 %v56
    %1954 = vmatprep.subr.mxu0 0.0
    %1955 = vmatpush1.msra.mxu0 %v57
    %1956 = vmatprep.subr.mxu0 0.0
    %1957 = vmatpush1.msra.mxu0 %v58
    %1958 = vmatprep.subr.mxu0 0.0
    %1959 = vmatpush1.msra.mxu0 %v59
    %1960 = vmatprep.subr.mxu0 0.0
    %1961 = vmatpush1.msra.mxu0 %v60
    %1962 = vmatprep.subr.mxu0 0.0
    %1963 = vmatpush1.msra.mxu0 %v61
    %1964 = vmatprep.subr.mxu0 0.0
    %1965 = vmatpush1.msra.mxu0 %v62
    %1966 = vmatprep.subr.mxu0 0.0
    %1967 = vmatpush1.msra.mxu0 %v63
    %1968 = vmatprep.subr.mxu0 0.0
    %1969 = vmatpush1.msra.mxu0 0.0
    %1970 = vmatprep.subr.mxu0 0.0
    %1971 = vmatpush1.msra.mxu0 0.0
    %1972 = vmatprep.subr.mxu0 0.0
    %1973 = vmatpush1.msra.mxu0 0.0
    %1974 = vmatprep.subr.mxu0 0.0
    %1975 = vmatpush1.msra.mxu0 0.0
    %1976 = vmatprep.subr.mxu0 0.0
    %1977 = vmatpush1.msra.mxu0 0.0
    %1978 = vmatprep.subr.mxu0 0.0
    %1979 = vmatpush1.msra.mxu0 0.0
    %1980 = vmatprep.subr.mxu0 0.0
    %1981 = vmatpush1.msra.mxu0 0.0
    %1982 = vmatprep.subr.mxu0 0.0
    %1983 = vmatpush1.msra.mxu0 0.0
    %1984 = vmatprep.subr.mxu0 0.0
    %1985 = vmatpush1.msra.mxu0 0.0
    %1986 = vmatprep.subr.mxu0 0.0
    %1987 = vmatpush1.msra.mxu0 0.0
    %1988 = vmatprep.subr.mxu0 0.0
    %1989 = vmatpush1.msra.mxu0 0.0
    %1990 = vmatprep.subr.mxu0 0.0
    %1991 = vmatpush1.msra.mxu0 0.0
    %1992 = vmatprep.subr.mxu0 0.0
    %1993 = vmatpush1.msra.mxu0 0.0
    %1994 = vmatprep.subr.mxu0 0.0
    %1995 = vmatpush1.msra.mxu0 0.0
    %1996 = vmatprep.subr.mxu0 0.0
    %1997 = vmatpush1.msra.mxu0 0.0
    %1998 = vmatprep.subr.mxu0 0.0
    %1999 = vmatpush1.msra.mxu0 0.0
    %2000 = vmatprep.subr.mxu0 0.0
    %2001 = vmatpush1.msra.mxu0 0.0
    %2002 = vmatprep.subr.mxu0 0.0
    %2003 = vmatpush1.msra.mxu0 0.0
    %2004 = vmatprep.subr.mxu0 0.0
    %2005 = vmatpush1.msra.mxu0 0.0
    %2006 = vmatprep.subr.mxu0 0.0
    %2007 = vmatpush1.msra.mxu0 0.0
    %2008 = vmatprep.subr.mxu0 0.0
    %2009 = vmatpush1.msra.mxu0 0.0
    %2010 = vmatprep.subr.mxu0 0.0
    %2011 = vmatpush1.msra.mxu0 0.0
    %2012 = vmatprep.subr.mxu0 0.0
    %2013 = vmatpush1.msra.mxu0 0.0
    %2014 = vmatprep.subr.mxu0 0.0
    %2015 = vmatpush1.msra.mxu0 0.0
    %2016 = vmatprep.mubr.f32.mxu0 0.0
    %2017 = vmatmul.mubr.f32.gmra.mrb[0].mxu0 %v1947
    %v2018 = vpop.f32.mrb[0].mxu0
    %v2019 = vadd.f32 0.0, %v2018
    %v2020 = vpop.f32.mrb[0].mxu0
    %2021 = vmatprep.mubr.f32.mxu0 0.0
    %2022 = vmatmul.mubr.f32.gmra.mrb[0].mxu0 %v1950
    %v2023 = vpop.f32.mrb[0].mxu0
    %v2024 = vadd.f32 0.0, %v2023
    %v2025 = vpop.f32.mrb[0].mxu0
    %2026 = vdwg.mxu0
    %v2027 = vrcp.pop %v2019
    %v2028 = vmul.f32 %v1943, %v2027
    %v2029 = vrcp.pop %v2024
    %v2030 = vmul.f32 %v1945, %v2029
    %v2031 = vpack.c.bf16 %v2030, %v2028
    %2033 = vrot.lane.b32.xlu0 %v2031, 64
    %v2034 = vpop.permute.xlu0 %2033
    %v2037 = vsel %vm499, %v2031, %v2034
    %v2039 = vmul.bf16 %v2037, %v803
    %2040 = vrot.lane.b32.xlu0 %v1681, 64
    %v2041 = vpop.permute.xlu0 %2040
    %2043 = vmatprep.subr.bf16.mxu0 0
    %2044 = vmatpush1.bf16.msra.mxu0 %v2041
    %2045 = vmatprep.subr.bf16.mxu0 0
    %2046 = vmatpush1.bf16.msra.mxu0 0
    %2047 = vmatprep.subr.bf16.mxu0 0
    %2048 = vmatpush1.bf16.msra.mxu0 0
    %2049 = vmatprep.subr.bf16.mxu0 0
    %2050 = vmatpush1.bf16.msra.mxu0 0
    %2051 = vmatprep.subr.bf16.mxu0 0
    %2052 = vmatpush1.bf16.msra.mxu0 0
    %2053 = vmatprep.subr.bf16.mxu0 0
    %2054 = vmatpush1.bf16.msra.mxu0 0
    %2055 = vmatprep.subr.bf16.mxu0 0
    %2056 = vmatpush1.bf16.msra.mxu0 0
    %2057 = vmatprep.subr.bf16.mxu0 0
    %2058 = vmatpush1.bf16.msra.mxu0 0
    %2059 = vmatprep.subr.bf16.mxu0 0
    %2060 = vmatpush1.bf16.msra.mxu0 0
    %2061 = vmatprep.subr.bf16.mxu0 0
    %2062 = vmatpush1.bf16.msra.mxu0 0
    %2063 = vmatprep.subr.bf16.mxu0 0
    %2064 = vmatpush1.bf16.msra.mxu0 0
    %2065 = vmatprep.subr.bf16.mxu0 0
    %2066 = vmatpush1.bf16.msra.mxu0 0
    %2067 = vmatprep.subr.bf16.mxu0 0
    %2068 = vmatpush1.bf16.msra.mxu0 0
    %2069 = vmatprep.subr.bf16.mxu0 0
    %2070 = vmatpush1.bf16.msra.mxu0 0
    %2071 = vmatprep.subr.bf16.mxu0 0
    %2072 = vmatpush1.bf16.msra.mxu0 0
    %2073 = vmatprep.subr.bf16.mxu0 0
    %2074 = vmatpush1.bf16.msra.mxu0 0
    %2075 = vmatprep.mubr.bf16.mxu0 0
    %2076 = vmatmul.mubr.bf16.gmra.mrb[0].mxu0 %v850
    %v2077 = vpop.f32.mrb[0].mxu0
    %v2078 = vadd.f32 0.0, %v2077
    %v2079 = vpop.f32.mrb[0].mxu0
    %v2080 = vpop.f32.mrb[0].mxu0
    %v2081 = vadd.f32 0.0, %v2080
    %v2082 = vpop.f32.mrb[0].mxu0
    %2083 = vmatprep.mubr.bf16.mxu0 0
    %2084 = vmatmul.mubr.bf16.gmra.mrb[0].mxu0 %v853
    %v2085 = vpop.f32.mrb[0].mxu0
    %v2086 = vadd.f32 0.0, %v2085
    %v2087 = vpop.f32.mrb[0].mxu0
    %v2088 = vpop.f32.mrb[0].mxu0
    %v2089 = vadd.f32 0.0, %v2088
    %v2090 = vpop.f32.mrb[0].mxu0
    %2091 = vmatprep.mubr.bf16.mxu0 0
    %2092 = vmatmul.mubr.bf16.gmra.mrb[0].mxu0 %v856
    %v2093 = vpop.f32.mrb[0].mxu0
    %v2094 = vadd.f32 0.0, %v2093
    %v2095 = vpop.f32.mrb[0].mxu0
    %v2096 = vpop.f32.mrb[0].mxu0
    %v2097 = vadd.f32 0.0, %v2096
    %v2098 = vpop.f32.mrb[0].mxu0
    %2099 = vmatprep.mubr.bf16.mxu0 0
    %2100 = vmatmul.mubr.bf16.gmra.mrb[0].mxu0 %v859
    %v2101 = vpop.f32.mrb[0].mxu0
    %v2102 = vadd.f32 0.0, %v2101
    %v2103 = vpop.f32.mrb[0].mxu0
    %v2104 = vpop.f32.mrb[0].mxu0
    %v2105 = vadd.f32 0.0, %v2104
    %v2106 = vpop.f32.mrb[0].mxu0
    %2107 = vmatprep.mubr.bf16.mxu0 0
    %2108 = vmatmul.mubr.bf16.gmra.mrb[0].mxu0 %v862
    %v2109 = vpop.f32.mrb[0].mxu0
    %v2110 = vadd.f32 0.0, %v2109
    %v2111 = vpop.f32.mrb[0].mxu0
    %v2112 = vpop.f32.mrb[0].mxu0
    %v2113 = vadd.f32 0.0, %v2112
    %v2114 = vpop.f32.mrb[0].mxu0
    %2115 = vmatprep.mubr.bf16.mxu0 0
    %2116 = vmatmul.mubr.bf16.gmra.mrb[0].mxu0 %v865
    %v2117 = vpop.f32.mrb[0].mxu0
    %v2118 = vadd.f32 0.0, %v2117
    %v2119 = vpop.f32.mrb[0].mxu0
    %v2120 = vpop.f32.mrb[0].mxu0
    %v2121 = vadd.f32 0.0, %v2120
    %v2122 = vpop.f32.mrb[0].mxu0
    %2123 = vmatprep.mubr.bf16.mxu0 0
    %2124 = vmatmul.mubr.bf16.gmra.mrb[0].mxu0 %v868
    %v2125 = vpop.f32.mrb[0].mxu0
    %v2126 = vadd.f32 0.0, %v2125
    %v2127 = vpop.f32.mrb[0].mxu0
    %v2128 = vpop.f32.mrb[0].mxu0
    %v2129 = vadd.f32 0.0, %v2128
    %v2130 = vpop.f32.mrb[0].mxu0
    %2131 = vmatprep.mubr.bf16.mxu0 0
    %2132 = vmatmul.mubr.bf16.gmra.mrb[0].mxu0 %v871
    %v2133 = vpop.f32.mrb[0].mxu0
    %v2134 = vadd.f32 0.0, %v2133
    %v2135 = vpop.f32.mrb[0].mxu0
    %v2136 = vpop.f32.mrb[0].mxu0
    %v2137 = vadd.f32 0.0, %v2136
    %v2138 = vpop.f32.mrb[0].mxu0
    %2139 = vdwg.mxu0
    %v2140 = vpack.c.bf16 %v2081, %v2078
    %v2141 = vpack.c.bf16 %v2089, %v2086
    %v2142 = vpack.c.bf16 %v2097, %v2094
    %v2143 = vpack.c.bf16 %v2105, %v2102
    %v2144 = vpack.c.bf16 %v2113, %v2110
    %v2145 = vpack.c.bf16 %v2121, %v2118
    %v2146 = vpack.c.bf16 %v2129, %v2126
    %v2147 = vpack.c.bf16 %v2137, %v2134
    %v2148 = vmul.bf16 %v2140, %v1010
    %v2149 = vmul.bf16 %v2141, %v1011
    %v2150 = vmul.bf16 %v2142, %v1012
    %v2151 = vmul.bf16 %v2143, %v1013
    %v2152 = vmul.bf16 %v2144, %v1014
    %v2153 = vmul.bf16 %v2145, %v1015
    %v2154 = vmul.bf16 %v2146, %v1016
    %v2155 = vmul.bf16 %v2147, %v1017
    %v2157 = vsel %vm281, %v2148, 0
    %v2160 = vsel %vm281, %v2149, 0
    %v2163 = vsel %vm281, %v2150, 0
    %v2166 = vsel %vm281, %v2151, 0
    %v2169 = vsel %vm281, %v2152, 0
    %v2172 = vsel %vm281, %v2153, 0
    %v2175 = vsel %vm281, %v2154, 0
    %v2178 = vsel %vm281, %v2155, 0
    %2180 = vmatprep.subr.bf16.mxu0 0
    %2181 = vmatpush1.bf16.msra.mxu0 %v1042
    %2182 = vmatprep.subr.bf16.mxu0 0
    %2183 = vmatpush1.bf16.msra.mxu0 %v1043
    %2184 = vmatprep.subr.bf16.mxu0 0
    %2185 = vmatpush1.bf16.msra.mxu0 0
    %2186 = vmatprep.subr.bf16.mxu0 0
    %2187 = vmatpush1.bf16.msra.mxu0 0
    %2188 = vmatprep.subr.bf16.mxu0 0
    %2189 = vmatpush1.bf16.msra.mxu0 0
    %2190 = vmatprep.subr.bf16.mxu0 0
    %2191 = vmatpush1.bf16.msra.mxu0 0
    %2192 = vmatprep.subr.bf16.mxu0 0
    %2193 = vmatpush1.bf16.msra.mxu0 0
    %2194 = vmatprep.subr.bf16.mxu0 0
    %2195 = vmatpush1.bf16.msra.mxu0 0
    %2196 = vmatprep.subr.bf16.mxu0 0
    %2197 = vmatpush1.bf16.msra.mxu0 0
    %2198 = vmatprep.subr.bf16.mxu0 0
    %2199 = vmatpush1.bf16.msra.mxu0 0
    %2200 = vmatprep.subr.bf16.mxu0 0
    %2201 = vmatpush1.bf16.msra.mxu0 0
    %2202 = vmatprep.subr.bf16.mxu0 0
    %2203 = vmatpush1.bf16.msra.mxu0 0
    %2204 = vmatprep.subr.bf16.mxu0 0
    %2205 = vmatpush1.bf16.msra.mxu0 0
    %2206 = vmatprep.subr.bf16.mxu0 0
    %2207 = vmatpush1.bf16.msra.mxu0 0
    %2208 = vmatprep.subr.bf16.mxu0 0
    %2209 = vmatpush1.bf16.msra.mxu0 0
    %2210 = vmatprep.subr.bf16.mxu0 0
    %2211 = vmatpush1.bf16.msra.mxu0 0
    %2212 = vmatprep.mubr.bf16.mxu0 0
    %2213 = vmatmul.mubr.bf16.gmra.mrb[0].mxu0 %v2157
    %v2214 = vpop.f32.mrb[0].mxu0
    %v2215 = vadd.f32 0.0, %v2214
    %v2216 = vpop.f32.mrb[0].mxu0
    %v2217 = vpop.f32.mrb[0].mxu0
    %v2218 = vadd.f32 0.0, %v2217
    %v2219 = vpop.f32.mrb[0].mxu0
    %2220 = vmatprep.mubr.bf16.mxu0 0
    %2221 = vmatmul.mubr.bf16.gmra.mrb[0].mxu0 %v2160
    %v2222 = vpop.f32.mrb[0].mxu0
    %v2223 = vadd.f32 0.0, %v2222
    %v2224 = vpop.f32.mrb[0].mxu0
    %v2225 = vpop.f32.mrb[0].mxu0
    %v2226 = vadd.f32 0.0, %v2225
    %v2227 = vpop.f32.mrb[0].mxu0
    %2228 = vmatprep.mubr.bf16.mxu0 0
    %2229 = vmatmul.mubr.bf16.gmra.mrb[0].mxu0 %v2163
    %v2230 = vpop.f32.mrb[0].mxu0
    %v2231 = vadd.f32 0.0, %v2230
    %v2232 = vpop.f32.mrb[0].mxu0
    %v2233 = vpop.f32.mrb[0].mxu0
    %v2234 = vadd.f32 0.0, %v2233
    %v2235 = vpop.f32.mrb[0].mxu0
    %2236 = vmatprep.mubr.bf16.mxu0 0
    %2237 = vmatmul.mubr.bf16.gmra.mrb[0].mxu0 %v2166
    %v2238 = vpop.f32.mrb[0].mxu0
    %v2239 = vadd.f32 0.0, %v2238
    %v2240 = vpop.f32.mrb[0].mxu0
    %v2241 = vpop.f32.mrb[0].mxu0
    %v2242 = vadd.f32 0.0, %v2241
    %v2243 = vpop.f32.mrb[0].mxu0
    %2244 = vmatprep.mubr.bf16.mxu0 0
    %2245 = vmatmul.mubr.bf16.gmra.mrb[0].mxu0 %v2169
    %v2246 = vpop.f32.mrb[0].mxu0
    %v2247 = vadd.f32 0.0, %v2246
    %v2248 = vpop.f32.mrb[0].mxu0
    %v2249 = vpop.f32.mrb[0].mxu0
    %v2250 = vadd.f32 0.0, %v2249
    %v2251 = vpop.f32.mrb[0].mxu0
    %2252 = vmatprep.mubr.bf16.mxu0 0
    %2253 = vmatmul.mubr.bf16.gmra.mrb[0].mxu0 %v2172
    %v2254 = vpop.f32.mrb[0].mxu0
    %v2255 = vadd.f32 0.0, %v2254
    %v2256 = vpop.f32.mrb[0].mxu0
    %v2257 = vpop.f32.mrb[0].mxu0
    %v2258 = vadd.f32 0.0, %v2257
    %v2259 = vpop.f32.mrb[0].mxu0
    %2260 = vmatprep.mubr.bf16.mxu0 0
    %2261 = vmatmul.mubr.bf16.gmra.mrb[0].mxu0 %v2175
    %v2262 = vpop.f32.mrb[0].mxu0
    %v2263 = vadd.f32 0.0, %v2262
    %v2264 = vpop.f32.mrb[0].mxu0
    %v2265 = vpop.f32.mrb[0].mxu0
    %v2266 = vadd.f32 0.0, %v2265
    %v2267 = vpop.f32.mrb[0].mxu0
    %2268 = vmatprep.mubr.bf16.mxu0 0
    %2269 = vmatmul.mubr.bf16.gmra.mrb[0].mxu0 %v2178
    %v2270 = vpop.f32.mrb[0].mxu0
    %v2271 = vadd.f32 0.0, %v2270
    %v2272 = vpop.f32.mrb[0].mxu0
    %v2273 = vpop.f32.mrb[0].mxu0
    %v2274 = vadd.f32 0.0, %v2273
    %v2275 = vpop.f32.mrb[0].mxu0
    %2276 = vdwg.mxu0
    %v2277 = vpack.c.bf16 %v2218, %v2215
    %v2278 = vpack.c.bf16 %v2226, %v2223
    %v2279 = vpack.c.bf16 %v2234, %v2231
    %v2280 = vpack.c.bf16 %v2242, %v2239
    %v2281 = vpack.c.bf16 %v2250, %v2247
    %v2282 = vpack.c.bf16 %v2258, %v2255
    %v2283 = vpack.c.bf16 %v2266, %v2263
    %v2284 = vpack.c.bf16 %v2274, %v2271
    %v2285 = vmul.bf16 %v2277, %v1207
    %v2286 = vmul.bf16 %v2278, %v1208
    %v2287 = vmul.bf16 %v2279, %v1209
    %v2288 = vmul.bf16 %v2280, %v1210
    %v2289 = vmul.bf16 %v2281, %v1211
    %v2290 = vmul.bf16 %v2282, %v1212
    %v2291 = vmul.bf16 %v2283, %v1213
    %v2292 = vmul.bf16 %v2284, %v1214
    %2293 = vmatprep.subr.bf16.mxu0 0
    %2294 = vmatpush1.bf16.msra.mxu0 %v2285
    %2295 = vmatprep.subr.bf16.mxu0 0
    %2296 = vmatpush1.bf16.msra.mxu0 %v2286
    %2297 = vmatprep.subr.bf16.mxu0 0
    %2298 = vmatpush1.bf16.msra.mxu0 %v2287
    %2299 = vmatprep.subr.bf16.mxu0 0
    %2300 = vmatpush1.bf16.msra.mxu0 %v2288
    %2301 = vmatprep.subr.bf16.mxu0 0
    %2302 = vmatpush1.bf16.msra.mxu0 %v2289
    %2303 = vmatprep.subr.bf16.mxu0 0
    %2304 = vmatpush1.bf16.msra.mxu0 %v2290
    %2305 = vmatprep.subr.bf16.mxu0 0
    %2306 = vmatpush1.bf16.msra.mxu0 %v2291
    %2307 = vmatprep.subr.bf16.mxu0 0
    %2308 = vmatpush1.bf16.msra.mxu0 %v2292
    %2309 = vmatprep.subr.bf16.mxu0 0
    %2310 = vmatpush1.bf16.msra.mxu0 0
    %2311 = vmatprep.subr.bf16.mxu0 0
    %2312 = vmatpush1.bf16.msra.mxu0 0
    %2313 = vmatprep.subr.bf16.mxu0 0
    %2314 = vmatpush1.bf16.msra.mxu0 0
    %2315 = vmatprep.subr.bf16.mxu0 0
    %2316 = vmatpush1.bf16.msra.mxu0 0
    %2317 = vmatprep.subr.bf16.mxu0 0
    %2318 = vmatpush1.bf16.msra.mxu0 0
    %2319 = vmatprep.subr.bf16.mxu0 0
    %2320 = vmatpush1.bf16.msra.mxu0 0
    %2321 = vmatprep.subr.bf16.mxu0 0
    %2322 = vmatpush1.bf16.msra.mxu0 0
    %2323 = vmatprep.subr.bf16.mxu0 0
    %2324 = vmatpush1.bf16.msra.mxu0 0
    %2325 = vmatprep.mubr.bf16.mxu0 0
    %2326 = vmatmul.mubr.bf16.gmra.mrb[0].mxu0 %v2039
    %v2327 = vpop.f32.mrb[0].mxu0
    %v2328 = vadd.f32 0.0, %v2327
    %v2329 = vpop.f32.mrb[0].mxu0
    %v2330 = vpop.f32.mrb[0].mxu0
    %v2331 = vadd.f32 0.0, %v2330
    %v2332 = vpop.f32.mrb[0].mxu0
    %2333 = vdwg.mxu0
    %v2334 = vpack.c.bf16 %v2331, %v2328
    %v2335 = vlaneseq
    %v2336 = vshrl.u32 %v2335, 7
    %v2337 = vsub.s32 0, %v2336
    %v2338 = vrot.slane %v1577, %v2337
    %v2343 = vunpack.c.l.b16 %v1546
    %v2344 = vunpack.c.l.b16 %v1547
    %v2345 = vunpack.c.l.b16 %v1548
    %v2346 = vunpack.c.l.b16 %v1549
    %v2347 = vpack.c.b16 %v2344, %v2343
    %v2348 = vpack.c.b16 %v2346, %v2345
    %v2352 = vsel %vm281, %v2334, 0
    %2354 = vmatprep.subr.bf16.mxu0 0
    %2355 = vmatpush1.bf16.msra.mxu0 %v2347
    %2356 = vmatprep.subr.bf16.mxu0 0
    %2357 = vmatpush1.bf16.msra.mxu0 %v2348
    %2358 = vmatprep.subr.bf16.mxu0 0
    %2359 = vmatpush1.bf16.msra.mxu0 0
    %2360 = vmatprep.subr.bf16.mxu0 0
    %2361 = vmatpush1.bf16.msra.mxu0 0
    %2362 = vmatprep.subr.bf16.mxu0 0
    %2363 = vmatpush1.bf16.msra.mxu0 0
    %2364 = vmatprep.subr.bf16.mxu0 0
    %2365 = vmatpush1.bf16.msra.mxu0 0
    %2366 = vmatprep.subr.bf16.mxu0 0
    %2367 = vmatpush1.bf16.msra.mxu0 0
    %2368 = vmatprep.subr.bf16.mxu0 0
    %2369 = vmatpush1.bf16.msra.mxu0 0
    %2370 = vmatprep.subr.bf16.mxu0 0
    %2371 = vmatpush1.bf16.msra.mxu0 0
    %2372 = vmatprep.subr.bf16.mxu0 0
    %2373 = vmatpush1.bf16.msra.mxu0 0
    %2374 = vmatprep.subr.bf16.mxu0 0
    %2375 = vmatpush1.bf16.msra.mxu0 0
    %2376 = vmatprep.subr.bf16.mxu0 0
    %2377 = vmatpush1.bf16.msra.mxu0 0
    %2378 = vmatprep.subr.bf16.mxu0 0
    %2379 = vmatpush1.bf16.msra.mxu0 0
    %2380 = vmatprep.subr.bf16.mxu0 0
    %2381 = vmatpush1.bf16.msra.mxu0 0
    %2382 = vmatprep.subr.bf16.mxu0 0
    %2383 = vmatpush1.bf16.msra.mxu0 0
    %2384 = vmatprep.subr.bf16.mxu0 0
    %2385 = vmatpush1.bf16.msra.mxu0 0
    %2386 = vmatprep.mubr.bf16.mxu0 0
    %2387 = vmatmul.mubr.bf16.gmra.mrb[0].mxu0 %v2352
    %v2388 = vpop.f32.mrb[0].mxu0
    %v2389 = vadd.f32 %v2338, %v2388
    %v2390 = vpop.f32.mrb[0].mxu0
    %v2391 = vpop.f32.mrb[0].mxu0
    %v2392 = vadd.f32 %v2338, %v2391
    %v2393 = vpop.f32.mrb[0].mxu0
    %2394 = vdwg.mxu0
    %v2395 = vadd.f32 %v2389, %v1544
    %v2396 = vadd.f32 %v2392, %v1545
    %v2397 = vsel %vm281, %v2395, 0.0
    %2398 = vadd.xlane.f32.xlu0 %v2397
    %v2399 = vpop.xlane.xlu0 %2398
    %v2400 = vsel %vm281, %v2396, 0.0
    %2401 = vadd.xlane.f32.xlu0 %v2400
    %v2402 = vpop.xlane.xlu0 %2401
    %v2403 = vmul.f32 %v2399, %v288
    %v2404 = vmul.f32 %v2402, %v288
    %v2405 = vsub.f32 %v2395, %v2403
    %v2406 = vsub.f32 %v2396, %v2404
    %v2407 = vmul.f32 %v2405, %v2405
    %v2408 = vmul.f32 %v2406, %v2406
    %v2409 = vsel %vm281, %v2407, 0.0
    %2410 = vadd.xlane.f32.xlu0 %v2409
    %v2411 = vpop.xlane.xlu0 %2410
    %v2412 = vsel %vm281, %v2408, 0.0
    %2413 = vadd.xlane.f32.xlu0 %v2412
    %v2414 = vpop.xlane.xlu0 %2413
    %v2415 = vmul.f32 %v2411, %v288
    %v2416 = vmul.f32 %v2414, %v288
    %v2417 = vadd.f32 %v2415, 1e-05
    %v2418 = vadd.f32 %v2416, 1e-05
    %v2419 = vrsqrt.pop %v2417
    %v2420 = vrsqrt.pop %v2418
    %v2421 = vmul.f32 %v2405, %v2419
    %v2422 = vmul.f32 %v2406, %v2420
    %v2423 = vlaneseq
    %v2424 = vshrl.u32 %v2423, 7
    %v2425 = vsub.s32 0, %v2424
    %v2426 = vrot.slane %v1578, %v2425
    %v2427 = vmul.f32 %v2421, %v2426
    %v2428 = vmul.f32 %v2422, %v2426
    %v2429 = vlaneseq
    %v2430 = vshrl.u32 %v2429, 7
    %v2431 = vsub.s32 0, %v2430
    %v2432 = vrot.slane %v1579, %v2431
    %v2433 = vadd.f32 %v2427, %v2432
    %v2434 = vadd.f32 %v2428, %v2432
    %v2435 = vpack.c.bf16 %v2434, %v2433
    %v2436 = vlaneseq
    %v2437 = vshrl.u32 %v2436, 7
    %v2438 = vsub.s32 0, %v2437
    %v2439 = vrot.slane %v1580, %v2438
    %v2444 = vunpack.c.l.b16 %v1570
    %v2445 = vunpack.c.l.b16 %v1571
    %v2446 = vunpack.c.l.b16 %v1572
    %v2447 = vunpack.c.l.b16 %v1573
    %v2448 = vpack.c.b16 %v2445, %v2444
    %v2449 = vpack.c.b16 %v2447, %v2446
    %v2453 = vsel %vm281, %v2435, 0
    %2455 = vmatprep.subr.bf16.mxu0 0
    %2456 = vmatpush1.bf16.msra.mxu0 %v2448
    %2457 = vmatprep.subr.bf16.mxu0 0
    %2458 = vmatpush1.bf16.msra.mxu0 %v2449
    %2459 = vmatprep.subr.bf16.mxu0 0
    %2460 = vmatpush1.bf16.msra.mxu0 0
    %2461 = vmatprep.subr.bf16.mxu0 0
    %2462 = vmatpush1.bf16.msra.mxu0 0
    %2463 = vmatprep.subr.bf16.mxu0 0
    %2464 = vmatpush1.bf16.msra.mxu0 0
    %2465 = vmatprep.subr.bf16.mxu0 0
    %2466 = vmatpush1.bf16.msra.mxu0 0
    %2467 = vmatprep.subr.bf16.mxu0 0
    %2468 = vmatpush1.bf16.msra.mxu0 0
    %2469 = vmatprep.subr.bf16.mxu0 0
    %2470 = vmatpush1.bf16.msra.mxu0 0
    %2471 = vmatprep.subr.bf16.mxu0 0
    %2472 = vmatpush1.bf16.msra.mxu0 0
    %2473 = vmatprep.subr.bf16.mxu0 0
    %2474 = vmatpush1.bf16.msra.mxu0 0
    %2475 = vmatprep.subr.bf16.mxu0 0
    %2476 = vmatpush1.bf16.msra.mxu0 0
    %2477 = vmatprep.subr.bf16.mxu0 0
    %2478 = vmatpush1.bf16.msra.mxu0 0
    %2479 = vmatprep.subr.bf16.mxu0 0
    %2480 = vmatpush1.bf16.msra.mxu0 0
    %2481 = vmatprep.subr.bf16.mxu0 0
    %2482 = vmatpush1.bf16.msra.mxu0 0
    %2483 = vmatprep.subr.bf16.mxu0 0
    %2484 = vmatpush1.bf16.msra.mxu0 0
    %2485 = vmatprep.subr.bf16.mxu0 0
    %2486 = vmatpush1.bf16.msra.mxu0 0
    %2487 = vmatprep.mubr.bf16.mxu0 0
    %2488 = vmatmul.mubr.bf16.gmra.mrb[0].mxu0 %v2453
    %v2489 = vpop.f32.mrb[0].mxu0
    %v2490 = vadd.f32 %v2439, %v2489
    %v2491 = vpop.f32.mrb[0].mxu0
    %v2492 = vpop.f32.mrb[0].mxu0
    %v2493 = vadd.f32 %v2439, %v2492
    %v2494 = vpop.f32.mrb[0].mxu0
    %2495 = vdwg.mxu0
    %v2496 = vmul.f32 %v2490, 1.702
    %v2497 = vmul.f32 %v2493, 1.702
    %v2498 = vxor.u32 %v2496, 2147483648
    %v2499 = vxor.u32 %v2497, 2147483648
    %v2500 = vmul.f32 %v2498, 1.442695
    %v2501 = vpow.pop %v2500
    %v2502 = vmul.f32 %v2499, 1.442695
    %v2503 = vpow.pop %v2502
    %v2504 = vadd.f32 %v2501, 1.0
    %v2505 = vadd.f32 %v2503, 1.0
    %v2506 = vrcp.pop %v2504
    %v2507 = vmul.f32 1.0, %v2506
    %v2508 = vrcp.pop %v2505
    %v2509 = vmul.f32 1.0, %v2508
    %v2510 = vmul.f32 %v2490, %v2507
    %v2511 = vmul.f32 %v2493, %v2509
    %v2512 = vpack.c.bf16 %v2511, %v2510
    %v2513 = vlaneseq
    %v2514 = vshrl.u32 %v2513, 7
    %v2515 = vsub.s32 0, %v2514
    %v2516 = vrot.slane %v1581, %v2515
    %v2533 = vunpack.c.l.b16 %v1550
    %v2534 = vunpack.c.l.b16 %v1551
    %v2535 = vunpack.c.l.b16 %v1552
    %v2536 = vunpack.c.l.b16 %v1553
    %v2537 = vunpack.c.l.b16 %v1554
    %v2538 = vunpack.c.l.b16 %v1555
    %v2539 = vunpack.c.l.b16 %v1556
    %v2540 = vunpack.c.l.b16 %v1557
    %v2541 = vunpack.c.l.b16 %v1558
    %v2542 = vunpack.c.l.b16 %v1559
    %v2543 = vunpack.c.l.b16 %v1560
    %v2544 = vunpack.c.l.b16 %v1561
    %v2545 = vunpack.c.l.b16 %v1562
    %v2546 = vunpack.c.l.b16 %v1563
    %v2547 = vunpack.c.l.b16 %v1564
    %v2548 = vunpack.c.l.b16 %v1565
    %v2549 = vpack.c.b16 %v2534, %v2533
    %v2550 = vpack.c.b16 %v2536, %v2535
    %v2551 = vpack.c.b16 %v2538, %v2537
    %v2552 = vpack.c.b16 %v2540, %v2539
    %v2553 = vpack.c.b16 %v2542, %v2541
    %v2554 = vpack.c.b16 %v2544, %v2543
    %v2555 = vpack.c.b16 %v2546, %v2545
    %v2556 = vpack.c.b16 %v2548, %v2547
    %2565 = vmatprep.subr.bf16.mxu0 0
    %2566 = vmatpush1.bf16.msra.mxu0 %v2549
    %2567 = vmatprep.subr.bf16.mxu0 0
    %2568 = vmatpush1.bf16.msra.mxu0 %v2550
    %2569 = vmatprep.subr.bf16.mxu0 0
    %2570 = vmatpush1.bf16.msra.mxu0 %v2551
    %2571 = vmatprep.subr.bf16.mxu0 0
    %2572 = vmatpush1.bf16.msra.mxu0 %v2552
    %2573 = vmatprep.subr.bf16.mxu0 0
    %2574 = vmatpush1.bf16.msra.mxu0 %v2553
    %2575 = vmatprep.subr.bf16.mxu0 0
    %2576 = vmatpush1.bf16.msra.mxu0 %v2554
    %2577 = vmatprep.subr.bf16.mxu0 0
    %2578 = vmatpush1.bf16.msra.mxu0 %v2555
    %2579 = vmatprep.subr.bf16.mxu0 0
    %2580 = vmatpush1.bf16.msra.mxu0 %v2556
    %2581 = vmatprep.subr.bf16.mxu0 0
    %2582 = vmatpush1.bf16.msra.mxu0 0
    %2583 = vmatprep.subr.bf16.mxu0 0
    %2584 = vmatpush1.bf16.msra.mxu0 0
    %2585 = vmatprep.subr.bf16.mxu0 0
    %2586 = vmatpush1.bf16.msra.mxu0 0
    %2587 = vmatprep.subr.bf16.mxu0 0
    %2588 = vmatpush1.bf16.msra.mxu0 0
    %2589 = vmatprep.subr.bf16.mxu0 0
    %2590 = vmatpush1.bf16.msra.mxu0 0
    %2591 = vmatprep.subr.bf16.mxu0 0
    %2592 = vmatpush1.bf16.msra.mxu0 0
    %2593 = vmatprep.subr.bf16.mxu0 0
    %2594 = vmatpush1.bf16.msra.mxu0 0
    %2595 = vmatprep.subr.bf16.mxu0 0
    %2596 = vmatpush1.bf16.msra.mxu0 0
    %2597 = vmatprep.mubr.bf16.mxu0 0
    %2598 = vmatmul.mubr.bf16.gmra.mrb[0].mxu0 %v2512
    %v2599 = vpop.f32.mrb[0].mxu0
    %v2600 = vadd.f32 %v2516, %v2599
    %v2601 = vpop.f32.mrb[0].mxu0
    %v2602 = vpop.f32.mrb[0].mxu0
    %v2603 = vadd.f32 %v2516, %v2602
    %v2604 = vpop.f32.mrb[0].mxu0
    %2605 = vdwg.mxu0
    %v2606 = vadd.f32 %v2600, %v2395
    %v2607 = vadd.f32 %v2603, %v2396
    %2608 = vst.msk [vmem:[#allocation2] sm:$0xff] %vm281, %v2606
    %2609 = vst.msk [vmem:[#allocation2 + $0x8] sm:$0xff] %vm281, %v2607
    // Predicated region
    $region54: #{tpu_custom_call.1} parent=1 // pred_check
      _
    $region55: #{tpu_custom_call.1} parent=1 // pred_check_branch
      %2611 = sbr.rel (0) target = $region57
    $region56: #{tpu_custom_call.1} parent=1 // pred_region
      %s2613 = ssub.s32 256, 256
      %2614 = vsyncadd [#allocation3], %s2613
      %s2615 = sshll.u32 [#allocation2], 4
      %s2616 = int_to_ptr.vmem [resolvable:$true] %s2615
      %2621 = dma.vmem_to_hbm [thread:$0]  %s2616, 256, %s13, [#allocation3], 128, 128, 8
    $region57: #{tpu_custom_call.1} parent=1 // pred_fallthru
      _
    // Predicated region
    $region58: #{tpu_custom_call.1} parent=1 // pred_check
      _
    $region59: #{tpu_custom_call.1} parent=1 // pred_check_branch
      %2623 = sbr.rel (0) target = $region61
    $region60: #{tpu_custom_call.1} parent=1 // pred_region
      %2624 = dma.done [#allocation3], 256
    $region61: #{tpu_custom_call.1} parent=1 // pred_fallthru
      _
    %2625 = vsyncpa [#allocation3], 1

</llo_original>
